<compile_context>
chip_gen: v7x
topology: tpu7x:2x2x1
jax: 0.10.0
libtpu: 0.0.40
codegen_flags: <defaults>
</compile_context>

<pallas_src>
import functools

import jax
import jax.numpy as jnp
from jax.experimental import pallas as pl
from jax.experimental.pallas import tpu as pltpu


GATE_LANES = 128  # per-gate lane block -> vreg-aligned gate slices inside the GRU loop


# ----------------------------------------------------------------------------
# Fused kernel: whole CRNNWordModel forward pass
# ----------------------------------------------------------------------------
def _crnn_word_kernel(x_ref, w1b_ref, b1_ref, w2b_ref, b2_ref,
                      wih_ref, bih_ref, whh_ref, bhh_ref, wemb_ref,
                      audio_out_ref, text_out_ref,
                      *, Bp, T, H, l2):
    f32 = jnp.float32
    bf16 = jnp.bfloat16
    GL = GATE_LANES
    BT = Bp * T
    eps = 1e-12

    # ---- time shift by one step; rows are ordered t*Bp + b with Bp == 8 (aligned) ----
    def shift_prev(v):   # row (t, b) <- row (t-1, b); t == 0 rows -> 0 (conv zero pad)
        return jnp.concatenate(
            [jnp.zeros((Bp, v.shape[1]), v.dtype), v[:BT - Bp, :]], axis=0)

    def shift_next(v):   # row (t, b) <- row (t+1, b); t == T-1 rows -> 0
        return jnp.concatenate(
            [v[Bp:, :], jnp.zeros((Bp, v.shape[1]), v.dtype)], axis=0)

    def conv_block(inp, wb_ref_, bias_ref_):
        # 3x3 'same' conv over (T, Mel) as ONE bf16 GEMM against banded weights (time
        # taps stacked along K), + bias + ReLU.  MaxPool(1,2) kept *undecimated*: the
        # lane shift crosses channel boundaries only at odd mel columns, which are dead
        # (the next stage's banded weights have zero rows for every odd column).
        cat = jnp.concatenate([shift_prev(inp), inp, shift_next(inp)], axis=1)
        y = jnp.dot(cat.astype(bf16), wb_ref_[...], preferred_element_type=f32)
        y = jnp.maximum(y + bias_ref_[...], 0.0)
        y_next = jnp.concatenate([y[:, 1:], jnp.zeros_like(y[:, :1])], axis=1)
        return jnp.maximum(y, y_next)

    p1 = conv_block(x_ref[...].astype(f32), w1b_ref, b1_ref)    # (BT, C1*MEL)
    p2 = conv_block(p1, w2b_ref, b2_ref)                        # (BT, C2*MEL/2)

    # ---- BiGRU input projection, both directions, ONE GEMM.  Column layout per gate
    #      g in {r,z,n}: lanes [g*GL, g*GL+H) forward, [g*GL+H, g*GL+2H) backward,
    #      rest zero -> all gate slices below are full-vreg aligned. ----
    gx = jnp.dot(p2.astype(bf16), wih_ref[...], preferred_element_type=f32) + bih_ref[...]

    # Backward direction consumes time-reversed inputs: block-reverse the rows once
    # (static, 8-sublane-aligned slices; no O((BT)^2) reversal matmul) and merge so the
    # backward lanes of every gate block come from the reversed copy.
    gx_rev = jnp.concatenate(
        [gx[(T - 1 - t) * Bp:(T - t) * Bp, :] for t in range(T)], axis=0)
    lane = jax.lax.broadcasted_iota(jnp.int32, (BT, 3 * GL), 1) % GL
    gxc = jnp.where(lane < H, gx, gx_rev)

    gxr = gxc[:, 0 * GL:1 * GL]
    gxz = gxc[:, 1 * GL:2 * GL]
    gxn = gxc[:, 2 * GL:3 * GL]

    whh = whh_ref[...]     # (GL, 3*GL) bf16; per-gate, block-diagonal over direction
    bhh = bhh_ref[...]     # (1, 3*GL) f32

    # ---- BiGRU recurrence (PyTorch gate order/equations [r, z, n]); both directions
    #      stacked on the hidden axis, ONE fused recurrent GEMM per step, temporal mean
    #      accumulated in-register.  Pad lanes [2H, GL) stay exactly zero throughout. ----
    h = jnp.zeros((Bp, GL), f32)
    hsum = jnp.zeros((Bp, GL), f32)
    # TODO(synk): for production T (>~64) switch to lax.fori_loop(..., unroll=small).
    for t in range(T):
        lo = t * Bp
        gh = jnp.dot(h.astype(bf16), whh, preferred_element_type=f32) + bhh
        r = jax.nn.sigmoid(gxr[lo:lo + Bp, :] + gh[:, 0 * GL:1 * GL])
        z = jax.nn.sigmoid(gxz[lo:lo + Bp, :] + gh[:, 1 * GL:2 * GL])
        n = jnp.tanh(gxn[lo:lo + Bp, :] + r * gh[:, 2 * GL:3 * GL])
        h = (1.0 - z) * n + z * h
        hsum = hsum + h

    audio_emb = hsum * (1.0 / T)                 # mean over time (flip-invariant)
    if l2:
        ss = jnp.sum(audio_emb * audio_emb, axis=-1, keepdims=True)
        audio_emb = audio_emb * jax.lax.rsqrt(jnp.maximum(ss, eps * eps))
    audio_out_ref[...] = audio_emb.astype(audio_out_ref.dtype)   # (Bp, GL), real = [:, :2H]

    # ---- text branch: mean over words + L2 (embedding gather done in XLA outside) ----
    we = wemb_ref[...].astype(f32)               # (B, L, E)
    tm = jnp.mean(we, axis=1)                    # (B, E)
    if l2:
        ss_t = jnp.sum(tm * tm, axis=-1, keepdims=True)
        tm = tm * jax.lax.rsqrt(jnp.maximum(ss_t, eps * eps))
    text_out_ref[...] = tm.astype(text_out_ref.dtype)


# ----------------------------------------------------------------------------
# Wrapper: weight packing (pure layout transforms, XLA) + single pallas_call
# ----------------------------------------------------------------------------
def crnn_word_model_forward(params, audio, text, *, out_norm="L2"):
    """audio: (B, T, Mel) f32; text: (B, L) int32 -> (audio_embeds, text_embeds)."""
    f32 = jnp.float32
    bf16 = jnp.bfloat16
    GL = GATE_LANES

    B, T, MEL = audio.shape
    assert MEL % 4 == 0
    C1 = params["conv1_w"].shape[-1]
    C2 = params["conv2_w"].shape[-1]
    H = params["w_hh_f"].shape[0]
    assert 2 * H <= GL
    MELP, MELP2 = MEL // 2, MEL // 4
    l2 = (out_norm == "L2")

    # Batch padded to a sublane multiple -> every per-timestep row block is 8-aligned.
    Bp = max(8, ((B + 7) // 8) * 8)

    w1 = params["conv1_w"].astype(f32)           # (3, 3, 1, C1)
    w2 = params["conv2_w"].astype(f32)           # (3, 3, C1, C2)

    # conv1 banded weights: per time-tap dy, (MEL, C1*MEL); output col = c1*MEL + m_out.
    m_in1 = jnp.arange(MEL)[:, None]
    cols1 = jnp.arange(C1 * MEL)[None, :]
    c1_idx = cols1 // MEL
    m_out1 = cols1 % MEL
    dx1 = m_in1 - m_out1 + 1
    valid1 = (dx1 >= 0) & (dx1 <= 2)

    def band1(dy):
        vals = w1[dy, :, 0, :][jnp.clip(dx1, 0, 2), c1_idx]          # (MEL, C1*MEL)
        return jnp.where(valid1, vals, 0.0)

    w1b = jnp.concatenate([band1(0), band1(1), band1(2)], axis=0).astype(bf16)  # (3*MEL, C1*MEL)
    b1r = jnp.repeat(params["conv1_b"].astype(f32), MEL)[None, :]               # (1, C1*MEL)

    # conv2 banded weights: read only even-mel rows of the undecimated pooled conv1 out
    # (odd rows are zeroed -> the pool-shift dead-column invariant relied on in-kernel).
    rows2 = jnp.arange(C1 * MEL)[:, None]
    cols2 = jnp.arange(C2 * MELP)[None, :]
    c1r = rows2 // MEL
    m_inr = rows2 % MEL
    c2c = cols2 // MELP
    m2c = cols2 % MELP
    dx2 = m_inr // 2 - m2c + 1
    valid2 = ((m_inr % 2) == 0) & (dx2 >= 0) & (dx2 <= 2)

    def band2(dy):
        vals = w2[dy][jnp.clip(dx2, 0, 2), c1r, c2c]                 # (C1*MEL, C2*MELP)
        return jnp.where(valid2, vals, 0.0)

    w2b = jnp.concatenate([band2(0), band2(1), band2(2)], axis=0).astype(bf16)  # (3*C1*MEL, C2*MELP)
    b2r = jnp.repeat(params["conv2_b"].astype(f32), MELP)[None, :]              # (1, C2*MELP)

    # GRU weights in 128-lane-per-gate layout: [ r_f r_b 0 | z_f z_b 0 | n_f n_b 0 ].
    def pack_gate_cols(wf, wb):
        out = jnp.zeros((wf.shape[0], 3 * GL), f32)
        for g in range(3):
            out = out.at[:, g * GL:g * GL + H].set(wf[:, g * H:(g + 1) * H])
            out = out.at[:, g * GL + H:g * GL + 2 * H].set(wb[:, g * H:(g + 1) * H])
        return out

    def pack_gate_bias(bf_, bb_):
        out = jnp.zeros((3 * GL,), f32)
        for g in range(3):
            out = out.at[g * GL:g * GL + H].set(bf_[g * H:(g + 1) * H])
            out = out.at[g * GL + H:g * GL + 2 * H].set(bb_[g * H:(g + 1) * H])
        return out[None, :]

    # Input projection (both directions), with the (1,2) pool decimation folded in as
    # zero rows.  TODO(synk): at production MEL/C2, actually decimate instead.
    wih_cat = pack_gate_cols(params["w_ih_f"].astype(f32), params["w_ih_b"].astype(f32))
    rows_p = jnp.arange(C2 * MELP)
    c2r = rows_p // MELP
    m2r = rows_p % MELP
    src = c2r * MELP2 + m2r // 2
    wih_eff = jnp.where((m2r % 2 == 0)[:, None], wih_cat[src, :], 0.0).astype(bf16)  # (C2*MELP, 3*GL)
    bih_pad = pack_gate_bias(params["b_ih_f"].astype(f32), params["b_ih_b"].astype(f32))

    # Recurrent weights: per-gate, block-diagonal over direction, zero-padded to GL rows.
    whh_pad = jnp.zeros((GL, 3 * GL), f32)
    whf = params["w_hh_f"].astype(f32)            # (H, 3H), cols [r|z|n]
    whb = params["w_hh_b"].astype(f32)
    for g in range(3):
        whh_pad = whh_pad.at[0:H, g * GL:g * GL + H].set(whf[:, g * H:(g + 1) * H])
        whh_pad = whh_pad.at[H:2 * H, g * GL + H:g * GL + 2 * H].set(whb[:, g * H:(g + 1) * H])
    whh_pad = whh_pad.astype(bf16)                                                # (GL, 3*GL)
    bhh_pad = pack_gate_bias(params["b_hh_f"].astype(f32), params["b_hh_b"].astype(f32))

    # Audio rows in t-major order (row index = t*Bp + b); batch zero-padded to Bp.
    audio_p = jnp.pad(audio.astype(f32), ((0, Bp - B), (0, 0), (0, 0)))
    x2d = jnp.transpose(audio_p, (1, 0, 2)).reshape(T * Bp, MEL)

    # Text embedding lookup stays in XLA (dynamic row gather); pooling + L2 in-kernel.
    word_embeds = jnp.take(params["embedding"], text, axis=0).astype(f32)         # (B, L, E)
    E = word_embeds.shape[-1]

    vmem = pltpu.MemorySpace.VMEM
    audio_pad_out, text_embeds = pl.pallas_call(
        functools.partial(_crnn_word_kernel, Bp=Bp, T=T, H=H, l2=l2),
        out_shape=(jax.ShapeDtypeStruct((Bp, GL), jnp.float32),
                   jax.ShapeDtypeStruct((B, E), jnp.float32)),
        in_specs=[pl.BlockSpec(memory_space=vmem)] * 10,
        out_specs=(pl.BlockSpec(memory_space=vmem),
                   pl.BlockSpec(memory_space=vmem)),
    )(x2d, w1b, b1r, w2b, b2r, wih_eff, bih_pad, whh_pad, bhh_pad, word_embeds)

    return audio_pad_out[:B, :2 * H], text_embeds


# ----------------------------------------------------------------------------
# Synthetic parameters (deterministic)
# ----------------------------------------------------------------------------
def init_params(key, *, mel=16, c1=8, c2=16, rnn_hidden=16, vocab=50, embed_dim=32):
    ks = jax.random.split(key, 16)
    f = c2 * (mel // 4)  # GRU input features after two (1,2) freq pools

    def nrm(k, shape, scale=0.1):
        return scale * jax.random.normal(k, shape, jnp.float32)

    return dict(
        conv1_w=nrm(ks[0], (3, 3, 1, c1)), conv1_b=nrm(ks[1], (c1,), 0.01),
        conv2_w=nrm(ks[2], (3, 3, c1, c2)), conv2_b=nrm(ks[3], (c2,), 0.01),
        w_ih_f=nrm(ks[4], (f, 3 * rnn_hidden)), b_ih_f=nrm(ks[5], (3 * rnn_hidden,), 0.01),
        w_hh_f=nrm(ks[6], (rnn_hidden, 3 * rnn_hidden)), b_hh_f=nrm(ks[7], (3 * rnn_hidden,), 0.01),
        w_ih_b=nrm(ks[8], (f, 3 * rnn_hidden)), b_ih_b=nrm(ks[9], (3 * rnn_hidden,), 0.01),
        w_hh_b=nrm(ks[10], (rnn_hidden, 3 * rnn_hidden)), b_hh_b=nrm(ks[11], (3 * rnn_hidden,), 0.01),
        embedding=nrm(ks[12], (vocab, embed_dim)),
    )


# ----------------------------------------------------------------------------
# Driver
# ----------------------------------------------------------------------------
if __name__ == "__main__":
    B, T, MEL = 2, 16, 16
    L, VOCAB, EMBED = 8, 50, 32
    HID = 16

    key = jax.random.PRNGKey(0)
    k_audio, k_text, k_params = jax.random.split(key, 3)

    audio = jax.random.normal(k_audio, (B, T, MEL), jnp.float32)
    text = jax.random.randint(k_text, (B, L), 0, VOCAB, dtype=jnp.int32)

    params = init_params(k_params, mel=MEL, c1=8, c2=16, rnn_hidden=HID,
                         vocab=VOCAB, embed_dim=EMBED)

    fwd = jax.jit(functools.partial(crnn_word_model_forward, out_norm="L2"))
    audio_embeds, text_embeds = fwd(params, audio, text)
    jax.block_until_ready((audio_embeds, text_embeds))

    assert audio_embeds.shape == (B, 2 * HID) and text_embeds.shape == (B, EMBED)
    assert bool(jnp.all(jnp.isfinite(audio_embeds))) and bool(jnp.all(jnp.isfinite(text_embeds)))
    print("KERNEL_OK")
</pallas_src>

<mosaic_0001>
module attributes {stable_mosaic.version = 11 : i64} {
  func.func @_crnn_word_kernel(%arg0: memref<128x16xf32, #tpu.memory_space<vmem>>, %arg1: memref<48x128xbf16, #tpu.memory_space<vmem>>, %arg2: memref<1x128xf32, #tpu.memory_space<vmem>>, %arg3: memref<384x128xbf16, #tpu.memory_space<vmem>>, %arg4: memref<1x128xf32, #tpu.memory_space<vmem>>, %arg5: memref<128x384xbf16, #tpu.memory_space<vmem>>, %arg6: memref<1x384xf32, #tpu.memory_space<vmem>>, %arg7: memref<128x384xbf16, #tpu.memory_space<vmem>>, %arg8: memref<1x384xf32, #tpu.memory_space<vmem>>, %arg9: memref<2x8x32xf32, #tpu.memory_space<vmem>>, %arg10: memref<8x128xf32, #tpu.memory_space<vmem>>, %arg11: memref<2x32xf32, #tpu.memory_space<vmem>>) attributes {dimension_semantics = [], scalar_prefetch = 0 : i64, scratch_operands = 0 : i64, tpu.core_type = #tpu.core_type<tc>} {
    %c0 = arith.constant 0 : index
    %c0_0 = arith.constant 0 : index
    %0 = vector.load %arg0[%c0, %c0_0] : memref<128x16xf32, #tpu.memory_space<vmem>>, vector<128x16xf32>
    %cst = arith.constant 0.000000e+00 : f32
    %1 = vector.broadcast %cst : f32 to vector<8x16xf32>
    %2 = vector.extract_strided_slice %0 {offsets = [0, 0], sizes = [120, 16], strides = [1, 1]} : vector<128x16xf32> to vector<120x16xf32>
    %3 = tpu.concatenate %1, %2 in 0 : vector<8x16xf32>, vector<120x16xf32> -> vector<128x16xf32>
    %4 = vector.extract_strided_slice %0 {offsets = [8, 0], sizes = [120, 16], strides = [1, 1]} : vector<128x16xf32> to vector<120x16xf32>
    %cst_1 = arith.constant 0.000000e+00 : f32
    %5 = vector.broadcast %cst_1 : f32 to vector<8x16xf32>
    %6 = tpu.concatenate %4, %5 in 0 : vector<120x16xf32>, vector<8x16xf32> -> vector<128x16xf32>
    %7 = tpu.concatenate %3, %0, %6 in 1 : vector<128x16xf32>, vector<128x16xf32>, vector<128x16xf32> -> vector<128x48xf32>
    %8 = arith.truncf %7 : vector<128x48xf32> to vector<128x48xbf16>
    %c0_2 = arith.constant 0 : index
    %c0_3 = arith.constant 0 : index
    %9 = vector.load %arg1[%c0_2, %c0_3] : memref<48x128xbf16, #tpu.memory_space<vmem>>, vector<48x128xbf16>
    %cst_4 = arith.constant dense<0.000000e+00> : vector<128x128xf32>
    %10 = tpu.matmul %8, %9, %cst_4 {dimension_numbers = #tpu.dot_dimension_numbers<[1], [0], [0], [1], [0, 0, 1, 1], [], []>} : vector<128x48xbf16>, vector<48x128xbf16>, vector<128x128xf32> -> vector<128x128xf32>
    %c0_5 = arith.constant 0 : index
    %c0_6 = arith.constant 0 : index
    %11 = vector.load %arg2[%c0_5, %c0_6] : memref<1x128xf32, #tpu.memory_space<vmem>>, vector<1x128xf32>
    %12 = vector.broadcast %11 : vector<1x128xf32> to vector<128x128xf32>
    %13 = arith.addf %10, %12 : vector<128x128xf32>
    %cst_7 = arith.constant 0.000000e+00 : f32
    %14 = vector.broadcast %cst_7 : f32 to vector<128x128xf32>
    %15 = arith.maximumf %13, %14 : vector<128x128xf32>
    %16 = vector.extract_strided_slice %15 {offsets = [0, 1], sizes = [128, 127], strides = [1, 1]} : vector<128x128xf32> to vector<128x127xf32>
    %cst_8 = arith.constant 0.000000e+00 : f32
    %17 = vector.broadcast %cst_8 : f32 to vector<128x1xf32>
    %18 = tpu.concatenate %16, %17 in 1 : vector<128x127xf32>, vector<128x1xf32> -> vector<128x128xf32>
    %19 = arith.maximumf %15, %18 : vector<128x128xf32>
    %cst_9 = arith.constant 0.000000e+00 : f32
    %20 = vector.broadcast %cst_9 : f32 to vector<8x128xf32>
    %21 = vector.extract_strided_slice %19 {offsets = [0, 0], sizes = [120, 128], strides = [1, 1]} : vector<128x128xf32> to vector<120x128xf32>
    %22 = tpu.concatenate %20, %21 in 0 : vector<8x128xf32>, vector<120x128xf32> -> vector<128x128xf32>
    %23 = vector.extract_strided_slice %19 {offsets = [8, 0], sizes = [120, 128], strides = [1, 1]} : vector<128x128xf32> to vector<120x128xf32>
    %cst_10 = arith.constant 0.000000e+00 : f32
    %24 = vector.broadcast %cst_10 : f32 to vector<8x128xf32>
    %25 = tpu.concatenate %23, %24 in 0 : vector<120x128xf32>, vector<8x128xf32> -> vector<128x128xf32>
    %26 = tpu.concatenate %22, %19, %25 in 1 : vector<128x128xf32>, vector<128x128xf32>, vector<128x128xf32> -> vector<128x384xf32>
    %27 = arith.truncf %26 : vector<128x384xf32> to vector<128x384xbf16>
    %c0_11 = arith.constant 0 : index
    %c0_12 = arith.constant 0 : index
    %28 = vector.load %arg3[%c0_11, %c0_12] : memref<384x128xbf16, #tpu.memory_space<vmem>>, vector<384x128xbf16>
    %cst_13 = arith.constant dense<0.000000e+00> : vector<128x128xf32>
    %29 = tpu.matmul %27, %28, %cst_13 {dimension_numbers = #tpu.dot_dimension_numbers<[1], [0], [0], [1], [0, 0, 1, 1], [], []>} : vector<128x384xbf16>, vector<384x128xbf16>, vector<128x128xf32> -> vector<128x128xf32>
    %c0_14 = arith.constant 0 : index
    %c0_15 = arith.constant 0 : index
    %30 = vector.load %arg4[%c0_14, %c0_15] : memref<1x128xf32, #tpu.memory_space<vmem>>, vector<1x128xf32>
    %31 = vector.broadcast %30 : vector<1x128xf32> to vector<128x128xf32>
    %32 = arith.addf %29, %31 : vector<128x128xf32>
    %cst_16 = arith.constant 0.000000e+00 : f32
    %33 = vector.broadcast %cst_16 : f32 to vector<128x128xf32>
    %34 = arith.maximumf %32, %33 : vector<128x128xf32>
    %35 = vector.extract_strided_slice %34 {offsets = [0, 1], sizes = [128, 127], strides = [1, 1]} : vector<128x128xf32> to vector<128x127xf32>
    %cst_17 = arith.constant 0.000000e+00 : f32
    %36 = vector.broadcast %cst_17 : f32 to vector<128x1xf32>
    %37 = tpu.concatenate %35, %36 in 1 : vector<128x127xf32>, vector<128x1xf32> -> vector<128x128xf32>
    %38 = arith.maximumf %34, %37 : vector<128x128xf32>
    %39 = arith.truncf %38 : vector<128x128xf32> to vector<128x128xbf16>
    %c0_18 = arith.constant 0 : index
    %c0_19 = arith.constant 0 : index
    %40 = vector.load %arg5[%c0_18, %c0_19] : memref<128x384xbf16, #tpu.memory_space<vmem>>, vector<128x384xbf16>
    %cst_20 = arith.constant dense<0.000000e+00> : vector<128x384xf32>
    %41 = tpu.matmul %39, %40, %cst_20 {dimension_numbers = #tpu.dot_dimension_numbers<[1], [0], [0], [1], [0, 0, 1, 1], [], []>} : vector<128x128xbf16>, vector<128x384xbf16>, vector<128x384xf32> -> vector<128x384xf32>
    %c0_21 = arith.constant 0 : index
    %c0_22 = arith.constant 0 : index
    %42 = vector.load %arg6[%c0_21, %c0_22] : memref<1x384xf32, #tpu.memory_space<vmem>>, vector<1x384xf32>
    %43 = vector.broadcast %42 : vector<1x384xf32> to vector<128x384xf32>
    %44 = arith.addf %41, %43 : vector<128x384xf32>
    %45 = vector.extract_strided_slice %44 {offsets = [120, 0], sizes = [8, 384], strides = [1, 1]} : vector<128x384xf32> to vector<8x384xf32>
    %46 = vector.extract_strided_slice %44 {offsets = [112, 0], sizes = [8, 384], strides = [1, 1]} : vector<128x384xf32> to vector<8x384xf32>
    %47 = vector.extract_strided_slice %44 {offsets = [104, 0], sizes = [8, 384], strides = [1, 1]} : vector<128x384xf32> to vector<8x384xf32>
    %48 = vector.extract_strided_slice %44 {offsets = [96, 0], sizes = [8, 384], strides = [1, 1]} : vector<128x384xf32> to vector<8x384xf32>
    %49 = vector.extract_strided_slice %44 {offsets = [88, 0], sizes = [8, 384], strides = [1, 1]} : vector<128x384xf32> to vector<8x384xf32>
    %50 = vector.extract_strided_slice %44 {offsets = [80, 0], sizes = [8, 384], strides = [1, 1]} : vector<128x384xf32> to vector<8x384xf32>
    %51 = vector.extract_strided_slice %44 {offsets = [72, 0], sizes = [8, 384], strides = [1, 1]} : vector<128x384xf32> to vector<8x384xf32>
    %52 = vector.extract_strided_slice %44 {offsets = [64, 0], sizes = [8, 384], strides = [1, 1]} : vector<128x384xf32> to vector<8x384xf32>
    %53 = vector.extract_strided_slice %44 {offsets = [56, 0], sizes = [8, 384], strides = [1, 1]} : vector<128x384xf32> to vector<8x384xf32>
    %54 = vector.extract_strided_slice %44 {offsets = [48, 0], sizes = [8, 384], strides = [1, 1]} : vector<128x384xf32> to vector<8x384xf32>
    %55 = vector.extract_strided_slice %44 {offsets = [40, 0], sizes = [8, 384], strides = [1, 1]} : vector<128x384xf32> to vector<8x384xf32>
    %56 = vector.extract_strided_slice %44 {offsets = [32, 0], sizes = [8, 384], strides = [1, 1]} : vector<128x384xf32> to vector<8x384xf32>
    %57 = vector.extract_strided_slice %44 {offsets = [24, 0], sizes = [8, 384], strides = [1, 1]} : vector<128x384xf32> to vector<8x384xf32>
    %58 = vector.extract_strided_slice %44 {offsets = [16, 0], sizes = [8, 384], strides = [1, 1]} : vector<128x384xf32> to vector<8x384xf32>
    %59 = vector.extract_strided_slice %44 {offsets = [8, 0], sizes = [8, 384], strides = [1, 1]} : vector<128x384xf32> to vector<8x384xf32>
    %60 = vector.extract_strided_slice %44 {offsets = [0, 0], sizes = [8, 384], strides = [1, 1]} : vector<128x384xf32> to vector<8x384xf32>
    %61 = tpu.concatenate %45, %46, %47, %48, %49, %50, %51, %52, %53, %54, %55, %56, %57, %58, %59, %60 in 0 : vector<8x384xf32>, vector<8x384xf32>, vector<8x384xf32>, vector<8x384xf32>, vector<8x384xf32>, vector<8x384xf32>, vector<8x384xf32>, vector<8x384xf32>, vector<8x384xf32>, vector<8x384xf32>, vector<8x384xf32>, vector<8x384xf32>, vector<8x384xf32>, vector<8x384xf32>, vector<8x384xf32>, vector<8x384xf32> -> vector<128x384xf32>
    %62 = tpu.iota {dimensions = array<i32: 1>} : vector<128x384xi32>
    %c128_i32 = arith.constant 128 : i32
    %c0_i32 = arith.constant 0 : i32
    %63 = arith.cmpi eq, %c128_i32, %c0_i32 : i32
    %c1_i32 = arith.constant 1 : i32
    %64 = arith.select %63, %c1_i32, %c128_i32 : i32
    %65 = vector.broadcast %64 : i32 to vector<128x384xi32>
    %66 = arith.remsi %62, %65 : vector<128x384xi32>
    %c0_i32_23 = arith.constant 0 : i32
    %67 = vector.broadcast %c0_i32_23 : i32 to vector<128x384xi32>
    %68 = arith.cmpi ne, %66, %67 : vector<128x384xi32>
    %c0_i32_24 = arith.constant 0 : i32
    %69 = vector.broadcast %c0_i32_24 : i32 to vector<128x384xi32>
    %70 = arith.cmpi slt, %66, %69 : vector<128x384xi32>
    %c0_i32_25 = arith.constant 0 : i32
    %71 = arith.cmpi slt, %64, %c0_i32_25 : i32
    %72 = vector.broadcast %71 : i1 to vector<128x384xi1>
    %73 = vector.broadcast %72 : vector<128x384xi1> to vector<128x384xi1>
    %74 = arith.xori %70, %73 : vector<128x384xi1>
    %75 = arith.andi %74, %68 : vector<128x384xi1>
    %76 = vector.broadcast %64 : i32 to vector<128x384xi32>
    %77 = arith.addi %66, %76 : vector<128x384xi32>
    %78 = arith.select %75, %77, %66 : vector<128x384xi1>, vector<128x384xi32>
    %c16_i32 = arith.constant 16 : i32
    %79 = vector.broadcast %c16_i32 : i32 to vector<128x384xi32>
    %80 = arith.cmpi slt, %78, %79 : vector<128x384xi32>
    %81 = arith.select %80, %44, %61 : vector<128x384xi1>, vector<128x384xf32>
    %82 = vector.extract_strided_slice %81 {offsets = [0, 0], sizes = [128, 128], strides = [1, 1]} : vector<128x384xf32> to vector<128x128xf32>
    %83 = vector.extract_strided_slice %81 {offsets = [0, 128], sizes = [128, 128], strides = [1, 1]} : vector<128x384xf32> to vector<128x128xf32>
    %84 = vector.extract_strided_slice %81 {offsets = [0, 256], sizes = [128, 128], strides = [1, 1]} : vector<128x384xf32> to vector<128x128xf32>
    %c0_26 = arith.constant 0 : index
    %c0_27 = arith.constant 0 : index
    %85 = vector.load %arg7[%c0_26, %c0_27] : memref<128x384xbf16, #tpu.memory_space<vmem>>, vector<128x384xbf16>
    %c0_28 = arith.constant 0 : index
    %c0_29 = arith.constant 0 : index
    %86 = vector.load %arg8[%c0_28, %c0_29] : memref<1x384xf32, #tpu.memory_space<vmem>>, vector<1x384xf32>
    %cst_30 = arith.constant 0.000000e+00 : f32
    %87 = vector.broadcast %cst_30 : f32 to vector<8x128xf32>
    %cst_31 = arith.constant 0.000000e+00 : f32
    %88 = vector.broadcast %cst_31 : f32 to vector<8x128xf32>
    %89 = arith.truncf %87 : vector<8x128xf32> to vector<8x128xbf16>
    %cst_32 = arith.constant dense<0.000000e+00> : vector<8x384xf32>
    %90 = tpu.matmul %89, %85, %cst_32 {dimension_numbers = #tpu.dot_dimension_numbers<[1], [0], [0], [1], [0, 0, 1, 1], [], []>} : vector<8x128xbf16>, vector<128x384xbf16>, vector<8x384xf32> -> vector<8x384xf32>
    %91 = vector.broadcast %86 : vector<1x384xf32> to vector<8x384xf32>
    %92 = arith.addf %90, %91 : vector<8x384xf32>
    %93 = vector.extract_strided_slice %82 {offsets = [0, 0], sizes = [8, 128], strides = [1, 1]} : vector<128x128xf32> to vector<8x128xf32>
    %94 = vector.extract_strided_slice %92 {offsets = [0, 0], sizes = [8, 128], strides = [1, 1]} : vector<8x384xf32> to vector<8x128xf32>
    %95 = arith.addf %93, %94 : vector<8x128xf32>
    %96 = arith.negf %95 : vector<8x128xf32>
    %97 = math.exp %96 : vector<8x128xf32>
    %cst_33 = arith.constant 1.000000e+00 : f32
    %98 = vector.broadcast %cst_33 : f32 to vector<8x128xf32>
    %99 = arith.addf %98, %97 : vector<8x128xf32>
    %100 = arith.divf %98, %99 : vector<8x128xf32>
    %101 = vector.extract_strided_slice %83 {offsets = [0, 0], sizes = [8, 128], strides = [1, 1]} : vector<128x128xf32> to vector<8x128xf32>
    %102 = vector.extract_strided_slice %92 {offsets = [0, 128], sizes = [8, 128], strides = [1, 1]} : vector<8x384xf32> to vector<8x128xf32>
    %103 = arith.addf %101, %102 : vector<8x128xf32>
    %104 = arith.negf %103 : vector<8x128xf32>
    %105 = math.exp %104 : vector<8x128xf32>
    %cst_34 = arith.constant 1.000000e+00 : f32
    %106 = vector.broadcast %cst_34 : f32 to vector<8x128xf32>
    %107 = arith.addf %106, %105 : vector<8x128xf32>
    %108 = arith.divf %106, %107 : vector<8x128xf32>
    %109 = vector.extract_strided_slice %84 {offsets = [0, 0], sizes = [8, 128], strides = [1, 1]} : vector<128x128xf32> to vector<8x128xf32>
    %110 = vector.extract_strided_slice %92 {offsets = [0, 256], sizes = [8, 128], strides = [1, 1]} : vector<8x384xf32> to vector<8x128xf32>
    %111 = arith.mulf %100, %110 : vector<8x128xf32>
    %112 = arith.addf %109, %111 : vector<8x128xf32>
    %113 = math.tanh %112 : vector<8x128xf32>
    %cst_35 = arith.constant 1.000000e+00 : f32
    %114 = vector.broadcast %cst_35 : f32 to vector<8x128xf32>
    %115 = arith.subf %114, %108 : vector<8x128xf32>
    %116 = arith.mulf %115, %113 : vector<8x128xf32>
    %117 = arith.mulf %108, %87 : vector<8x128xf32>
    %118 = arith.addf %116, %117 : vector<8x128xf32>
    %119 = arith.addf %88, %118 : vector<8x128xf32>
    %120 = arith.truncf %118 : vector<8x128xf32> to vector<8x128xbf16>
    %cst_36 = arith.constant dense<0.000000e+00> : vector<8x384xf32>
    %121 = tpu.matmul %120, %85, %cst_36 {dimension_numbers = #tpu.dot_dimension_numbers<[1], [0], [0], [1], [0, 0, 1, 1], [], []>} : vector<8x128xbf16>, vector<128x384xbf16>, vector<8x384xf32> -> vector<8x384xf32>
    %122 = vector.broadcast %86 : vector<1x384xf32> to vector<8x384xf32>
    %123 = arith.addf %121, %122 : vector<8x384xf32>
    %124 = vector.extract_strided_slice %82 {offsets = [8, 0], sizes = [8, 128], strides = [1, 1]} : vector<128x128xf32> to vector<8x128xf32>
    %125 = vector.extract_strided_slice %123 {offsets = [0, 0], sizes = [8, 128], strides = [1, 1]} : vector<8x384xf32> to vector<8x128xf32>
    %126 = arith.addf %124, %125 : vector<8x128xf32>
    %127 = arith.negf %126 : vector<8x128xf32>
    %128 = math.exp %127 : vector<8x128xf32>
    %cst_37 = arith.constant 1.000000e+00 : f32
    %129 = vector.broadcast %cst_37 : f32 to vector<8x128xf32>
    %130 = arith.addf %129, %128 : vector<8x128xf32>
    %131 = arith.divf %129, %130 : vector<8x128xf32>
    %132 = vector.extract_strided_slice %83 {offsets = [8, 0], sizes = [8, 128], strides = [1, 1]} : vector<128x128xf32> to vector<8x128xf32>
    %133 = vector.extract_strided_slice %123 {offsets = [0, 128], sizes = [8, 128], strides = [1, 1]} : vector<8x384xf32> to vector<8x128xf32>
    %134 = arith.addf %132, %133 : vector<8x128xf32>
    %135 = arith.negf %134 : vector<8x128xf32>
    %136 = math.exp %135 : vector<8x128xf32>
    %cst_38 = arith.constant 1.000000e+00 : f32
    %137 = vector.broadcast %cst_38 : f32 to vector<8x128xf32>
    %138 = arith.addf %137, %136 : vector<8x128xf32>
    %139 = arith.divf %137, %138 : vector<8x128xf32>
    %140 = vector.extract_strided_slice %84 {offsets = [8, 0], sizes = [8, 128], strides = [1, 1]} : vector<128x128xf32> to vector<8x128xf32>
    %141 = vector.extract_strided_slice %123 {offsets = [0, 256], sizes = [8, 128], strides = [1, 1]} : vector<8x384xf32> to vector<8x128xf32>
    %142 = arith.mulf %131, %141 : vector<8x128xf32>
    %143 = arith.addf %140, %142 : vector<8x128xf32>
    %144 = math.tanh %143 : vector<8x128xf32>
    %cst_39 = arith.constant 1.000000e+00 : f32
    %145 = vector.broadcast %cst_39 : f32 to vector<8x128xf32>
    %146 = arith.subf %145, %139 : vector<8x128xf32>
    %147 = arith.mulf %146, %144 : vector<8x128xf32>
    %148 = arith.mulf %139, %118 : vector<8x128xf32>
    %149 = arith.addf %147, %148 : vector<8x128xf32>
    %150 = arith.addf %119, %149 : vector<8x128xf32>
    %151 = arith.truncf %149 : vector<8x128xf32> to vector<8x128xbf16>
    %cst_40 = arith.constant dense<0.000000e+00> : vector<8x384xf32>
    %152 = tpu.matmul %151, %85, %cst_40 {dimension_numbers = #tpu.dot_dimension_numbers<[1], [0], [0], [1], [0, 0, 1, 1], [], []>} : vector<8x128xbf16>, vector<128x384xbf16>, vector<8x384xf32> -> vector<8x384xf32>
    %153 = vector.broadcast %86 : vector<1x384xf32> to vector<8x384xf32>
    %154 = arith.addf %152, %153 : vector<8x384xf32>
    %155 = vector.extract_strided_slice %82 {offsets = [16, 0], sizes = [8, 128], strides = [1, 1]} : vector<128x128xf32> to vector<8x128xf32>
    %156 = vector.extract_strided_slice %154 {offsets = [0, 0], sizes = [8, 128], strides = [1, 1]} : vector<8x384xf32> to vector<8x128xf32>
    %157 = arith.addf %155, %156 : vector<8x128xf32>
    %158 = arith.negf %157 : vector<8x128xf32>
    %159 = math.exp %158 : vector<8x128xf32>
    %cst_41 = arith.constant 1.000000e+00 : f32
    %160 = vector.broadcast %cst_41 : f32 to vector<8x128xf32>
    %161 = arith.addf %160, %159 : vector<8x128xf32>
    %162 = arith.divf %160, %161 : vector<8x128xf32>
    %163 = vector.extract_strided_slice %83 {offsets = [16, 0], sizes = [8, 128], strides = [1, 1]} : vector<128x128xf32> to vector<8x128xf32>
    %164 = vector.extract_strided_slice %154 {offsets = [0, 128], sizes = [8, 128], strides = [1, 1]} : vector<8x384xf32> to vector<8x128xf32>
    %165 = arith.addf %163, %164 : vector<8x128xf32>
    %166 = arith.negf %165 : vector<8x128xf32>
    %167 = math.exp %166 : vector<8x128xf32>
    %cst_42 = arith.constant 1.000000e+00 : f32
    %168 = vector.broadcast %cst_42 : f32 to vector<8x128xf32>
    %169 = arith.addf %168, %167 : vector<8x128xf32>
    %170 = arith.divf %168, %169 : vector<8x128xf32>
    %171 = vector.extract_strided_slice %84 {offsets = [16, 0], sizes = [8, 128], strides = [1, 1]} : vector<128x128xf32> to vector<8x128xf32>
    %172 = vector.extract_strided_slice %154 {offsets = [0, 256], sizes = [8, 128], strides = [1, 1]} : vector<8x384xf32> to vector<8x128xf32>
    %173 = arith.mulf %162, %172 : vector<8x128xf32>
    %174 = arith.addf %171, %173 : vector<8x128xf32>
    %175 = math.tanh %174 : vector<8x128xf32>
    %cst_43 = arith.constant 1.000000e+00 : f32
    %176 = vector.broadcast %cst_43 : f32 to vector<8x128xf32>
    %177 = arith.subf %176, %170 : vector<8x128xf32>
    %178 = arith.mulf %177, %175 : vector<8x128xf32>
    %179 = arith.mulf %170, %149 : vector<8x128xf32>
    %180 = arith.addf %178, %179 : vector<8x128xf32>
    %181 = arith.addf %150, %180 : vector<8x128xf32>
    %182 = arith.truncf %180 : vector<8x128xf32> to vector<8x128xbf16>
    %cst_44 = arith.constant dense<0.000000e+00> : vector<8x384xf32>
    %183 = tpu.matmul %182, %85, %cst_44 {dimension_numbers = #tpu.dot_dimension_numbers<[1], [0], [0], [1], [0, 0, 1, 1], [], []>} : vector<8x128xbf16>, vector<128x384xbf16>, vector<8x384xf32> -> vector<8x384xf32>
    %184 = vector.broadcast %86 : vector<1x384xf32> to vector<8x384xf32>
    %185 = arith.addf %183, %184 : vector<8x384xf32>
    %186 = vector.extract_strided_slice %82 {offsets = [24, 0], sizes = [8, 128], strides = [1, 1]} : vector<128x128xf32> to vector<8x128xf32>
    %187 = vector.extract_strided_slice %185 {offsets = [0, 0], sizes = [8, 128], strides = [1, 1]} : vector<8x384xf32> to vector<8x128xf32>
    %188 = arith.addf %186, %187 : vector<8x128xf32>
    %189 = arith.negf %188 : vector<8x128xf32>
    %190 = math.exp %189 : vector<8x128xf32>
    %cst_45 = arith.constant 1.000000e+00 : f32
    %191 = vector.broadcast %cst_45 : f32 to vector<8x128xf32>
    %192 = arith.addf %191, %190 : vector<8x128xf32>
    %193 = arith.divf %191, %192 : vector<8x128xf32>
    %194 = vector.extract_strided_slice %83 {offsets = [24, 0], sizes = [8, 128], strides = [1, 1]} : vector<128x128xf32> to vector<8x128xf32>
    %195 = vector.extract_strided_slice %185 {offsets = [0, 128], sizes = [8, 128], strides = [1, 1]} : vector<8x384xf32> to vector<8x128xf32>
    %196 = arith.addf %194, %195 : vector<8x128xf32>
    %197 = arith.negf %196 : vector<8x128xf32>
    %198 = math.exp %197 : vector<8x128xf32>
    %cst_46 = arith.constant 1.000000e+00 : f32
    %199 = vector.broadcast %cst_46 : f32 to vector<8x128xf32>
    %200 = arith.addf %199, %198 : vector<8x128xf32>
    %201 = arith.divf %199, %200 : vector<8x128xf32>
    %202 = vector.extract_strided_slice %84 {offsets = [24, 0], sizes = [8, 128], strides = [1, 1]} : vector<128x128xf32> to vector<8x128xf32>
    %203 = vector.extract_strided_slice %185 {offsets = [0, 256], sizes = [8, 128], strides = [1, 1]} : vector<8x384xf32> to vector<8x128xf32>
    %204 = arith.mulf %193, %203 : vector<8x128xf32>
    %205 = arith.addf %202, %204 : vector<8x128xf32>
    %206 = math.tanh %205 : vector<8x128xf32>
    %cst_47 = arith.constant 1.000000e+00 : f32
    %207 = vector.broadcast %cst_47 : f32 to vector<8x128xf32>
    %208 = arith.subf %207, %201 : vector<8x128xf32>
    %209 = arith.mulf %208, %206 : vector<8x128xf32>
    %210 = arith.mulf %201, %180 : vector<8x128xf32>
    %211 = arith.addf %209, %210 : vector<8x128xf32>
    %212 = arith.addf %181, %211 : vector<8x128xf32>
    %213 = arith.truncf %211 : vector<8x128xf32> to vector<8x128xbf16>
    %cst_48 = arith.constant dense<0.000000e+00> : vector<8x384xf32>
    %214 = tpu.matmul %213, %85, %cst_48 {dimension_numbers = #tpu.dot_dimension_numbers<[1], [0], [0], [1], [0, 0, 1, 1], [], []>} : vector<8x128xbf16>, vector<128x384xbf16>, vector<8x384xf32> -> vector<8x384xf32>
    %215 = vector.broadcast %86 : vector<1x384xf32> to vector<8x384xf32>
    %216 = arith.addf %214, %215 : vector<8x384xf32>
    %217 = vector.extract_strided_slice %82 {offsets = [32, 0], sizes = [8, 128], strides = [1, 1]} : vector<128x128xf32> to vector<8x128xf32>
    %218 = vector.extract_strided_slice %216 {offsets = [0, 0], sizes = [8, 128], strides = [1, 1]} : vector<8x384xf32> to vector<8x128xf32>
    %219 = arith.addf %217, %218 : vector<8x128xf32>
    %220 = arith.negf %219 : vector<8x128xf32>
    %221 = math.exp %220 : vector<8x128xf32>
    %cst_49 = arith.constant 1.000000e+00 : f32
    %222 = vector.broadcast %cst_49 : f32 to vector<8x128xf32>
    %223 = arith.addf %222, %221 : vector<8x128xf32>
    %224 = arith.divf %222, %223 : vector<8x128xf32>
    %225 = vector.extract_strided_slice %83 {offsets = [32, 0], sizes = [8, 128], strides = [1, 1]} : vector<128x128xf32> to vector<8x128xf32>
    %226 = vector.extract_strided_slice %216 {offsets = [0, 128], sizes = [8, 128], strides = [1, 1]} : vector<8x384xf32> to vector<8x128xf32>
    %227 = arith.addf %225, %226 : vector<8x128xf32>
    %228 = arith.negf %227 : vector<8x128xf32>
    %229 = math.exp %228 : vector<8x128xf32>
    %cst_50 = arith.constant 1.000000e+00 : f32
    %230 = vector.broadcast %cst_50 : f32 to vector<8x128xf32>
    %231 = arith.addf %230, %229 : vector<8x128xf32>
    %232 = arith.divf %230, %231 : vector<8x128xf32>
    %233 = vector.extract_strided_slice %84 {offsets = [32, 0], sizes = [8, 128], strides = [1, 1]} : vector<128x128xf32> to vector<8x128xf32>
    %234 = vector.extract_strided_slice %216 {offsets = [0, 256], sizes = [8, 128], strides = [1, 1]} : vector<8x384xf32> to vector<8x128xf32>
    %235 = arith.mulf %224, %234 : vector<8x128xf32>
    %236 = arith.addf %233, %235 : vector<8x128xf32>
    %237 = math.tanh %236 : vector<8x128xf32>
    %cst_51 = arith.constant 1.000000e+00 : f32
    %238 = vector.broadcast %cst_51 : f32 to vector<8x128xf32>
    %239 = arith.subf %238, %232 : vector<8x128xf32>
    %240 = arith.mulf %239, %237 : vector<8x128xf32>
    %241 = arith.mulf %232, %211 : vector<8x128xf32>
    %242 = arith.addf %240, %241 : vector<8x128xf32>
    %243 = arith.addf %212, %242 : vector<8x128xf32>
    %244 = arith.truncf %242 : vector<8x128xf32> to vector<8x128xbf16>
    %cst_52 = arith.constant dense<0.000000e+00> : vector<8x384xf32>
    %245 = tpu.matmul %244, %85, %cst_52 {dimension_numbers = #tpu.dot_dimension_numbers<[1], [0], [0], [1], [0, 0, 1, 1], [], []>} : vector<8x128xbf16>, vector<128x384xbf16>, vector<8x384xf32> -> vector<8x384xf32>
    %246 = vector.broadcast %86 : vector<1x384xf32> to vector<8x384xf32>
    %247 = arith.addf %245, %246 : vector<8x384xf32>
    %248 = vector.extract_strided_slice %82 {offsets = [40, 0], sizes = [8, 128], strides = [1, 1]} : vector<128x128xf32> to vector<8x128xf32>
    %249 = vector.extract_strided_slice %247 {offsets = [0, 0], sizes = [8, 128], strides = [1, 1]} : vector<8x384xf32> to vector<8x128xf32>
    %250 = arith.addf %248, %249 : vector<8x128xf32>
    %251 = arith.negf %250 : vector<8x128xf32>
    %252 = math.exp %251 : vector<8x128xf32>
    %cst_53 = arith.constant 1.000000e+00 : f32
    %253 = vector.broadcast %cst_53 : f32 to vector<8x128xf32>
    %254 = arith.addf %253, %252 : vector<8x128xf32>
    %255 = arith.divf %253, %254 : vector<8x128xf32>
    %256 = vector.extract_strided_slice %83 {offsets = [40, 0], sizes = [8, 128], strides = [1, 1]} : vector<128x128xf32> to vector<8x128xf32>
    %257 = vector.extract_strided_slice %247 {offsets = [0, 128], sizes = [8, 128], strides = [1, 1]} : vector<8x384xf32> to vector<8x128xf32>
    %258 = arith.addf %256, %257 : vector<8x128xf32>
    %259 = arith.negf %258 : vector<8x128xf32>
    %260 = math.exp %259 : vector<8x128xf32>
    %cst_54 = arith.constant 1.000000e+00 : f32
    %261 = vector.broadcast %cst_54 : f32 to vector<8x128xf32>
    %262 = arith.addf %261, %260 : vector<8x128xf32>
    %263 = arith.divf %261, %262 : vector<8x128xf32>
    %264 = vector.extract_strided_slice %84 {offsets = [40, 0], sizes = [8, 128], strides = [1, 1]} : vector<128x128xf32> to vector<8x128xf32>
    %265 = vector.extract_strided_slice %247 {offsets = [0, 256], sizes = [8, 128], strides = [1, 1]} : vector<8x384xf32> to vector<8x128xf32>
    %266 = arith.mulf %255, %265 : vector<8x128xf32>
    %267 = arith.addf %264, %266 : vector<8x128xf32>
    %268 = math.tanh %267 : vector<8x128xf32>
    %cst_55 = arith.constant 1.000000e+00 : f32
    %269 = vector.broadcast %cst_55 : f32 to vector<8x128xf32>
    %270 = arith.subf %269, %263 : vector<8x128xf32>
    %271 = arith.mulf %270, %268 : vector<8x128xf32>
    %272 = arith.mulf %263, %242 : vector<8x128xf32>
    %273 = arith.addf %271, %272 : vector<8x128xf32>
    %274 = arith.addf %243, %273 : vector<8x128xf32>
    %275 = arith.truncf %273 : vector<8x128xf32> to vector<8x128xbf16>
    %cst_56 = arith.constant dense<0.000000e+00> : vector<8x384xf32>
    %276 = tpu.matmul %275, %85, %cst_56 {dimension_numbers = #tpu.dot_dimension_numbers<[1], [0], [0], [1], [0, 0, 1, 1], [], []>} : vector<8x128xbf16>, vector<128x384xbf16>, vector<8x384xf32> -> vector<8x384xf32>
    %277 = vector.broadcast %86 : vector<1x384xf32> to vector<8x384xf32>
    %278 = arith.addf %276, %277 : vector<8x384xf32>
    %279 = vector.extract_strided_slice %82 {offsets = [48, 0], sizes = [8, 128], strides = [1, 1]} : vector<128x128xf32> to vector<8x128xf32>
    %280 = vector.extract_strided_slice %278 {offsets = [0, 0], sizes = [8, 128], strides = [1, 1]} : vector<8x384xf32> to vector<8x128xf32>
    %281 = arith.addf %279, %280 : vector<8x128xf32>
    %282 = arith.negf %281 : vector<8x128xf32>
    %283 = math.exp %282 : vector<8x128xf32>
    %cst_57 = arith.constant 1.000000e+00 : f32
    %284 = vector.broadcast %cst_57 : f32 to vector<8x128xf32>
    %285 = arith.addf %284, %283 : vector<8x128xf32>
    %286 = arith.divf %284, %285 : vector<8x128xf32>
    %287 = vector.extract_strided_slice %83 {offsets = [48, 0], sizes = [8, 128], strides = [1, 1]} : vector<128x128xf32> to vector<8x128xf32>
    %288 = vector.extract_strided_slice %278 {offsets = [0, 128], sizes = [8, 128], strides = [1, 1]} : vector<8x384xf32> to vector<8x128xf32>
    %289 = arith.addf %287, %288 : vector<8x128xf32>
    %290 = arith.negf %289 : vector<8x128xf32>
    %291 = math.exp %290 : vector<8x128xf32>
    %cst_58 = arith.constant 1.000000e+00 : f32
    %292 = vector.broadcast %cst_58 : f32 to vector<8x128xf32>
    %293 = arith.addf %292, %291 : vector<8x128xf32>
    %294 = arith.divf %292, %293 : vector<8x128xf32>
    %295 = vector.extract_strided_slice %84 {offsets = [48, 0], sizes = [8, 128], strides = [1, 1]} : vector<128x128xf32> to vector<8x128xf32>
    %296 = vector.extract_strided_slice %278 {offsets = [0, 256], sizes = [8, 128], strides = [1, 1]} : vector<8x384xf32> to vector<8x128xf32>
    %297 = arith.mulf %286, %296 : vector<8x128xf32>
    %298 = arith.addf %295, %297 : vector<8x128xf32>
    %299 = math.tanh %298 : vector<8x128xf32>
    %cst_59 = arith.constant 1.000000e+00 : f32
    %300 = vector.broadcast %cst_59 : f32 to vector<8x128xf32>
    %301 = arith.subf %300, %294 : vector<8x128xf32>
    %302 = arith.mulf %301, %299 : vector<8x128xf32>
    %303 = arith.mulf %294, %273 : vector<8x128xf32>
    %304 = arith.addf %302, %303 : vector<8x128xf32>
    %305 = arith.addf %274, %304 : vector<8x128xf32>
    %306 = arith.truncf %304 : vector<8x128xf32> to vector<8x128xbf16>
    %cst_60 = arith.constant dense<0.000000e+00> : vector<8x384xf32>
    %307 = tpu.matmul %306, %85, %cst_60 {dimension_numbers = #tpu.dot_dimension_numbers<[1], [0], [0], [1], [0, 0, 1, 1], [], []>} : vector<8x128xbf16>, vector<128x384xbf16>, vector<8x384xf32> -> vector<8x384xf32>
    %308 = vector.broadcast %86 : vector<1x384xf32> to vector<8x384xf32>
    %309 = arith.addf %307, %308 : vector<8x384xf32>
    %310 = vector.extract_strided_slice %82 {offsets = [56, 0], sizes = [8, 128], strides = [1, 1]} : vector<128x128xf32> to vector<8x128xf32>
    %311 = vector.extract_strided_slice %309 {offsets = [0, 0], sizes = [8, 128], strides = [1, 1]} : vector<8x384xf32> to vector<8x128xf32>
    %312 = arith.addf %310, %311 : vector<8x128xf32>
    %313 = arith.negf %312 : vector<8x128xf32>
    %314 = math.exp %313 : vector<8x128xf32>
    %cst_61 = arith.constant 1.000000e+00 : f32
    %315 = vector.broadcast %cst_61 : f32 to vector<8x128xf32>
    %316 = arith.addf %315, %314 : vector<8x128xf32>
    %317 = arith.divf %315, %316 : vector<8x128xf32>
    %318 = vector.extract_strided_slice %83 {offsets = [56, 0], sizes = [8, 128], strides = [1, 1]} : vector<128x128xf32> to vector<8x128xf32>
    %319 = vector.extract_strided_slice %309 {offsets = [0, 128], sizes = [8, 128], strides = [1, 1]} : vector<8x384xf32> to vector<8x128xf32>
    %320 = arith.addf %318, %319 : vector<8x128xf32>
    %321 = arith.negf %320 : vector<8x128xf32>
    %322 = math.exp %321 : vector<8x128xf32>
    %cst_62 = arith.constant 1.000000e+00 : f32
    %323 = vector.broadcast %cst_62 : f32 to vector<8x128xf32>
    %324 = arith.addf %323, %322 : vector<8x128xf32>
    %325 = arith.divf %323, %324 : vector<8x128xf32>
    %326 = vector.extract_strided_slice %84 {offsets = [56, 0], sizes = [8, 128], strides = [1, 1]} : vector<128x128xf32> to vector<8x128xf32>
    %327 = vector.extract_strided_slice %309 {offsets = [0, 256], sizes = [8, 128], strides = [1, 1]} : vector<8x384xf32> to vector<8x128xf32>
    %328 = arith.mulf %317, %327 : vector<8x128xf32>
    %329 = arith.addf %326, %328 : vector<8x128xf32>
    %330 = math.tanh %329 : vector<8x128xf32>
    %cst_63 = arith.constant 1.000000e+00 : f32
    %331 = vector.broadcast %cst_63 : f32 to vector<8x128xf32>
    %332 = arith.subf %331, %325 : vector<8x128xf32>
    %333 = arith.mulf %332, %330 : vector<8x128xf32>
    %334 = arith.mulf %325, %304 : vector<8x128xf32>
    %335 = arith.addf %333, %334 : vector<8x128xf32>
    %336 = arith.addf %305, %335 : vector<8x128xf32>
    %337 = arith.truncf %335 : vector<8x128xf32> to vector<8x128xbf16>
    %cst_64 = arith.constant dense<0.000000e+00> : vector<8x384xf32>
    %338 = tpu.matmul %337, %85, %cst_64 {dimension_numbers = #tpu.dot_dimension_numbers<[1], [0], [0], [1], [0, 0, 1, 1], [], []>} : vector<8x128xbf16>, vector<128x384xbf16>, vector<8x384xf32> -> vector<8x384xf32>
    %339 = vector.broadcast %86 : vector<1x384xf32> to vector<8x384xf32>
    %340 = arith.addf %338, %339 : vector<8x384xf32>
    %341 = vector.extract_strided_slice %82 {offsets = [64, 0], sizes = [8, 128], strides = [1, 1]} : vector<128x128xf32> to vector<8x128xf32>
    %342 = vector.extract_strided_slice %340 {offsets = [0, 0], sizes = [8, 128], strides = [1, 1]} : vector<8x384xf32> to vector<8x128xf32>
    %343 = arith.addf %341, %342 : vector<8x128xf32>
    %344 = arith.negf %343 : vector<8x128xf32>
    %345 = math.exp %344 : vector<8x128xf32>
    %cst_65 = arith.constant 1.000000e+00 : f32
    %346 = vector.broadcast %cst_65 : f32 to vector<8x128xf32>
    %347 = arith.addf %346, %345 : vector<8x128xf32>
    %348 = arith.divf %346, %347 : vector<8x128xf32>
    %349 = vector.extract_strided_slice %83 {offsets = [64, 0], sizes = [8, 128], strides = [1, 1]} : vector<128x128xf32> to vector<8x128xf32>
    %350 = vector.extract_strided_slice %340 {offsets = [0, 128], sizes = [8, 128], strides = [1, 1]} : vector<8x384xf32> to vector<8x128xf32>
    %351 = arith.addf %349, %350 : vector<8x128xf32>
    %352 = arith.negf %351 : vector<8x128xf32>
    %353 = math.exp %352 : vector<8x128xf32>
    %cst_66 = arith.constant 1.000000e+00 : f32
    %354 = vector.broadcast %cst_66 : f32 to vector<8x128xf32>
    %355 = arith.addf %354, %353 : vector<8x128xf32>
    %356 = arith.divf %354, %355 : vector<8x128xf32>
    %357 = vector.extract_strided_slice %84 {offsets = [64, 0], sizes = [8, 128], strides = [1, 1]} : vector<128x128xf32> to vector<8x128xf32>
    %358 = vector.extract_strided_slice %340 {offsets = [0, 256], sizes = [8, 128], strides = [1, 1]} : vector<8x384xf32> to vector<8x128xf32>
    %359 = arith.mulf %348, %358 : vector<8x128xf32>
    %360 = arith.addf %357, %359 : vector<8x128xf32>
    %361 = math.tanh %360 : vector<8x128xf32>
    %cst_67 = arith.constant 1.000000e+00 : f32
    %362 = vector.broadcast %cst_67 : f32 to vector<8x128xf32>
    %363 = arith.subf %362, %356 : vector<8x128xf32>
    %364 = arith.mulf %363, %361 : vector<8x128xf32>
    %365 = arith.mulf %356, %335 : vector<8x128xf32>
    %366 = arith.addf %364, %365 : vector<8x128xf32>
    %367 = arith.addf %336, %366 : vector<8x128xf32>
    %368 = arith.truncf %366 : vector<8x128xf32> to vector<8x128xbf16>
    %cst_68 = arith.constant dense<0.000000e+00> : vector<8x384xf32>
    %369 = tpu.matmul %368, %85, %cst_68 {dimension_numbers = #tpu.dot_dimension_numbers<[1], [0], [0], [1], [0, 0, 1, 1], [], []>} : vector<8x128xbf16>, vector<128x384xbf16>, vector<8x384xf32> -> vector<8x384xf32>
    %370 = vector.broadcast %86 : vector<1x384xf32> to vector<8x384xf32>
    %371 = arith.addf %369, %370 : vector<8x384xf32>
    %372 = vector.extract_strided_slice %82 {offsets = [72, 0], sizes = [8, 128], strides = [1, 1]} : vector<128x128xf32> to vector<8x128xf32>
    %373 = vector.extract_strided_slice %371 {offsets = [0, 0], sizes = [8, 128], strides = [1, 1]} : vector<8x384xf32> to vector<8x128xf32>
    %374 = arith.addf %372, %373 : vector<8x128xf32>
    %375 = arith.negf %374 : vector<8x128xf32>
    %376 = math.exp %375 : vector<8x128xf32>
    %cst_69 = arith.constant 1.000000e+00 : f32
    %377 = vector.broadcast %cst_69 : f32 to vector<8x128xf32>
    %378 = arith.addf %377, %376 : vector<8x128xf32>
    %379 = arith.divf %377, %378 : vector<8x128xf32>
    %380 = vector.extract_strided_slice %83 {offsets = [72, 0], sizes = [8, 128], strides = [1, 1]} : vector<128x128xf32> to vector<8x128xf32>
    %381 = vector.extract_strided_slice %371 {offsets = [0, 128], sizes = [8, 128], strides = [1, 1]} : vector<8x384xf32> to vector<8x128xf32>
    %382 = arith.addf %380, %381 : vector<8x128xf32>
    %383 = arith.negf %382 : vector<8x128xf32>
    %384 = math.exp %383 : vector<8x128xf32>
    %cst_70 = arith.constant 1.000000e+00 : f32
    %385 = vector.broadcast %cst_70 : f32 to vector<8x128xf32>
    %386 = arith.addf %385, %384 : vector<8x128xf32>
    %387 = arith.divf %385, %386 : vector<8x128xf32>
    %388 = vector.extract_strided_slice %84 {offsets = [72, 0], sizes = [8, 128], strides = [1, 1]} : vector<128x128xf32> to vector<8x128xf32>
    %389 = vector.extract_strided_slice %371 {offsets = [0, 256], sizes = [8, 128], strides = [1, 1]} : vector<8x384xf32> to vector<8x128xf32>
    %390 = arith.mulf %379, %389 : vector<8x128xf32>
    %391 = arith.addf %388, %390 : vector<8x128xf32>
    %392 = math.tanh %391 : vector<8x128xf32>
    %cst_71 = arith.constant 1.000000e+00 : f32
    %393 = vector.broadcast %cst_71 : f32 to vector<8x128xf32>
    %394 = arith.subf %393, %387 : vector<8x128xf32>
    %395 = arith.mulf %394, %392 : vector<8x128xf32>
    %396 = arith.mulf %387, %366 : vector<8x128xf32>
    %397 = arith.addf %395, %396 : vector<8x128xf32>
    %398 = arith.addf %367, %397 : vector<8x128xf32>
    %399 = arith.truncf %397 : vector<8x128xf32> to vector<8x128xbf16>
    %cst_72 = arith.constant dense<0.000000e+00> : vector<8x384xf32>
    %400 = tpu.matmul %399, %85, %cst_72 {dimension_numbers = #tpu.dot_dimension_numbers<[1], [0], [0], [1], [0, 0, 1, 1], [], []>} : vector<8x128xbf16>, vector<128x384xbf16>, vector<8x384xf32> -> vector<8x384xf32>
    %401 = vector.broadcast %86 : vector<1x384xf32> to vector<8x384xf32>
    %402 = arith.addf %400, %401 : vector<8x384xf32>
    %403 = vector.extract_strided_slice %82 {offsets = [80, 0], sizes = [8, 128], strides = [1, 1]} : vector<128x128xf32> to vector<8x128xf32>
    %404 = vector.extract_strided_slice %402 {offsets = [0, 0], sizes = [8, 128], strides = [1, 1]} : vector<8x384xf32> to vector<8x128xf32>
    %405 = arith.addf %403, %404 : vector<8x128xf32>
    %406 = arith.negf %405 : vector<8x128xf32>
    %407 = math.exp %406 : vector<8x128xf32>
    %cst_73 = arith.constant 1.000000e+00 : f32
    %408 = vector.broadcast %cst_73 : f32 to vector<8x128xf32>
    %409 = arith.addf %408, %407 : vector<8x128xf32>
    %410 = arith.divf %408, %409 : vector<8x128xf32>
    %411 = vector.extract_strided_slice %83 {offsets = [80, 0], sizes = [8, 128], strides = [1, 1]} : vector<128x128xf32> to vector<8x128xf32>
    %412 = vector.extract_strided_slice %402 {offsets = [0, 128], sizes = [8, 128], strides = [1, 1]} : vector<8x384xf32> to vector<8x128xf32>
    %413 = arith.addf %411, %412 : vector<8x128xf32>
    %414 = arith.negf %413 : vector<8x128xf32>
    %415 = math.exp %414 : vector<8x128xf32>
    %cst_74 = arith.constant 1.000000e+00 : f32
    %416 = vector.broadcast %cst_74 : f32 to vector<8x128xf32>
    %417 = arith.addf %416, %415 : vector<8x128xf32>
    %418 = arith.divf %416, %417 : vector<8x128xf32>
    %419 = vector.extract_strided_slice %84 {offsets = [80, 0], sizes = [8, 128], strides = [1, 1]} : vector<128x128xf32> to vector<8x128xf32>
    %420 = vector.extract_strided_slice %402 {offsets = [0, 256], sizes = [8, 128], strides = [1, 1]} : vector<8x384xf32> to vector<8x128xf32>
    %421 = arith.mulf %410, %420 : vector<8x128xf32>
    %422 = arith.addf %419, %421 : vector<8x128xf32>
    %423 = math.tanh %422 : vector<8x128xf32>
    %cst_75 = arith.constant 1.000000e+00 : f32
    %424 = vector.broadcast %cst_75 : f32 to vector<8x128xf32>
    %425 = arith.subf %424, %418 : vector<8x128xf32>
    %426 = arith.mulf %425, %423 : vector<8x128xf32>
    %427 = arith.mulf %418, %397 : vector<8x128xf32>
    %428 = arith.addf %426, %427 : vector<8x128xf32>
    %429 = arith.addf %398, %428 : vector<8x128xf32>
    %430 = arith.truncf %428 : vector<8x128xf32> to vector<8x128xbf16>
    %cst_76 = arith.constant dense<0.000000e+00> : vector<8x384xf32>
    %431 = tpu.matmul %430, %85, %cst_76 {dimension_numbers = #tpu.dot_dimension_numbers<[1], [0], [0], [1], [0, 0, 1, 1], [], []>} : vector<8x128xbf16>, vector<128x384xbf16>, vector<8x384xf32> -> vector<8x384xf32>
    %432 = vector.broadcast %86 : vector<1x384xf32> to vector<8x384xf32>
    %433 = arith.addf %431, %432 : vector<8x384xf32>
    %434 = vector.extract_strided_slice %82 {offsets = [88, 0], sizes = [8, 128], strides = [1, 1]} : vector<128x128xf32> to vector<8x128xf32>
    %435 = vector.extract_strided_slice %433 {offsets = [0, 0], sizes = [8, 128], strides = [1, 1]} : vector<8x384xf32> to vector<8x128xf32>
    %436 = arith.addf %434, %435 : vector<8x128xf32>
    %437 = arith.negf %436 : vector<8x128xf32>
    %438 = math.exp %437 : vector<8x128xf32>
    %cst_77 = arith.constant 1.000000e+00 : f32
    %439 = vector.broadcast %cst_77 : f32 to vector<8x128xf32>
    %440 = arith.addf %439, %438 : vector<8x128xf32>
    %441 = arith.divf %439, %440 : vector<8x128xf32>
    %442 = vector.extract_strided_slice %83 {offsets = [88, 0], sizes = [8, 128], strides = [1, 1]} : vector<128x128xf32> to vector<8x128xf32>
    %443 = vector.extract_strided_slice %433 {offsets = [0, 128], sizes = [8, 128], strides = [1, 1]} : vector<8x384xf32> to vector<8x128xf32>
    %444 = arith.addf %442, %443 : vector<8x128xf32>
    %445 = arith.negf %444 : vector<8x128xf32>
    %446 = math.exp %445 : vector<8x128xf32>
    %cst_78 = arith.constant 1.000000e+00 : f32
    %447 = vector.broadcast %cst_78 : f32 to vector<8x128xf32>
    %448 = arith.addf %447, %446 : vector<8x128xf32>
    %449 = arith.divf %447, %448 : vector<8x128xf32>
    %450 = vector.extract_strided_slice %84 {offsets = [88, 0], sizes = [8, 128], strides = [1, 1]} : vector<128x128xf32> to vector<8x128xf32>
    %451 = vector.extract_strided_slice %433 {offsets = [0, 256], sizes = [8, 128], strides = [1, 1]} : vector<8x384xf32> to vector<8x128xf32>
    %452 = arith.mulf %441, %451 : vector<8x128xf32>
    %453 = arith.addf %450, %452 : vector<8x128xf32>
    %454 = math.tanh %453 : vector<8x128xf32>
    %cst_79 = arith.constant 1.000000e+00 : f32
    %455 = vector.broadcast %cst_79 : f32 to vector<8x128xf32>
    %456 = arith.subf %455, %449 : vector<8x128xf32>
    %457 = arith.mulf %456, %454 : vector<8x128xf32>
    %458 = arith.mulf %449, %428 : vector<8x128xf32>
    %459 = arith.addf %457, %458 : vector<8x128xf32>
    %460 = arith.addf %429, %459 : vector<8x128xf32>
    %461 = arith.truncf %459 : vector<8x128xf32> to vector<8x128xbf16>
    %cst_80 = arith.constant dense<0.000000e+00> : vector<8x384xf32>
    %462 = tpu.matmul %461, %85, %cst_80 {dimension_numbers = #tpu.dot_dimension_numbers<[1], [0], [0], [1], [0, 0, 1, 1], [], []>} : vector<8x128xbf16>, vector<128x384xbf16>, vector<8x384xf32> -> vector<8x384xf32>
    %463 = vector.broadcast %86 : vector<1x384xf32> to vector<8x384xf32>
    %464 = arith.addf %462, %463 : vector<8x384xf32>
    %465 = vector.extract_strided_slice %82 {offsets = [96, 0], sizes = [8, 128], strides = [1, 1]} : vector<128x128xf32> to vector<8x128xf32>
    %466 = vector.extract_strided_slice %464 {offsets = [0, 0], sizes = [8, 128], strides = [1, 1]} : vector<8x384xf32> to vector<8x128xf32>
    %467 = arith.addf %465, %466 : vector<8x128xf32>
    %468 = arith.negf %467 : vector<8x128xf32>
    %469 = math.exp %468 : vector<8x128xf32>
    %cst_81 = arith.constant 1.000000e+00 : f32
    %470 = vector.broadcast %cst_81 : f32 to vector<8x128xf32>
    %471 = arith.addf %470, %469 : vector<8x128xf32>
    %472 = arith.divf %470, %471 : vector<8x128xf32>
    %473 = vector.extract_strided_slice %83 {offsets = [96, 0], sizes = [8, 128], strides = [1, 1]} : vector<128x128xf32> to vector<8x128xf32>
    %474 = vector.extract_strided_slice %464 {offsets = [0, 128], sizes = [8, 128], strides = [1, 1]} : vector<8x384xf32> to vector<8x128xf32>
    %475 = arith.addf %473, %474 : vector<8x128xf32>
    %476 = arith.negf %475 : vector<8x128xf32>
    %477 = math.exp %476 : vector<8x128xf32>
    %cst_82 = arith.constant 1.000000e+00 : f32
    %478 = vector.broadcast %cst_82 : f32 to vector<8x128xf32>
    %479 = arith.addf %478, %477 : vector<8x128xf32>
    %480 = arith.divf %478, %479 : vector<8x128xf32>
    %481 = vector.extract_strided_slice %84 {offsets = [96, 0], sizes = [8, 128], strides = [1, 1]} : vector<128x128xf32> to vector<8x128xf32>
    %482 = vector.extract_strided_slice %464 {offsets = [0, 256], sizes = [8, 128], strides = [1, 1]} : vector<8x384xf32> to vector<8x128xf32>
    %483 = arith.mulf %472, %482 : vector<8x128xf32>
    %484 = arith.addf %481, %483 : vector<8x128xf32>
    %485 = math.tanh %484 : vector<8x128xf32>
    %cst_83 = arith.constant 1.000000e+00 : f32
    %486 = vector.broadcast %cst_83 : f32 to vector<8x128xf32>
    %487 = arith.subf %486, %480 : vector<8x128xf32>
    %488 = arith.mulf %487, %485 : vector<8x128xf32>
    %489 = arith.mulf %480, %459 : vector<8x128xf32>
    %490 = arith.addf %488, %489 : vector<8x128xf32>
    %491 = arith.addf %460, %490 : vector<8x128xf32>
    %492 = arith.truncf %490 : vector<8x128xf32> to vector<8x128xbf16>
    %cst_84 = arith.constant dense<0.000000e+00> : vector<8x384xf32>
    %493 = tpu.matmul %492, %85, %cst_84 {dimension_numbers = #tpu.dot_dimension_numbers<[1], [0], [0], [1], [0, 0, 1, 1], [], []>} : vector<8x128xbf16>, vector<128x384xbf16>, vector<8x384xf32> -> vector<8x384xf32>
    %494 = vector.broadcast %86 : vector<1x384xf32> to vector<8x384xf32>
    %495 = arith.addf %493, %494 : vector<8x384xf32>
    %496 = vector.extract_strided_slice %82 {offsets = [104, 0], sizes = [8, 128], strides = [1, 1]} : vector<128x128xf32> to vector<8x128xf32>
    %497 = vector.extract_strided_slice %495 {offsets = [0, 0], sizes = [8, 128], strides = [1, 1]} : vector<8x384xf32> to vector<8x128xf32>
    %498 = arith.addf %496, %497 : vector<8x128xf32>
    %499 = arith.negf %498 : vector<8x128xf32>
    %500 = math.exp %499 : vector<8x128xf32>
    %cst_85 = arith.constant 1.000000e+00 : f32
    %501 = vector.broadcast %cst_85 : f32 to vector<8x128xf32>
    %502 = arith.addf %501, %500 : vector<8x128xf32>
    %503 = arith.divf %501, %502 : vector<8x128xf32>
    %504 = vector.extract_strided_slice %83 {offsets = [104, 0], sizes = [8, 128], strides = [1, 1]} : vector<128x128xf32> to vector<8x128xf32>
    %505 = vector.extract_strided_slice %495 {offsets = [0, 128], sizes = [8, 128], strides = [1, 1]} : vector<8x384xf32> to vector<8x128xf32>
    %506 = arith.addf %504, %505 : vector<8x128xf32>
    %507 = arith.negf %506 : vector<8x128xf32>
    %508 = math.exp %507 : vector<8x128xf32>
    %cst_86 = arith.constant 1.000000e+00 : f32
    %509 = vector.broadcast %cst_86 : f32 to vector<8x128xf32>
    %510 = arith.addf %509, %508 : vector<8x128xf32>
    %511 = arith.divf %509, %510 : vector<8x128xf32>
    %512 = vector.extract_strided_slice %84 {offsets = [104, 0], sizes = [8, 128], strides = [1, 1]} : vector<128x128xf32> to vector<8x128xf32>
    %513 = vector.extract_strided_slice %495 {offsets = [0, 256], sizes = [8, 128], strides = [1, 1]} : vector<8x384xf32> to vector<8x128xf32>
    %514 = arith.mulf %503, %513 : vector<8x128xf32>
    %515 = arith.addf %512, %514 : vector<8x128xf32>
    %516 = math.tanh %515 : vector<8x128xf32>
    %cst_87 = arith.constant 1.000000e+00 : f32
    %517 = vector.broadcast %cst_87 : f32 to vector<8x128xf32>
    %518 = arith.subf %517, %511 : vector<8x128xf32>
    %519 = arith.mulf %518, %516 : vector<8x128xf32>
    %520 = arith.mulf %511, %490 : vector<8x128xf32>
    %521 = arith.addf %519, %520 : vector<8x128xf32>
    %522 = arith.addf %491, %521 : vector<8x128xf32>
    %523 = arith.truncf %521 : vector<8x128xf32> to vector<8x128xbf16>
    %cst_88 = arith.constant dense<0.000000e+00> : vector<8x384xf32>
    %524 = tpu.matmul %523, %85, %cst_88 {dimension_numbers = #tpu.dot_dimension_numbers<[1], [0], [0], [1], [0, 0, 1, 1], [], []>} : vector<8x128xbf16>, vector<128x384xbf16>, vector<8x384xf32> -> vector<8x384xf32>
    %525 = vector.broadcast %86 : vector<1x384xf32> to vector<8x384xf32>
    %526 = arith.addf %524, %525 : vector<8x384xf32>
    %527 = vector.extract_strided_slice %82 {offsets = [112, 0], sizes = [8, 128], strides = [1, 1]} : vector<128x128xf32> to vector<8x128xf32>
    %528 = vector.extract_strided_slice %526 {offsets = [0, 0], sizes = [8, 128], strides = [1, 1]} : vector<8x384xf32> to vector<8x128xf32>
    %529 = arith.addf %527, %528 : vector<8x128xf32>
    %530 = arith.negf %529 : vector<8x128xf32>
    %531 = math.exp %530 : vector<8x128xf32>
    %cst_89 = arith.constant 1.000000e+00 : f32
    %532 = vector.broadcast %cst_89 : f32 to vector<8x128xf32>
    %533 = arith.addf %532, %531 : vector<8x128xf32>
    %534 = arith.divf %532, %533 : vector<8x128xf32>
    %535 = vector.extract_strided_slice %83 {offsets = [112, 0], sizes = [8, 128], strides = [1, 1]} : vector<128x128xf32> to vector<8x128xf32>
    %536 = vector.extract_strided_slice %526 {offsets = [0, 128], sizes = [8, 128], strides = [1, 1]} : vector<8x384xf32> to vector<8x128xf32>
    %537 = arith.addf %535, %536 : vector<8x128xf32>
    %538 = arith.negf %537 : vector<8x128xf32>
    %539 = math.exp %538 : vector<8x128xf32>
    %cst_90 = arith.constant 1.000000e+00 : f32
    %540 = vector.broadcast %cst_90 : f32 to vector<8x128xf32>
    %541 = arith.addf %540, %539 : vector<8x128xf32>
    %542 = arith.divf %540, %541 : vector<8x128xf32>
    %543 = vector.extract_strided_slice %84 {offsets = [112, 0], sizes = [8, 128], strides = [1, 1]} : vector<128x128xf32> to vector<8x128xf32>
    %544 = vector.extract_strided_slice %526 {offsets = [0, 256], sizes = [8, 128], strides = [1, 1]} : vector<8x384xf32> to vector<8x128xf32>
    %545 = arith.mulf %534, %544 : vector<8x128xf32>
    %546 = arith.addf %543, %545 : vector<8x128xf32>
    %547 = math.tanh %546 : vector<8x128xf32>
    %cst_91 = arith.constant 1.000000e+00 : f32
    %548 = vector.broadcast %cst_91 : f32 to vector<8x128xf32>
    %549 = arith.subf %548, %542 : vector<8x128xf32>
    %550 = arith.mulf %549, %547 : vector<8x128xf32>
    %551 = arith.mulf %542, %521 : vector<8x128xf32>
    %552 = arith.addf %550, %551 : vector<8x128xf32>
    %553 = arith.addf %522, %552 : vector<8x128xf32>
    %554 = arith.truncf %552 : vector<8x128xf32> to vector<8x128xbf16>
    %cst_92 = arith.constant dense<0.000000e+00> : vector<8x384xf32>
    %555 = tpu.matmul %554, %85, %cst_92 {dimension_numbers = #tpu.dot_dimension_numbers<[1], [0], [0], [1], [0, 0, 1, 1], [], []>} : vector<8x128xbf16>, vector<128x384xbf16>, vector<8x384xf32> -> vector<8x384xf32>
    %556 = vector.broadcast %86 : vector<1x384xf32> to vector<8x384xf32>
    %557 = arith.addf %555, %556 : vector<8x384xf32>
    %558 = vector.extract_strided_slice %82 {offsets = [120, 0], sizes = [8, 128], strides = [1, 1]} : vector<128x128xf32> to vector<8x128xf32>
    %559 = vector.extract_strided_slice %557 {offsets = [0, 0], sizes = [8, 128], strides = [1, 1]} : vector<8x384xf32> to vector<8x128xf32>
    %560 = arith.addf %558, %559 : vector<8x128xf32>
    %561 = arith.negf %560 : vector<8x128xf32>
    %562 = math.exp %561 : vector<8x128xf32>
    %cst_93 = arith.constant 1.000000e+00 : f32
    %563 = vector.broadcast %cst_93 : f32 to vector<8x128xf32>
    %564 = arith.addf %563, %562 : vector<8x128xf32>
    %565 = arith.divf %563, %564 : vector<8x128xf32>
    %566 = vector.extract_strided_slice %83 {offsets = [120, 0], sizes = [8, 128], strides = [1, 1]} : vector<128x128xf32> to vector<8x128xf32>
    %567 = vector.extract_strided_slice %557 {offsets = [0, 128], sizes = [8, 128], strides = [1, 1]} : vector<8x384xf32> to vector<8x128xf32>
    %568 = arith.addf %566, %567 : vector<8x128xf32>
    %569 = arith.negf %568 : vector<8x128xf32>
    %570 = math.exp %569 : vector<8x128xf32>
    %cst_94 = arith.constant 1.000000e+00 : f32
    %571 = vector.broadcast %cst_94 : f32 to vector<8x128xf32>
    %572 = arith.addf %571, %570 : vector<8x128xf32>
    %573 = arith.divf %571, %572 : vector<8x128xf32>
    %574 = vector.extract_strided_slice %84 {offsets = [120, 0], sizes = [8, 128], strides = [1, 1]} : vector<128x128xf32> to vector<8x128xf32>
    %575 = vector.extract_strided_slice %557 {offsets = [0, 256], sizes = [8, 128], strides = [1, 1]} : vector<8x384xf32> to vector<8x128xf32>
    %576 = arith.mulf %565, %575 : vector<8x128xf32>
    %577 = arith.addf %574, %576 : vector<8x128xf32>
    %578 = math.tanh %577 : vector<8x128xf32>
    %cst_95 = arith.constant 1.000000e+00 : f32
    %579 = vector.broadcast %cst_95 : f32 to vector<8x128xf32>
    %580 = arith.subf %579, %573 : vector<8x128xf32>
    %581 = arith.mulf %580, %578 : vector<8x128xf32>
    %582 = arith.mulf %573, %552 : vector<8x128xf32>
    %583 = arith.addf %581, %582 : vector<8x128xf32>
    %584 = arith.addf %553, %583 : vector<8x128xf32>
    %cst_96 = arith.constant 6.250000e-02 : f32
    %585 = vector.broadcast %cst_96 : f32 to vector<8x128xf32>
    %586 = arith.mulf %584, %585 : vector<8x128xf32>
    %587 = arith.mulf %586, %586 : vector<8x128xf32>
    %cst_97 = arith.constant dense<0.000000e+00> : vector<8xf32>
    %588 = vector.multi_reduction <add>, %587, %cst_97 [1] : vector<8x128xf32> to vector<8xf32>
    %589 = vector.shape_cast %588 : vector<8xf32> to vector<8x1xf32>
    %cst_98 = arith.constant 1.000000e-24 : f32
    %590 = vector.broadcast %cst_98 : f32 to vector<8x1xf32>
    %591 = arith.maximumf %589, %590 : vector<8x1xf32>
    %592 = math.rsqrt %591 : vector<8x1xf32>
    %593 = vector.broadcast %592 : vector<8x1xf32> to vector<8x128xf32>
    %594 = arith.mulf %586, %593 : vector<8x128xf32>
    %c0_99 = arith.constant 0 : index
    %c0_100 = arith.constant 0 : index
    %595 = vector.load %arg10[%c0_99, %c0_100] : memref<8x128xf32, #tpu.memory_space<vmem>>, vector<8x128xf32>
    tpu.vector_store %arg10[%c0_99, %c0_100], %594 {strides = array<i32>} : memref<8x128xf32, #tpu.memory_space<vmem>>, vector<8x128xf32>,
    %c0_101 = arith.constant 0 : index
    %c0_102 = arith.constant 0 : index
    %c0_103 = arith.constant 0 : index
    %596 = vector.load %arg9[%c0_101, %c0_102, %c0_103] : memref<2x8x32xf32, #tpu.memory_space<vmem>>, vector<2x8x32xf32>
    %cst_104 = arith.constant dense<0.000000e+00> : vector<2x32xf32>
    %597 = vector.multi_reduction <add>, %596, %cst_104 [1] : vector<2x8x32xf32> to vector<2x32xf32>
    %cst_105 = arith.constant 8.000000e+00 : f32
    %598 = vector.broadcast %cst_105 : f32 to vector<2x32xf32>
    %599 = arith.divf %597, %598 : vector<2x32xf32>
    %600 = arith.mulf %599, %599 : vector<2x32xf32>
    %cst_106 = arith.constant dense<0.000000e+00> : vector<2xf32>
    %601 = vector.multi_reduction <add>, %600, %cst_106 [1] : vector<2x32xf32> to vector<2xf32>
    %602 = vector.shape_cast %601 : vector<2xf32> to vector<2x1xf32>
    %cst_107 = arith.constant 1.000000e-24 : f32
    %603 = vector.broadcast %cst_107 : f32 to vector<2x1xf32>
    %604 = arith.maximumf %602, %603 : vector<2x1xf32>
    %605 = math.rsqrt %604 : vector<2x1xf32>
    %606 = vector.broadcast %605 : vector<2x1xf32> to vector<2x32xf32>
    %607 = arith.mulf %599, %606 : vector<2x32xf32>
    %c0_108 = arith.constant 0 : index
    %c0_109 = arith.constant 0 : index
    %608 = vector.load %arg11[%c0_108, %c0_109] : memref<2x32xf32, #tpu.memory_space<vmem>>, vector<2x32xf32>
    tpu.vector_store %arg11[%c0_108, %c0_109], %607 {strides = array<i32>} : memref<2x32xf32, #tpu.memory_space<vmem>>, vector<2x32xf32>,
    return
  }
}

</mosaic_0001>

<llo_original>
// kernel: crnn_word_model_forward.1
$region0: #{crnn_word_model_forward.1}
  #allocation0 [shape = 'u32[]', space=smem, size = 0x4, offset = 0x4, fixed_abs, tag = 'smem constant byte address 0x4 - core index']
  #allocation1 [shape = 'u32[144,128]{1,0:T(1,128)}', space=vmem, size = 0x12000, scoped, tag = 'internal scratch']
  %s0 = inlined_call_operand.vmem [shape: f32[128,16], index: 0, kind: input, shape index: {}]
  %s1 = inlined_call_operand.vmem [shape: bf16[48,128], index: 1, kind: input, shape index: {}]
  %s2 = inlined_call_operand.vmem [shape: f32[1,128], index: 2, kind: input, shape index: {}]
  %s3 = inlined_call_operand.vmem [shape: bf16[384,128], index: 3, kind: input, shape index: {}]
  %s4 = inlined_call_operand.vmem [shape: f32[1,128], index: 4, kind: input, shape index: {}]
  %s5 = inlined_call_operand.vmem [shape: bf16[128,384], index: 5, kind: input, shape index: {}]
  %s6 = inlined_call_operand.vmem [shape: f32[1,384], index: 6, kind: input, shape index: {}]
  %s7 = inlined_call_operand.vmem [shape: bf16[128,384], index: 7, kind: input, shape index: {}]
  %s8 = inlined_call_operand.vmem [shape: f32[1,384], index: 8, kind: input, shape index: {}]
  %s9 = inlined_call_operand.vmem [shape: f32[2,8,32], index: 9, kind: input, shape index: {}]
  %s10 = inlined_call_operand.vmem [shape: f32[8,128], index: 10, kind: output, shape index: {0}]
  %s11 = inlined_call_operand.hbm [shape: f32[2,32], index: 11, kind: output, shape index: {1}]
  %12 = xla_tuple %s10, %s11
  %s13 = sld [smem:[#allocation0]]
  $region58: #{crnn_word_model_forward.1} parent=0
    _
  %s15 = ssub.s32 1, %s13
  %s16 = scalar_select 0, %s15, %s13
  $region1: #{crnn_word_model_forward.1} parent=0
    #allocation2 [shape = 'u8[1024]{0}', space=vmem, size = 0x400, scoped, tag = 'output window, operand 1, single buffered']
    #allocation3 [shape = 's32[1]{0}', space=sflag, size = 0x4, scoped, tag = 'scoped memory for crnn_word_model_forward.1']
    %17 = vsyncpa [#allocation3], 0
    // Predicated region
    $region2: #{crnn_word_model_forward.1} parent=1 // pred_check
      _
    $region3: #{crnn_word_model_forward.1} parent=1 // pred_check_branch
      %19 = sbr.rel (0) target = $region5
    $region4: #{crnn_word_model_forward.1} parent=1 // pred_region
      _
    $region5: #{crnn_word_model_forward.1} parent=1 // pred_fallthru
      _
    // Predicated region
    $region6: #{crnn_word_model_forward.1} parent=1 // pred_check
      _
    $region7: #{crnn_word_model_forward.1} parent=1 // pred_check_branch
      %21 = sbr.rel (0) target = $region9
    $region8: #{crnn_word_model_forward.1} parent=1 // pred_region
      _
    $region9: #{crnn_word_model_forward.1} parent=1 // pred_fallthru
      _
    // Predicated region
    $region10: #{crnn_word_model_forward.1} parent=1 // pred_check
      _
    $region11: #{crnn_word_model_forward.1} parent=1 // pred_check_branch
      %23 = sbr.rel (0) target = $region13
    $region12: #{crnn_word_model_forward.1} parent=1 // pred_region
      _
    $region13: #{crnn_word_model_forward.1} parent=1 // pred_fallthru
      _
    // Predicated region
    $region14: #{crnn_word_model_forward.1} parent=1 // pred_check
      _
    $region15: #{crnn_word_model_forward.1} parent=1 // pred_check_branch
      %25 = sbr.rel (0) target = $region17
    $region16: #{crnn_word_model_forward.1} parent=1 // pred_region
      _
    $region17: #{crnn_word_model_forward.1} parent=1 // pred_fallthru
      _
    // Predicated region
    $region18: #{crnn_word_model_forward.1} parent=1 // pred_check
      _
    $region19: #{crnn_word_model_forward.1} parent=1 // pred_check_branch
      %27 = sbr.rel (0) target = $region21
    $region20: #{crnn_word_model_forward.1} parent=1 // pred_region
      _
    $region21: #{crnn_word_model_forward.1} parent=1 // pred_fallthru
      _
    // Predicated region
    $region22: #{crnn_word_model_forward.1} parent=1 // pred_check
      _
    $region23: #{crnn_word_model_forward.1} parent=1 // pred_check_branch
      %29 = sbr.rel (0) target = $region25
    $region24: #{crnn_word_model_forward.1} parent=1 // pred_region
      _
    $region25: #{crnn_word_model_forward.1} parent=1 // pred_fallthru
      _
    // Predicated region
    $region26: #{crnn_word_model_forward.1} parent=1 // pred_check
      _
    $region27: #{crnn_word_model_forward.1} parent=1 // pred_check_branch
      %31 = sbr.rel (0) target = $region29
    $region28: #{crnn_word_model_forward.1} parent=1 // pred_region
      _
    $region29: #{crnn_word_model_forward.1} parent=1 // pred_fallthru
      _
    // Predicated region
    $region30: #{crnn_word_model_forward.1} parent=1 // pred_check
      _
    $region31: #{crnn_word_model_forward.1} parent=1 // pred_check_branch
      %33 = sbr.rel (0) target = $region33
    $region32: #{crnn_word_model_forward.1} parent=1 // pred_region
      _
    $region33: #{crnn_word_model_forward.1} parent=1 // pred_fallthru
      _
    // Predicated region
    $region34: #{crnn_word_model_forward.1} parent=1 // pred_check
      _
    $region35: #{crnn_word_model_forward.1} parent=1 // pred_check_branch
      %35 = sbr.rel (0) target = $region37
    $region36: #{crnn_word_model_forward.1} parent=1 // pred_region
      _
    $region37: #{crnn_word_model_forward.1} parent=1 // pred_fallthru
      _
    // Predicated region
    $region38: #{crnn_word_model_forward.1} parent=1 // pred_check
      _
    $region39: #{crnn_word_model_forward.1} parent=1 // pred_check_branch
      %37 = sbr.rel (0) target = $region41
    $region40: #{crnn_word_model_forward.1} parent=1 // pred_region
      _
    $region41: #{crnn_word_model_forward.1} parent=1 // pred_fallthru
      _
    %v39 = vld [vmem:[%s0] sm:$0xff]
    %v40 = vld [vmem:[%s0 + $0x8] sm:$0xff]
    %v41 = vld [vmem:[%s0 + $0x10] sm:$0xff]
    %v42 = vld [vmem:[%s0 + $0x18] sm:$0xff]
    %v43 = vld [vmem:[%s0 + $0x20] sm:$0xff]
    %v44 = vld [vmem:[%s0 + $0x28] sm:$0xff]
    %v45 = vld [vmem:[%s0 + $0x30] sm:$0xff]
    %v46 = vld [vmem:[%s0 + $0x38] sm:$0xff]
    %v47 = vld [vmem:[%s0 + $0x40] sm:$0xff]
    %v48 = vld [vmem:[%s0 + $0x48] sm:$0xff]
    %v49 = vld [vmem:[%s0 + $0x50] sm:$0xff]
    %v50 = vld [vmem:[%s0 + $0x58] sm:$0xff]
    %v51 = vld [vmem:[%s0 + $0x60] sm:$0xff]
    %v52 = vld [vmem:[%s0 + $0x68] sm:$0xff]
    %v53 = vld [vmem:[%s0 + $0x70] sm:$0xff]
    %v54 = vld [vmem:[%s0 + $0x78] sm:$0xff]
    %71 = vrot.lane.b32.xlu0 %v39, 16
    %v72 = vpop.permute.xlu0 %71
    %73 = vrot.lane.b32.xlu0 %v40, 16
    %v74 = vpop.permute.xlu0 %73
    %75 = vrot.lane.b32.xlu0 %v41, 16
    %v76 = vpop.permute.xlu0 %75
    %77 = vrot.lane.b32.xlu0 %v42, 16
    %v78 = vpop.permute.xlu0 %77
    %79 = vrot.lane.b32.xlu0 %v43, 16
    %v80 = vpop.permute.xlu0 %79
    %81 = vrot.lane.b32.xlu0 %v44, 16
    %v82 = vpop.permute.xlu0 %81
    %83 = vrot.lane.b32.xlu0 %v45, 16
    %v84 = vpop.permute.xlu0 %83
    %85 = vrot.lane.b32.xlu0 %v46, 16
    %v86 = vpop.permute.xlu0 %85
    %87 = vrot.lane.b32.xlu0 %v47, 16
    %v88 = vpop.permute.xlu0 %87
    %89 = vrot.lane.b32.xlu0 %v48, 16
    %v90 = vpop.permute.xlu0 %89
    %91 = vrot.lane.b32.xlu0 %v49, 16
    %v92 = vpop.permute.xlu0 %91
    %93 = vrot.lane.b32.xlu0 %v50, 16
    %v94 = vpop.permute.xlu0 %93
    %95 = vrot.lane.b32.xlu0 %v51, 16
    %v96 = vpop.permute.xlu0 %95
    %97 = vrot.lane.b32.xlu0 %v52, 16
    %v98 = vpop.permute.xlu0 %97
    %99 = vrot.lane.b32.xlu0 %v53, 16
    %v100 = vpop.permute.xlu0 %99
    %101 = vrot.lane.b32.xlu0 %v54, 16
    %v102 = vpop.permute.xlu0 %101
    %120 = vrot.lane.b32.xlu0 %v40, 32
    %v121 = vpop.permute.xlu0 %120
    %122 = vrot.lane.b32.xlu0 %v41, 32
    %v123 = vpop.permute.xlu0 %122
    %124 = vrot.lane.b32.xlu0 %v42, 32
    %v125 = vpop.permute.xlu0 %124
    %126 = vrot.lane.b32.xlu0 %v43, 32
    %v127 = vpop.permute.xlu0 %126
    %128 = vrot.lane.b32.xlu0 %v44, 32
    %v129 = vpop.permute.xlu0 %128
    %130 = vrot.lane.b32.xlu0 %v45, 32
    %v131 = vpop.permute.xlu0 %130
    %132 = vrot.lane.b32.xlu0 %v46, 32
    %v133 = vpop.permute.xlu0 %132
    %134 = vrot.lane.b32.xlu0 %v47, 32
    %v135 = vpop.permute.xlu0 %134
    %136 = vrot.lane.b32.xlu0 %v48, 32
    %v137 = vpop.permute.xlu0 %136
    %138 = vrot.lane.b32.xlu0 %v49, 32
    %v139 = vpop.permute.xlu0 %138
    %140 = vrot.lane.b32.xlu0 %v50, 32
    %v141 = vpop.permute.xlu0 %140
    %142 = vrot.lane.b32.xlu0 %v51, 32
    %v143 = vpop.permute.xlu0 %142
    %144 = vrot.lane.b32.xlu0 %v52, 32
    %v145 = vpop.permute.xlu0 %144
    %146 = vrot.lane.b32.xlu0 %v53, 32
    %v147 = vpop.permute.xlu0 %146
    %148 = vrot.lane.b32.xlu0 %v54, 32
    %v149 = vpop.permute.xlu0 %148
    %150 = vrot.lane.b32.xlu0 0.0, 32
    %v151 = vpop.permute.xlu0 %150
    %vm168 = vcmask 130048
    %v169 = vsel %vm168, 0.0, %v72
    %v170 = vsel %vm168, %v39, %v74
    %v171 = vsel %vm168, %v40, %v76
    %v172 = vsel %vm168, %v41, %v78
    %v173 = vsel %vm168, %v42, %v80
    %v174 = vsel %vm168, %v43, %v82
    %v175 = vsel %vm168, %v44, %v84
    %v176 = vsel %vm168, %v45, %v86
    %v177 = vsel %vm168, %v46, %v88
    %v178 = vsel %vm168, %v47, %v90
    %v179 = vsel %vm168, %v48, %v92
    %v180 = vsel %vm168, %v49, %v94
    %v181 = vsel %vm168, %v50, %v96
    %v182 = vsel %vm168, %v51, %v98
    %v183 = vsel %vm168, %v52, %v100
    %v184 = vsel %vm168, %v53, %v102
    %vm185 = vcmask 261120
    %v186 = vsel %vm185, %v169, %v121
    %v187 = vsel %vm185, %v170, %v123
    %v188 = vsel %vm185, %v171, %v125
    %v189 = vsel %vm185, %v172, %v127
    %v190 = vsel %vm185, %v173, %v129
    %v191 = vsel %vm185, %v174, %v131
    %v192 = vsel %vm185, %v175, %v133
    %v193 = vsel %vm185, %v176, %v135
    %v194 = vsel %vm185, %v177, %v137
    %v195 = vsel %vm185, %v178, %v139
    %v196 = vsel %vm185, %v179, %v141
    %v197 = vsel %vm185, %v180, %v143
    %v198 = vsel %vm185, %v181, %v145
    %v199 = vsel %vm185, %v182, %v147
    %v200 = vsel %vm185, %v183, %v149
    %v201 = vsel %vm185, %v184, %v151
    %v202 = vpack.c.bf16 %v187, %v186
    %v203 = vpack.c.bf16 %v189, %v188
    %v204 = vpack.c.bf16 %v191, %v190
    %v205 = vpack.c.bf16 %v193, %v192
    %v206 = vpack.c.bf16 %v195, %v194
    %v207 = vpack.c.bf16 %v197, %v196
    %v208 = vpack.c.bf16 %v199, %v198
    %v209 = vpack.c.bf16 %v201, %v200
    %v210 = vld [vmem:[%s1] sm:$0xf]
    %v211 = vld [vmem:[%s1 + $0x4] sm:$0xf]
    %v212 = vld [vmem:[%s1 + $0x8] sm:$0xf]
    %v213 = vld [vmem:[%s1 + $0xc] sm:$0xf]
    %v214 = vld [vmem:[%s1 + $0x10] sm:$0xf]
    %v215 = vld [vmem:[%s1 + $0x14] sm:$0xf]
    %v216 = vld [vmem:[%s2] sm:$0x1]
    %v218 = vlaneseq
    %v219 = vshrl.u32 %v218, 7
    %v220 = vsub.s32 0, %v219
    %v221 = vrot.slane %v216, %v220
    %v229 = vunpack.c.l.b16 %v210
    %v230 = vunpack.c.l.b16 %v211
    %v231 = vunpack.c.l.b16 %v212
    %v232 = vunpack.c.l.b16 %v213
    %v233 = vunpack.c.l.b16 %v214
    %v234 = vunpack.c.l.b16 %v215
    %v235 = vpack.c.b16 %v230, %v229
    %v236 = vpack.c.b16 %v232, %v231
    %v237 = vpack.c.b16 %v234, %v233
    %vm241 = vcmask 392192
    %v243 = vsel %vm241, %v202, 0
    %v246 = vsel %vm241, %v203, 0
    %v249 = vsel %vm241, %v204, 0
    %v252 = vsel %vm241, %v205, 0
    %v255 = vsel %vm241, %v206, 0
    %v258 = vsel %vm241, %v207, 0
    %v261 = vsel %vm241, %v208, 0
    %v264 = vsel %vm241, %v209, 0
    %266 = vmatprep.subr.bf16.mxu0 0
    %267 = vmatpush1.bf16.msra.mxu0 %v235
    %268 = vmatprep.subr.bf16.mxu0 0
    %269 = vmatpush1.bf16.msra.mxu0 %v236
    %270 = vmatprep.subr.bf16.mxu0 0
    %271 = vmatpush1.bf16.msra.mxu0 %v237
    %272 = vmatprep.subr.bf16.mxu0 0
    %273 = vmatpush1.bf16.msra.mxu0 0
    %274 = vmatprep.subr.bf16.mxu0 0
    %275 = vmatpush1.bf16.msra.mxu0 0
    %276 = vmatprep.subr.bf16.mxu0 0
    %277 = vmatpush1.bf16.msra.mxu0 0
    %278 = vmatprep.subr.bf16.mxu0 0
    %279 = vmatpush1.bf16.msra.mxu0 0
    %280 = vmatprep.subr.bf16.mxu0 0
    %281 = vmatpush1.bf16.msra.mxu0 0
    %282 = vmatprep.subr.bf16.mxu0 0
    %283 = vmatpush1.bf16.msra.mxu0 0
    %284 = vmatprep.subr.bf16.mxu0 0
    %285 = vmatpush1.bf16.msra.mxu0 0
    %286 = vmatprep.subr.bf16.mxu0 0
    %287 = vmatpush1.bf16.msra.mxu0 0
    %288 = vmatprep.subr.bf16.mxu0 0
    %289 = vmatpush1.bf16.msra.mxu0 0
    %290 = vmatprep.subr.bf16.mxu0 0
    %291 = vmatpush1.bf16.msra.mxu0 0
    %292 = vmatprep.subr.bf16.mxu0 0
    %293 = vmatpush1.bf16.msra.mxu0 0
    %294 = vmatprep.subr.bf16.mxu0 0
    %295 = vmatpush1.bf16.msra.mxu0 0
    %296 = vmatprep.subr.bf16.mxu0 0
    %297 = vmatpush1.bf16.msra.mxu0 0
    %298 = vmatprep.mubr.bf16.mxu0 0
    %299 = vmatmul.mubr.bf16.gmra.mrb[0].mxu0 %v243
    %v300 = vpop.f32.mrb[0].mxu0
    %v301 = vadd.f32 %v221, %v300
    %v302 = vpop.f32.mrb[0].mxu0
    %v303 = vpop.f32.mrb[0].mxu0
    %v304 = vadd.f32 %v221, %v303
    %v305 = vpop.f32.mrb[0].mxu0
    %306 = vmatprep.mubr.bf16.mxu0 0
    %307 = vmatmul.mubr.bf16.gmra.mrb[0].mxu0 %v246
    %v308 = vpop.f32.mrb[0].mxu0
    %v309 = vadd.f32 %v221, %v308
    %v310 = vpop.f32.mrb[0].mxu0
    %v311 = vpop.f32.mrb[0].mxu0
    %v312 = vadd.f32 %v221, %v311
    %v313 = vpop.f32.mrb[0].mxu0
    %314 = vmatprep.mubr.bf16.mxu0 0
    %315 = vmatmul.mubr.bf16.gmra.mrb[0].mxu0 %v249
    %v316 = vpop.f32.mrb[0].mxu0
    %v317 = vadd.f32 %v221, %v316
    %v318 = vpop.f32.mrb[0].mxu0
    %v319 = vpop.f32.mrb[0].mxu0
    %v320 = vadd.f32 %v221, %v319
    %v321 = vpop.f32.mrb[0].mxu0
    %322 = vmatprep.mubr.bf16.mxu0 0
    %323 = vmatmul.mubr.bf16.gmra.mrb[0].mxu0 %v252
    %v324 = vpop.f32.mrb[0].mxu0
    %v325 = vadd.f32 %v221, %v324
    %v326 = vpop.f32.mrb[0].mxu0
    %v327 = vpop.f32.mrb[0].mxu0
    %v328 = vadd.f32 %v221, %v327
    %v329 = vpop.f32.mrb[0].mxu0
    %330 = vmatprep.mubr.bf16.mxu0 0
    %331 = vmatmul.mubr.bf16.gmra.mrb[0].mxu0 %v255
    %v332 = vpop.f32.mrb[0].mxu0
    %v333 = vadd.f32 %v221, %v332
    %v334 = vpop.f32.mrb[0].mxu0
    %v335 = vpop.f32.mrb[0].mxu0
    %v336 = vadd.f32 %v221, %v335
    %v337 = vpop.f32.mrb[0].mxu0
    %338 = vmatprep.mubr.bf16.mxu0 0
    %339 = vmatmul.mubr.bf16.gmra.mrb[0].mxu0 %v258
    %v340 = vpop.f32.mrb[0].mxu0
    %v341 = vadd.f32 %v221, %v340
    %v342 = vpop.f32.mrb[0].mxu0
    %v343 = vpop.f32.mrb[0].mxu0
    %v344 = vadd.f32 %v221, %v343
    %v345 = vpop.f32.mrb[0].mxu0
    %346 = vmatprep.mubr.bf16.mxu0 0
    %347 = vmatmul.mubr.bf16.gmra.mrb[0].mxu0 %v261
    %v348 = vpop.f32.mrb[0].mxu0
    %v349 = vadd.f32 %v221, %v348
    %v350 = vpop.f32.mrb[0].mxu0
    %v351 = vpop.f32.mrb[0].mxu0
    %v352 = vadd.f32 %v221, %v351
    %v353 = vpop.f32.mrb[0].mxu0
    %354 = vmatprep.mubr.bf16.mxu0 0
    %355 = vmatmul.mubr.bf16.gmra.mrb[0].mxu0 %v264
    %v356 = vpop.f32.mrb[0].mxu0
    %v357 = vadd.f32 %v221, %v356
    %v358 = vpop.f32.mrb[0].mxu0
    %v359 = vpop.f32.mrb[0].mxu0
    %v360 = vadd.f32 %v221, %v359
    %v361 = vpop.f32.mrb[0].mxu0
    %362 = vdwg.mxu0
    %v363 = vmax.f32 %v301, 0.0
    %v364 = vmax.f32 %v304, 0.0
    %v365 = vmax.f32 %v309, 0.0
    %v366 = vmax.f32 %v312, 0.0
    %v367 = vmax.f32 %v317, 0.0
    %v368 = vmax.f32 %v320, 0.0
    %v369 = vmax.f32 %v325, 0.0
    %v370 = vmax.f32 %v328, 0.0
    %v371 = vmax.f32 %v333, 0.0
    %v372 = vmax.f32 %v336, 0.0
    %v373 = vmax.f32 %v341, 0.0
    %v374 = vmax.f32 %v344, 0.0
    %v375 = vmax.f32 %v349, 0.0
    %v376 = vmax.f32 %v352, 0.0
    %v377 = vmax.f32 %v357, 0.0
    %v378 = vmax.f32 %v360, 0.0
    %395 = vrot.lane.b32.xlu0 %v363, 127
    %v396 = vpop.permute.xlu0 %395
    %397 = vrot.lane.b32.xlu0 %v364, 127
    %v398 = vpop.permute.xlu0 %397
    %399 = vrot.lane.b32.xlu0 %v365, 127
    %v400 = vpop.permute.xlu0 %399
    %401 = vrot.lane.b32.xlu0 %v366, 127
    %v402 = vpop.permute.xlu0 %401
    %403 = vrot.lane.b32.xlu0 %v367, 127
    %v404 = vpop.permute.xlu0 %403
    %405 = vrot.lane.b32.xlu0 %v368, 127
    %v406 = vpop.permute.xlu0 %405
    %407 = vrot.lane.b32.xlu0 %v369, 127
    %v408 = vpop.permute.xlu0 %407
    %409 = vrot.lane.b32.xlu0 %v370, 127
    %v410 = vpop.permute.xlu0 %409
    %411 = vrot.lane.b32.xlu0 %v371, 127
    %v412 = vpop.permute.xlu0 %411
    %413 = vrot.lane.b32.xlu0 %v372, 127
    %v414 = vpop.permute.xlu0 %413
    %415 = vrot.lane.b32.xlu0 %v373, 127
    %v416 = vpop.permute.xlu0 %415
    %417 = vrot.lane.b32.xlu0 %v374, 127
    %v418 = vpop.permute.xlu0 %417
    %419 = vrot.lane.b32.xlu0 %v375, 127
    %v420 = vpop.permute.xlu0 %419
    %421 = vrot.lane.b32.xlu0 %v376, 127
    %v422 = vpop.permute.xlu0 %421
    %423 = vrot.lane.b32.xlu0 %v377, 127
    %v424 = vpop.permute.xlu0 %423
    %425 = vrot.lane.b32.xlu0 %v378, 127
    %v426 = vpop.permute.xlu0 %425
    %vm443 = vcmask 1039360
    %v444 = vsel %vm443, %v396, 0.0
    %v445 = vsel %vm443, %v398, 0.0
    %v446 = vsel %vm443, %v400, 0.0
    %v447 = vsel %vm443, %v402, 0.0
    %v448 = vsel %vm443, %v404, 0.0
    %v449 = vsel %vm443, %v406, 0.0
    %v450 = vsel %vm443, %v408, 0.0
    %v451 = vsel %vm443, %v410, 0.0
    %v452 = vsel %vm443, %v412, 0.0
    %v453 = vsel %vm443, %v414, 0.0
    %v454 = vsel %vm443, %v416, 0.0
    %v455 = vsel %vm443, %v418, 0.0
    %v456 = vsel %vm443, %v420, 0.0
    %v457 = vsel %vm443, %v422, 0.0
    %v458 = vsel %vm443, %v424, 0.0
    %v459 = vsel %vm443, %v426, 0.0
    %v460 = vmax.f32 %v363, %v444
    %v461 = vmax.f32 %v364, %v445
    %v462 = vmax.f32 %v365, %v446
    %v463 = vmax.f32 %v366, %v447
    %v464 = vmax.f32 %v367, %v448
    %v465 = vmax.f32 %v368, %v449
    %v466 = vmax.f32 %v369, %v450
    %v467 = vmax.f32 %v370, %v451
    %v468 = vmax.f32 %v371, %v452
    %v469 = vmax.f32 %v372, %v453
    %v470 = vmax.f32 %v373, %v454
    %v471 = vmax.f32 %v374, %v455
    %v472 = vmax.f32 %v375, %v456
    %v473 = vmax.f32 %v376, %v457
    %v474 = vmax.f32 %v377, %v458
    %v475 = vmax.f32 %v378, %v459
    %v476 = vpack.c.bf16 %v460, 0.0
    %v477 = vpack.c.bf16 %v461, %v460
    %v478 = vpack.c.bf16 %v462, %v461
    %v479 = vpack.c.bf16 %v463, %v462
    %v480 = vpack.c.bf16 %v464, %v463
    %v481 = vpack.c.bf16 %v465, %v464
    %v482 = vpack.c.bf16 %v466, %v465
    %v483 = vpack.c.bf16 %v467, %v466
    %v484 = vpack.c.bf16 %v468, %v467
    %v485 = vpack.c.bf16 %v469, %v468
    %v486 = vpack.c.bf16 %v470, %v469
    %v487 = vpack.c.bf16 %v471, %v470
    %v488 = vpack.c.bf16 %v472, %v471
    %v489 = vpack.c.bf16 %v473, %v472
    %v490 = vpack.c.bf16 %v474, %v473
    %v491 = vpack.c.bf16 %v475, %v474
    %v492 = vpack.c.bf16 0.0, %v475
    %v493 = vld [vmem:[%s3] sm:$0xf]
    %v494 = vld [vmem:[%s3 + $0x4] sm:$0xf]
    %v495 = vld [vmem:[%s3 + $0x8] sm:$0xf]
    %v496 = vld [vmem:[%s3 + $0xc] sm:$0xf]
    %v497 = vld [vmem:[%s3 + $0x10] sm:$0xf]
    %v498 = vld [vmem:[%s3 + $0x14] sm:$0xf]
    %v499 = vld [vmem:[%s3 + $0x18] sm:$0xf]
    %v500 = vld [vmem:[%s3 + $0x1c] sm:$0xf]
    %v501 = vld [vmem:[%s3 + $0x20] sm:$0xf]
    %v502 = vld [vmem:[%s3 + $0x24] sm:$0xf]
    %v503 = vld [vmem:[%s3 + $0x28] sm:$0xf]
    %v504 = vld [vmem:[%s3 + $0x2c] sm:$0xf]
    %v505 = vld [vmem:[%s3 + $0x30] sm:$0xf]
    %v506 = vld [vmem:[%s3 + $0x34] sm:$0xf]
    %v507 = vld [vmem:[%s3 + $0x38] sm:$0xf]
    %v508 = vld [vmem:[%s3 + $0x3c] sm:$0xf]
    %v509 = vld [vmem:[%s3 + $0x40] sm:$0xf]
    %v510 = vld [vmem:[%s3 + $0x44] sm:$0xf]
    %v511 = vld [vmem:[%s3 + $0x48] sm:$0xf]
    %v512 = vld [vmem:[%s3 + $0x4c] sm:$0xf]
    %v513 = vld [vmem:[%s3 + $0x50] sm:$0xf]
    %v514 = vld [vmem:[%s3 + $0x54] sm:$0xf]
    %v515 = vld [vmem:[%s3 + $0x58] sm:$0xf]
    %v516 = vld [vmem:[%s3 + $0x5c] sm:$0xf]
    %v517 = vld [vmem:[%s3 + $0x60] sm:$0xf]
    %v518 = vld [vmem:[%s3 + $0x64] sm:$0xf]
    %v519 = vld [vmem:[%s3 + $0x68] sm:$0xf]
    %v520 = vld [vmem:[%s3 + $0x6c] sm:$0xf]
    %v521 = vld [vmem:[%s3 + $0x70] sm:$0xf]
    %v522 = vld [vmem:[%s3 + $0x74] sm:$0xf]
    %v523 = vld [vmem:[%s3 + $0x78] sm:$0xf]
    %v524 = vld [vmem:[%s3 + $0x7c] sm:$0xf]
    %v525 = vld [vmem:[%s3 + $0x80] sm:$0xf]
    %v526 = vld [vmem:[%s3 + $0x84] sm:$0xf]
    %v527 = vld [vmem:[%s3 + $0x88] sm:$0xf]
    %v528 = vld [vmem:[%s3 + $0x8c] sm:$0xf]
    %v529 = vld [vmem:[%s3 + $0x90] sm:$0xf]
    %v530 = vld [vmem:[%s3 + $0x94] sm:$0xf]
    %v531 = vld [vmem:[%s3 + $0x98] sm:$0xf]
    %v532 = vld [vmem:[%s3 + $0x9c] sm:$0xf]
    %v533 = vld [vmem:[%s3 + $0xa0] sm:$0xf]
    %v534 = vld [vmem:[%s3 + $0xa4] sm:$0xf]
    %v535 = vld [vmem:[%s3 + $0xa8] sm:$0xf]
    %v536 = vld [vmem:[%s3 + $0xac] sm:$0xf]
    %v537 = vld [vmem:[%s3 + $0xb0] sm:$0xf]
    %v538 = vld [vmem:[%s3 + $0xb4] sm:$0xf]
    %v539 = vld [vmem:[%s3 + $0xb8] sm:$0xf]
    %v540 = vld [vmem:[%s3 + $0xbc] sm:$0xf]
    %v541 = vld [vmem:[%s4] sm:$0x1]
    %v543 = vlaneseq
    %v544 = vshrl.u32 %v543, 7
    %v545 = vsub.s32 0, %v544
    %v546 = vrot.slane %v541, %v545
    %v596 = vunpack.c.l.b16 %v493
    %v597 = vunpack.c.l.b16 %v494
    %v598 = vunpack.c.l.b16 %v495
    %v599 = vunpack.c.l.b16 %v496
    %v600 = vunpack.c.l.b16 %v497
    %v601 = vunpack.c.l.b16 %v498
    %v602 = vunpack.c.l.b16 %v499
    %v603 = vunpack.c.l.b16 %v500
    %v604 = vunpack.c.l.b16 %v501
    %v605 = vunpack.c.l.b16 %v502
    %v606 = vunpack.c.l.b16 %v503
    %v607 = vunpack.c.l.b16 %v504
    %v608 = vunpack.c.l.b16 %v505
    %v609 = vunpack.c.l.b16 %v506
    %v610 = vunpack.c.l.b16 %v507
    %v611 = vunpack.c.l.b16 %v508
    %v612 = vunpack.c.l.b16 %v509
    %v613 = vunpack.c.l.b16 %v510
    %v614 = vunpack.c.l.b16 %v511
    %v615 = vunpack.c.l.b16 %v512
    %v616 = vunpack.c.l.b16 %v513
    %v617 = vunpack.c.l.b16 %v514
    %v618 = vunpack.c.l.b16 %v515
    %v619 = vunpack.c.l.b16 %v516
    %v620 = vunpack.c.l.b16 %v517
    %v621 = vunpack.c.l.b16 %v518
    %v622 = vunpack.c.l.b16 %v519
    %v623 = vunpack.c.l.b16 %v520
    %v624 = vunpack.c.l.b16 %v521
    %v625 = vunpack.c.l.b16 %v522
    %v626 = vunpack.c.l.b16 %v523
    %v627 = vunpack.c.l.b16 %v524
    %v628 = vunpack.c.l.b16 %v525
    %v629 = vunpack.c.l.b16 %v526
    %v630 = vunpack.c.l.b16 %v527
    %v631 = vunpack.c.l.b16 %v528
    %v632 = vunpack.c.l.b16 %v529
    %v633 = vunpack.c.l.b16 %v530
    %v634 = vunpack.c.l.b16 %v531
    %v635 = vunpack.c.l.b16 %v532
    %v636 = vunpack.c.l.b16 %v533
    %v637 = vunpack.c.l.b16 %v534
    %v638 = vunpack.c.l.b16 %v535
    %v639 = vunpack.c.l.b16 %v536
    %v640 = vunpack.c.l.b16 %v537
    %v641 = vunpack.c.l.b16 %v538
    %v642 = vunpack.c.l.b16 %v539
    %v643 = vunpack.c.l.b16 %v540
    %v644 = vpack.c.b16 %v597, %v596
    %v645 = vpack.c.b16 %v599, %v598
    %v646 = vpack.c.b16 %v601, %v600
    %v647 = vpack.c.b16 %v603, %v602
    %v648 = vpack.c.b16 %v605, %v604
    %v649 = vpack.c.b16 %v607, %v606
    %v650 = vpack.c.b16 %v609, %v608
    %v651 = vpack.c.b16 %v611, %v610
    %v652 = vpack.c.b16 %v613, %v612
    %v653 = vpack.c.b16 %v615, %v614
    %v654 = vpack.c.b16 %v617, %v616
    %v655 = vpack.c.b16 %v619, %v618
    %v656 = vpack.c.b16 %v621, %v620
    %v657 = vpack.c.b16 %v623, %v622
    %v658 = vpack.c.b16 %v625, %v624
    %v659 = vpack.c.b16 %v627, %v626
    %v660 = vpack.c.b16 %v629, %v628
    %v661 = vpack.c.b16 %v631, %v630
    %v662 = vpack.c.b16 %v633, %v632
    %v663 = vpack.c.b16 %v635, %v634
    %v664 = vpack.c.b16 %v637, %v636
    %v665 = vpack.c.b16 %v639, %v638
    %v666 = vpack.c.b16 %v641, %v640
    %v667 = vpack.c.b16 %v643, %v642
    %692 = vmatprep.subr.bf16.mxu0 0
    %693 = vmatpush1.bf16.msra.mxu0 %v644
    %694 = vmatprep.subr.bf16.mxu0 0
    %695 = vmatpush1.bf16.msra.mxu0 %v645
    %696 = vmatprep.subr.bf16.mxu0 0
    %697 = vmatpush1.bf16.msra.mxu0 %v646
    %698 = vmatprep.subr.bf16.mxu0 0
    %699 = vmatpush1.bf16.msra.mxu0 %v647
    %700 = vmatprep.subr.bf16.mxu0 0
    %701 = vmatpush1.bf16.msra.mxu0 %v648
    %702 = vmatprep.subr.bf16.mxu0 0
    %703 = vmatpush1.bf16.msra.mxu0 %v649
    %704 = vmatprep.subr.bf16.mxu0 0
    %705 = vmatpush1.bf16.msra.mxu0 %v650
    %706 = vmatprep.subr.bf16.mxu0 0
    %707 = vmatpush1.bf16.msra.mxu0 %v651
    %708 = vmatprep.subr.bf16.mxu0 0
    %709 = vmatpush1.bf16.msra.mxu0 %v652
    %710 = vmatprep.subr.bf16.mxu0 0
    %711 = vmatpush1.bf16.msra.mxu0 %v653
    %712 = vmatprep.subr.bf16.mxu0 0
    %713 = vmatpush1.bf16.msra.mxu0 %v654
    %714 = vmatprep.subr.bf16.mxu0 0
    %715 = vmatpush1.bf16.msra.mxu0 %v655
    %716 = vmatprep.subr.bf16.mxu0 0
    %717 = vmatpush1.bf16.msra.mxu0 %v656
    %718 = vmatprep.subr.bf16.mxu0 0
    %719 = vmatpush1.bf16.msra.mxu0 %v657
    %720 = vmatprep.subr.bf16.mxu0 0
    %721 = vmatpush1.bf16.msra.mxu0 %v658
    %722 = vmatprep.subr.bf16.mxu0 0
    %723 = vmatpush1.bf16.msra.mxu0 %v659
    %724 = vmatprep.mubr.bf16.mxu0 %v477
    %725 = vmatmul.mubr.bf16.gmra.mrb[0].mxu0 %v476
    %v726 = vpop.f32.mrb[0].mxu0
    %v727 = vadd.f32 %v546, %v726
    %v728 = vpop.f32.mrb[0].mxu0
    %v729 = vpop.f32.mrb[0].mxu0
    %v730 = vadd.f32 %v546, %v729
    %v731 = vpop.f32.mrb[0].mxu0
    %732 = vmatprep.mubr.bf16.mxu0 %v479
    %733 = vmatmul.mubr.bf16.gmra.mrb[0].mxu0 %v478
    %v734 = vpop.f32.mrb[0].mxu0
    %v735 = vadd.f32 %v546, %v734
    %v736 = vpop.f32.mrb[0].mxu0
    %v737 = vpop.f32.mrb[0].mxu0
    %v738 = vadd.f32 %v546, %v737
    %v739 = vpop.f32.mrb[0].mxu0
    %740 = vmatprep.mubr.bf16.mxu0 %v481
    %741 = vmatmul.mubr.bf16.gmra.mrb[0].mxu0 %v480
    %v742 = vpop.f32.mrb[0].mxu0
    %v743 = vadd.f32 %v546, %v742
    %v744 = vpop.f32.mrb[0].mxu0
    %v745 = vpop.f32.mrb[0].mxu0
    %v746 = vadd.f32 %v546, %v745
    %v747 = vpop.f32.mrb[0].mxu0
    %748 = vmatprep.mubr.bf16.mxu0 %v483
    %749 = vmatmul.mubr.bf16.gmra.mrb[0].mxu0 %v482
    %v750 = vpop.f32.mrb[0].mxu0
    %v751 = vadd.f32 %v546, %v750
    %v752 = vpop.f32.mrb[0].mxu0
    %v753 = vpop.f32.mrb[0].mxu0
    %v754 = vadd.f32 %v546, %v753
    %v755 = vpop.f32.mrb[0].mxu0
    %756 = vmatprep.mubr.bf16.mxu0 %v485
    %757 = vmatmul.mubr.bf16.gmra.mrb[0].mxu0 %v484
    %v758 = vpop.f32.mrb[0].mxu0
    %v759 = vadd.f32 %v546, %v758
    %v760 = vpop.f32.mrb[0].mxu0
    %v761 = vpop.f32.mrb[0].mxu0
    %v762 = vadd.f32 %v546, %v761
    %v763 = vpop.f32.mrb[0].mxu0
    %764 = vmatprep.mubr.bf16.mxu0 %v487
    %765 = vmatmul.mubr.bf16.gmra.mrb[0].mxu0 %v486
    %v766 = vpop.f32.mrb[0].mxu0
    %v767 = vadd.f32 %v546, %v766
    %v768 = vpop.f32.mrb[0].mxu0
    %v769 = vpop.f32.mrb[0].mxu0
    %v770 = vadd.f32 %v546, %v769
    %v771 = vpop.f32.mrb[0].mxu0
    %772 = vmatprep.mubr.bf16.mxu0 %v489
    %773 = vmatmul.mubr.bf16.gmra.mrb[0].mxu0 %v488
    %v774 = vpop.f32.mrb[0].mxu0
    %v775 = vadd.f32 %v546, %v774
    %v776 = vpop.f32.mrb[0].mxu0
    %v777 = vpop.f32.mrb[0].mxu0
    %v778 = vadd.f32 %v546, %v777
    %v779 = vpop.f32.mrb[0].mxu0
    %780 = vmatprep.mubr.bf16.mxu0 %v491
    %781 = vmatmul.mubr.bf16.gmra.mrb[0].mxu0 %v490
    %v782 = vpop.f32.mrb[0].mxu0
    %v783 = vadd.f32 %v546, %v782
    %v784 = vpop.f32.mrb[0].mxu0
    %v785 = vpop.f32.mrb[0].mxu0
    %v786 = vadd.f32 %v546, %v785
    %v787 = vpop.f32.mrb[0].mxu0
    %788 = vdwg.mxu0
    %789 = vmatprep.subr.bf16.mxu0 0
    %790 = vmatpush1.bf16.msra.mxu0 %v660
    %791 = vmatprep.subr.bf16.mxu0 0
    %792 = vmatpush1.bf16.msra.mxu0 %v661
    %793 = vmatprep.subr.bf16.mxu0 0
    %794 = vmatpush1.bf16.msra.mxu0 %v662
    %795 = vmatprep.subr.bf16.mxu0 0
    %796 = vmatpush1.bf16.msra.mxu0 %v663
    %797 = vmatprep.subr.bf16.mxu0 0
    %798 = vmatpush1.bf16.msra.mxu0 %v664
    %799 = vmatprep.subr.bf16.mxu0 0
    %800 = vmatpush1.bf16.msra.mxu0 %v665
    %801 = vmatprep.subr.bf16.mxu0 0
    %802 = vmatpush1.bf16.msra.mxu0 %v666
    %803 = vmatprep.subr.bf16.mxu0 0
    %804 = vmatpush1.bf16.msra.mxu0 %v667
    %805 = vmatprep.subr.bf16.mxu0 0
    %806 = vmatpush1.bf16.msra.mxu0 0
    %807 = vmatprep.subr.bf16.mxu0 0
    %808 = vmatpush1.bf16.msra.mxu0 0
    %809 = vmatprep.subr.bf16.mxu0 0
    %810 = vmatpush1.bf16.msra.mxu0 0
    %811 = vmatprep.subr.bf16.mxu0 0
    %812 = vmatpush1.bf16.msra.mxu0 0
    %813 = vmatprep.subr.bf16.mxu0 0
    %814 = vmatpush1.bf16.msra.mxu0 0
    %815 = vmatprep.subr.bf16.mxu0 0
    %816 = vmatpush1.bf16.msra.mxu0 0
    %817 = vmatprep.subr.bf16.mxu0 0
    %818 = vmatpush1.bf16.msra.mxu0 0
    %819 = vmatprep.subr.bf16.mxu0 0
    %820 = vmatpush1.bf16.msra.mxu0 0
    %821 = vmatprep.mubr.bf16.mxu0 0
    %822 = vmatmul.mubr.bf16.gmra.mrb[0].mxu0 %v478
    %v823 = vpop.f32.mrb[0].mxu0
    %v824 = vadd.f32 %v727, %v823
    %v825 = vpop.f32.mrb[0].mxu0
    %v826 = vpop.f32.mrb[0].mxu0
    %v827 = vadd.f32 %v730, %v826
    %v828 = vpop.f32.mrb[0].mxu0
    %829 = vmatprep.mubr.bf16.mxu0 0
    %830 = vmatmul.mubr.bf16.gmra.mrb[0].mxu0 %v480
    %v831 = vpop.f32.mrb[0].mxu0
    %v832 = vadd.f32 %v735, %v831
    %v833 = vpop.f32.mrb[0].mxu0
    %v834 = vpop.f32.mrb[0].mxu0
    %v835 = vadd.f32 %v738, %v834
    %v836 = vpop.f32.mrb[0].mxu0
    %837 = vmatprep.mubr.bf16.mxu0 0
    %838 = vmatmul.mubr.bf16.gmra.mrb[0].mxu0 %v482
    %v839 = vpop.f32.mrb[0].mxu0
    %v840 = vadd.f32 %v743, %v839
    %v841 = vpop.f32.mrb[0].mxu0
    %v842 = vpop.f32.mrb[0].mxu0
    %v843 = vadd.f32 %v746, %v842
    %v844 = vpop.f32.mrb[0].mxu0
    %845 = vmatprep.mubr.bf16.mxu0 0
    %846 = vmatmul.mubr.bf16.gmra.mrb[0].mxu0 %v484
    %v847 = vpop.f32.mrb[0].mxu0
    %v848 = vadd.f32 %v751, %v847
    %v849 = vpop.f32.mrb[0].mxu0
    %v850 = vpop.f32.mrb[0].mxu0
    %v851 = vadd.f32 %v754, %v850
    %v852 = vpop.f32.mrb[0].mxu0
    %853 = vmatprep.mubr.bf16.mxu0 0
    %854 = vmatmul.mubr.bf16.gmra.mrb[0].mxu0 %v486
    %v855 = vpop.f32.mrb[0].mxu0
    %v856 = vadd.f32 %v759, %v855
    %v857 = vpop.f32.mrb[0].mxu0
    %v858 = vpop.f32.mrb[0].mxu0
    %v859 = vadd.f32 %v762, %v858
    %v860 = vpop.f32.mrb[0].mxu0
    %861 = vmatprep.mubr.bf16.mxu0 0
    %862 = vmatmul.mubr.bf16.gmra.mrb[0].mxu0 %v488
    %v863 = vpop.f32.mrb[0].mxu0
    %v864 = vadd.f32 %v767, %v863
    %v865 = vpop.f32.mrb[0].mxu0
    %v866 = vpop.f32.mrb[0].mxu0
    %v867 = vadd.f32 %v770, %v866
    %v868 = vpop.f32.mrb[0].mxu0
    %869 = vmatprep.mubr.bf16.mxu0 0
    %870 = vmatmul.mubr.bf16.gmra.mrb[0].mxu0 %v490
    %v871 = vpop.f32.mrb[0].mxu0
    %v872 = vadd.f32 %v775, %v871
    %v873 = vpop.f32.mrb[0].mxu0
    %v874 = vpop.f32.mrb[0].mxu0
    %v875 = vadd.f32 %v778, %v874
    %v876 = vpop.f32.mrb[0].mxu0
    %877 = vmatprep.mubr.bf16.mxu0 0
    %878 = vmatmul.mubr.bf16.gmra.mrb[0].mxu0 %v492
    %v879 = vpop.f32.mrb[0].mxu0
    %v880 = vadd.f32 %v783, %v879
    %v881 = vpop.f32.mrb[0].mxu0
    %v882 = vpop.f32.mrb[0].mxu0
    %v883 = vadd.f32 %v786, %v882
    %v884 = vpop.f32.mrb[0].mxu0
    %885 = vdwg.mxu0
    %v886 = vmax.f32 %v824, 0.0
    %v887 = vmax.f32 %v827, 0.0
    %v888 = vmax.f32 %v832, 0.0
    %v889 = vmax.f32 %v835, 0.0
    %v890 = vmax.f32 %v840, 0.0
    %v891 = vmax.f32 %v843, 0.0
    %v892 = vmax.f32 %v848, 0.0
    %v893 = vmax.f32 %v851, 0.0
    %v894 = vmax.f32 %v856, 0.0
    %v895 = vmax.f32 %v859, 0.0
    %v896 = vmax.f32 %v864, 0.0
    %v897 = vmax.f32 %v867, 0.0
    %v898 = vmax.f32 %v872, 0.0
    %v899 = vmax.f32 %v875, 0.0
    %v900 = vmax.f32 %v880, 0.0
    %v901 = vmax.f32 %v883, 0.0
    %918 = vrot.lane.b32.xlu0 %v886, 127
    %v919 = vpop.permute.xlu0 %918
    %920 = vrot.lane.b32.xlu0 %v887, 127
    %v921 = vpop.permute.xlu0 %920
    %922 = vrot.lane.b32.xlu0 %v888, 127
    %v923 = vpop.permute.xlu0 %922
    %924 = vrot.lane.b32.xlu0 %v889, 127
    %v925 = vpop.permute.xlu0 %924
    %926 = vrot.lane.b32.xlu0 %v890, 127
    %v927 = vpop.permute.xlu0 %926
    %928 = vrot.lane.b32.xlu0 %v891, 127
    %v929 = vpop.permute.xlu0 %928
    %930 = vrot.lane.b32.xlu0 %v892, 127
    %v931 = vpop.permute.xlu0 %930
    %932 = vrot.lane.b32.xlu0 %v893, 127
    %v933 = vpop.permute.xlu0 %932
    %934 = vrot.lane.b32.xlu0 %v894, 127
    %v935 = vpop.permute.xlu0 %934
    %936 = vrot.lane.b32.xlu0 %v895, 127
    %v937 = vpop.permute.xlu0 %936
    %938 = vrot.lane.b32.xlu0 %v896, 127
    %v939 = vpop.permute.xlu0 %938
    %940 = vrot.lane.b32.xlu0 %v897, 127
    %v941 = vpop.permute.xlu0 %940
    %942 = vrot.lane.b32.xlu0 %v898, 127
    %v943 = vpop.permute.xlu0 %942
    %944 = vrot.lane.b32.xlu0 %v899, 127
    %v945 = vpop.permute.xlu0 %944
    %946 = vrot.lane.b32.xlu0 %v900, 127
    %v947 = vpop.permute.xlu0 %946
    %948 = vrot.lane.b32.xlu0 %v901, 127
    %v949 = vpop.permute.xlu0 %948
    %v966 = vsel %vm443, %v919, 0.0
    %v967 = vsel %vm443, %v921, 0.0
    %v968 = vsel %vm443, %v923, 0.0
    %v969 = vsel %vm443, %v925, 0.0
    %v970 = vsel %vm443, %v927, 0.0
    %v971 = vsel %vm443, %v929, 0.0
    %v972 = vsel %vm443, %v931, 0.0
    %v973 = vsel %vm443, %v933, 0.0
    %v974 = vsel %vm443, %v935, 0.0
    %v975 = vsel %vm443, %v937, 0.0
    %v976 = vsel %vm443, %v939, 0.0
    %v977 = vsel %vm443, %v941, 0.0
    %v978 = vsel %vm443, %v943, 0.0
    %v979 = vsel %vm443, %v945, 0.0
    %v980 = vsel %vm443, %v947, 0.0
    %v981 = vsel %vm443, %v949, 0.0
    %v982 = vmax.f32 %v886, %v966
    %v983 = vmax.f32 %v887, %v967
    %v984 = vmax.f32 %v888, %v968
    %v985 = vmax.f32 %v889, %v969
    %v986 = vmax.f32 %v890, %v970
    %v987 = vmax.f32 %v891, %v971
    %v988 = vmax.f32 %v892, %v972
    %v989 = vmax.f32 %v893, %v973
    %v990 = vmax.f32 %v894, %v974
    %v991 = vmax.f32 %v895, %v975
    %v992 = vmax.f32 %v896, %v976
    %v993 = vmax.f32 %v897, %v977
    %v994 = vmax.f32 %v898, %v978
    %v995 = vmax.f32 %v899, %v979
    %v996 = vmax.f32 %v900, %v980
    %v997 = vmax.f32 %v901, %v981
    %v998 = vpack.c.bf16 %v983, %v982
    %v999 = vpack.c.bf16 %v985, %v984
    %v1000 = vpack.c.bf16 %v987, %v986
    %v1001 = vpack.c.bf16 %v989, %v988
    %v1002 = vpack.c.bf16 %v991, %v990
    %v1003 = vpack.c.bf16 %v993, %v992
    %v1004 = vpack.c.bf16 %v995, %v994
    %v1005 = vpack.c.bf16 %v997, %v996
    %v1006 = vld [vmem:[%s5] sm:$0xff]
    %v1007 = vld [vmem:[%s5 + $0x8] sm:$0xf]
    %v1008 = vld [vmem:[%s5 + $0xc] sm:$0xff]
    %v1009 = vld [vmem:[%s5 + $0x14] sm:$0xf]
    %v1010 = vld [vmem:[%s5 + $0x18] sm:$0xff]
    %v1011 = vld [vmem:[%s5 + $0x20] sm:$0xf]
    %v1012 = vld [vmem:[%s5 + $0x24] sm:$0xff]
    %v1013 = vld [vmem:[%s5 + $0x2c] sm:$0xf]
    %v1014 = vld [vmem:[%s5 + $0x30] sm:$0xff]
    %v1015 = vld [vmem:[%s5 + $0x38] sm:$0xf]
    %v1016 = vld [vmem:[%s5 + $0x3c] sm:$0xff]
    %v1017 = vld [vmem:[%s5 + $0x44] sm:$0xf]
    %v1018 = vld [vmem:[%s5 + $0x48] sm:$0xff]
    %v1019 = vld [vmem:[%s5 + $0x50] sm:$0xf]
    %v1020 = vld [vmem:[%s5 + $0x54] sm:$0xff]
    %v1021 = vld [vmem:[%s5 + $0x5c] sm:$0xf]
    %v1022 = vld [vmem:[%s5 + $0x60] sm:$0xff]
    %v1023 = vld [vmem:[%s5 + $0x68] sm:$0xf]
    %v1024 = vld [vmem:[%s5 + $0x6c] sm:$0xff]
    %v1025 = vld [vmem:[%s5 + $0x74] sm:$0xf]
    %v1026 = vld [vmem:[%s5 + $0x78] sm:$0xff]
    %v1027 = vld [vmem:[%s5 + $0x80] sm:$0xf]
    %v1028 = vld [vmem:[%s5 + $0x84] sm:$0xff]
    %v1029 = vld [vmem:[%s5 + $0x8c] sm:$0xf]
    %v1030 = vld [vmem:[%s5 + $0x90] sm:$0xff]
    %v1031 = vld [vmem:[%s5 + $0x98] sm:$0xf]
    %v1032 = vld [vmem:[%s5 + $0x9c] sm:$0xff]
    %v1033 = vld [vmem:[%s5 + $0xa4] sm:$0xf]
    %v1034 = vld [vmem:[%s5 + $0xa8] sm:$0xff]
    %v1035 = vld [vmem:[%s5 + $0xb0] sm:$0xf]
    %v1036 = vld [vmem:[%s5 + $0xb4] sm:$0xff]
    %v1037 = vld [vmem:[%s5 + $0xbc] sm:$0xf]
    %v1038 = vld [vmem:[%s6] sm:$0x7]
    %v1040 = vlaneseq
    %v1041 = vshrl.u32 %v1040, 7
    %v1042 = vsub.s32 0, %v1041
    %v1043 = vrot.slane %v1038, %v1042
    %v1044 = vlaneseq
    %v1045 = vshrl.u32 %v1044, 7
    %v1046 = vsub.s32 1, %v1045
    %v1047 = vrot.slane %v1038, %v1046
    %v1048 = vlaneseq
    %v1049 = vshrl.u32 %v1048, 7
    %v1050 = vsub.s32 2, %v1049
    %v1051 = vrot.slane %v1038, %v1050
    %v1087 = vunpack.c.l.b16 %v1006
    %v1088 = vunpack.c.h.b16 %v1006
    %v1089 = vunpack.c.l.b16 %v1007
    %v1090 = vunpack.c.l.b16 %v1008
    %v1091 = vunpack.c.h.b16 %v1008
    %v1092 = vunpack.c.l.b16 %v1009
    %v1093 = vunpack.c.l.b16 %v1010
    %v1094 = vunpack.c.h.b16 %v1010
    %v1095 = vunpack.c.l.b16 %v1011
    %v1096 = vunpack.c.l.b16 %v1012
    %v1097 = vunpack.c.h.b16 %v1012
    %v1098 = vunpack.c.l.b16 %v1013
    %v1099 = vunpack.c.l.b16 %v1014
    %v1100 = vunpack.c.h.b16 %v1014
    %v1101 = vunpack.c.l.b16 %v1015
    %v1102 = vunpack.c.l.b16 %v1016
    %v1103 = vunpack.c.h.b16 %v1016
    %v1104 = vunpack.c.l.b16 %v1017
    %v1105 = vunpack.c.l.b16 %v1018
    %v1106 = vunpack.c.h.b16 %v1018
    %v1107 = vunpack.c.l.b16 %v1019
    %v1108 = vunpack.c.l.b16 %v1020
    %v1109 = vunpack.c.h.b16 %v1020
    %v1110 = vunpack.c.l.b16 %v1021
    %v1111 = vunpack.c.l.b16 %v1022
    %v1112 = vunpack.c.h.b16 %v1022
    %v1113 = vunpack.c.l.b16 %v1023
    %v1114 = vunpack.c.l.b16 %v1024
    %v1115 = vunpack.c.h.b16 %v1024
    %v1116 = vunpack.c.l.b16 %v1025
    %v1117 = vunpack.c.l.b16 %v1026
    %v1118 = vunpack.c.h.b16 %v1026
    %v1119 = vunpack.c.l.b16 %v1027
    %v1120 = vunpack.c.l.b16 %v1028
    %v1121 = vunpack.c.h.b16 %v1028
    %v1122 = vunpack.c.l.b16 %v1029
    %v1123 = vunpack.c.l.b16 %v1030
    %v1124 = vunpack.c.h.b16 %v1030
    %v1125 = vunpack.c.l.b16 %v1031
    %v1126 = vunpack.c.l.b16 %v1032
    %v1127 = vunpack.c.h.b16 %v1032
    %v1128 = vunpack.c.l.b16 %v1033
    %v1129 = vunpack.c.l.b16 %v1034
    %v1130 = vunpack.c.h.b16 %v1034
    %v1131 = vunpack.c.l.b16 %v1035
    %v1132 = vunpack.c.l.b16 %v1036
    %v1133 = vunpack.c.h.b16 %v1036
    %v1134 = vunpack.c.l.b16 %v1037
    %v1135 = vpack.c.b16 %v1090, %v1087
    %v1136 = vpack.c.b16 %v1091, %v1088
    %v1137 = vpack.c.b16 %v1092, %v1089
    %v1138 = vpack.c.b16 %v1096, %v1093
    %v1139 = vpack.c.b16 %v1097, %v1094
    %v1140 = vpack.c.b16 %v1098, %v1095
    %v1141 = vpack.c.b16 %v1102, %v1099
    %v1142 = vpack.c.b16 %v1103, %v1100
    %v1143 = vpack.c.b16 %v1104, %v1101
    %v1144 = vpack.c.b16 %v1108, %v1105
    %v1145 = vpack.c.b16 %v1109, %v1106
    %v1146 = vpack.c.b16 %v1110, %v1107
    %v1147 = vpack.c.b16 %v1114, %v1111
    %v1148 = vpack.c.b16 %v1115, %v1112
    %v1149 = vpack.c.b16 %v1116, %v1113
    %v1150 = vpack.c.b16 %v1120, %v1117
    %v1151 = vpack.c.b16 %v1121, %v1118
    %v1152 = vpack.c.b16 %v1122, %v1119
    %v1153 = vpack.c.b16 %v1126, %v1123
    %v1154 = vpack.c.b16 %v1127, %v1124
    %v1155 = vpack.c.b16 %v1128, %v1125
    %v1156 = vpack.c.b16 %v1132, %v1129
    %v1157 = vpack.c.b16 %v1133, %v1130
    %v1158 = vpack.c.b16 %v1134, %v1131
    %1183 = vmatprep.subr.bf16.mxu0 %v1136
    %1184 = vmatpush1.bf16.msra.mxu0 %v1135
    %1185 = vmatprep.subr.bf16.mxu0 %v1139
    %1186 = vmatpush1.bf16.msra.mxu0 %v1138
    %1187 = vmatprep.subr.bf16.mxu0 %v1142
    %1188 = vmatpush1.bf16.msra.mxu0 %v1141
    %1189 = vmatprep.subr.bf16.mxu0 %v1145
    %1190 = vmatpush1.bf16.msra.mxu0 %v1144
    %1191 = vmatprep.subr.bf16.mxu0 %v1148
    %1192 = vmatpush1.bf16.msra.mxu0 %v1147
    %1193 = vmatprep.subr.bf16.mxu0 %v1151
    %1194 = vmatpush1.bf16.msra.mxu0 %v1150
    %1195 = vmatprep.subr.bf16.mxu0 %v1154
    %1196 = vmatpush1.bf16.msra.mxu0 %v1153
    %1197 = vmatprep.subr.bf16.mxu0 %v1157
    %1198 = vmatpush1.bf16.msra.mxu0 %v1156
    %1199 = vmatprep.subr.bf16.mxu0 0
    %1200 = vmatpush1.bf16.msra.mxu0 0
    %1201 = vmatprep.subr.bf16.mxu0 0
    %1202 = vmatpush1.bf16.msra.mxu0 0
    %1203 = vmatprep.subr.bf16.mxu0 0
    %1204 = vmatpush1.bf16.msra.mxu0 0
    %1205 = vmatprep.subr.bf16.mxu0 0
    %1206 = vmatpush1.bf16.msra.mxu0 0
    %1207 = vmatprep.subr.bf16.mxu0 0
    %1208 = vmatpush1.bf16.msra.mxu0 0
    %1209 = vmatprep.subr.bf16.mxu0 0
    %1210 = vmatpush1.bf16.msra.mxu0 0
    %1211 = vmatprep.subr.bf16.mxu0 0
    %1212 = vmatpush1.bf16.msra.mxu0 0
    %1213 = vmatprep.subr.bf16.mxu0 0
    %1214 = vmatpush1.bf16.msra.mxu0 0
    %1215 = vmatprep.mubr.bf16.mxu0 0
    %1216 = vmatmul.mubr.bf16.gmra.mrb[0].mxu0 %v998
    %v1217 = vpop.f32.mrb[0].mxu0
    %v1218 = vadd.f32 %v1043, %v1217
    %v1219 = vpop.f32.mrb[0].mxu0
    %v1220 = vadd.f32 %v1047, %v1219
    %v1221 = vpop.f32.mrb[0].mxu0
    %v1222 = vadd.f32 %v1043, %v1221
    %v1223 = vpop.f32.mrb[0].mxu0
    %v1224 = vadd.f32 %v1047, %v1223
    %1225 = vmatprep.mubr.bf16.mxu0 0
    %1226 = vmatmul.mubr.bf16.gmra.mrb[0].mxu0 %v999
    %v1227 = vpop.f32.mrb[0].mxu0
    %v1228 = vadd.f32 %v1043, %v1227
    %v1229 = vpop.f32.mrb[0].mxu0
    %v1230 = vadd.f32 %v1047, %v1229
    %v1231 = vpop.f32.mrb[0].mxu0
    %v1232 = vadd.f32 %v1043, %v1231
    %v1233 = vpop.f32.mrb[0].mxu0
    %v1234 = vadd.f32 %v1047, %v1233
    %1235 = vmatprep.mubr.bf16.mxu0 0
    %1236 = vmatmul.mubr.bf16.gmra.mrb[0].mxu0 %v1000
    %v1237 = vpop.f32.mrb[0].mxu0
    %v1238 = vadd.f32 %v1043, %v1237
    %v1239 = vpop.f32.mrb[0].mxu0
    %v1240 = vadd.f32 %v1047, %v1239
    %v1241 = vpop.f32.mrb[0].mxu0
    %v1242 = vadd.f32 %v1043, %v1241
    %v1243 = vpop.f32.mrb[0].mxu0
    %v1244 = vadd.f32 %v1047, %v1243
    %1245 = vmatprep.mubr.bf16.mxu0 0
    %1246 = vmatmul.mubr.bf16.gmra.mrb[0].mxu0 %v1001
    %v1247 = vpop.f32.mrb[0].mxu0
    %v1248 = vadd.f32 %v1043, %v1247
    %v1249 = vpop.f32.mrb[0].mxu0
    %v1250 = vadd.f32 %v1047, %v1249
    %v1251 = vpop.f32.mrb[0].mxu0
    %v1252 = vadd.f32 %v1043, %v1251
    %v1253 = vpop.f32.mrb[0].mxu0
    %v1254 = vadd.f32 %v1047, %v1253
    %1255 = vmatprep.mubr.bf16.mxu0 0
    %1256 = vmatmul.mubr.bf16.gmra.mrb[0].mxu0 %v1002
    %v1257 = vpop.f32.mrb[0].mxu0
    %v1258 = vadd.f32 %v1043, %v1257
    %v1259 = vpop.f32.mrb[0].mxu0
    %v1260 = vadd.f32 %v1047, %v1259
    %v1261 = vpop.f32.mrb[0].mxu0
    %v1262 = vadd.f32 %v1043, %v1261
    %v1263 = vpop.f32.mrb[0].mxu0
    %v1264 = vadd.f32 %v1047, %v1263
    %1265 = vmatprep.mubr.bf16.mxu0 0
    %1266 = vmatmul.mubr.bf16.gmra.mrb[0].mxu0 %v1003
    %v1267 = vpop.f32.mrb[0].mxu0
    %v1268 = vadd.f32 %v1043, %v1267
    %v1269 = vpop.f32.mrb[0].mxu0
    %v1270 = vadd.f32 %v1047, %v1269
    %v1271 = vpop.f32.mrb[0].mxu0
    %v1272 = vadd.f32 %v1043, %v1271
    %v1273 = vpop.f32.mrb[0].mxu0
    %v1274 = vadd.f32 %v1047, %v1273
    %1275 = vmatprep.mubr.bf16.mxu0 0
    %1276 = vmatmul.mubr.bf16.gmra.mrb[0].mxu0 %v1004
    %v1277 = vpop.f32.mrb[0].mxu0
    %v1278 = vadd.f32 %v1043, %v1277
    %v1279 = vpop.f32.mrb[0].mxu0
    %v1280 = vadd.f32 %v1047, %v1279
    %v1281 = vpop.f32.mrb[0].mxu0
    %v1282 = vadd.f32 %v1043, %v1281
    %v1283 = vpop.f32.mrb[0].mxu0
    %v1284 = vadd.f32 %v1047, %v1283
    %1285 = vmatprep.mubr.bf16.mxu0 0
    %1286 = vmatmul.mubr.bf16.gmra.mrb[0].mxu0 %v1005
    %v1287 = vpop.f32.mrb[0].mxu0
    %v1288 = vadd.f32 %v1043, %v1287
    %v1289 = vpop.f32.mrb[0].mxu0
    %v1290 = vadd.f32 %v1047, %v1289
    %v1291 = vpop.f32.mrb[0].mxu0
    %v1292 = vadd.f32 %v1043, %v1291
    %v1293 = vpop.f32.mrb[0].mxu0
    %v1294 = vadd.f32 %v1047, %v1293
    %1295 = vdwg.mxu0
    %1296 = vmatprep.subr.bf16.mxu0 0
    %1297 = vmatpush1.bf16.msra.mxu0 %v1137
    %1298 = vmatprep.subr.bf16.mxu0 0
    %1299 = vmatpush1.bf16.msra.mxu0 %v1140
    %1300 = vmatprep.subr.bf16.mxu0 0
    %1301 = vmatpush1.bf16.msra.mxu0 %v1143
    %1302 = vmatprep.subr.bf16.mxu0 0
    %1303 = vmatpush1.bf16.msra.mxu0 %v1146
    %1304 = vmatprep.subr.bf16.mxu0 0
    %1305 = vmatpush1.bf16.msra.mxu0 %v1149
    %1306 = vmatprep.subr.bf16.mxu0 0
    %1307 = vmatpush1.bf16.msra.mxu0 %v1152
    %1308 = vmatprep.subr.bf16.mxu0 0
    %1309 = vmatpush1.bf16.msra.mxu0 %v1155
    %1310 = vmatprep.subr.bf16.mxu0 0
    %1311 = vmatpush1.bf16.msra.mxu0 %v1158
    %1312 = vmatprep.subr.bf16.mxu0 0
    %1313 = vmatpush1.bf16.msra.mxu0 0
    %1314 = vmatprep.subr.bf16.mxu0 0
    %1315 = vmatpush1.bf16.msra.mxu0 0
    %1316 = vmatprep.subr.bf16.mxu0 0
    %1317 = vmatpush1.bf16.msra.mxu0 0
    %1318 = vmatprep.subr.bf16.mxu0 0
    %1319 = vmatpush1.bf16.msra.mxu0 0
    %1320 = vmatprep.subr.bf16.mxu0 0
    %1321 = vmatpush1.bf16.msra.mxu0 0
    %1322 = vmatprep.subr.bf16.mxu0 0
    %1323 = vmatpush1.bf16.msra.mxu0 0
    %1324 = vmatprep.subr.bf16.mxu0 0
    %1325 = vmatpush1.bf16.msra.mxu0 0
    %1326 = vmatprep.subr.bf16.mxu0 0
    %1327 = vmatpush1.bf16.msra.mxu0 0
    %1328 = vmatprep.mubr.bf16.mxu0 0
    %1329 = vmatmul.mubr.bf16.gmra.mrb[0].mxu0 %v998
    %v1330 = vpop.f32.mrb[0].mxu0
    %v1331 = vadd.f32 %v1051, %v1330
    %v1332 = vpop.f32.mrb[0].mxu0
    %v1333 = vpop.f32.mrb[0].mxu0
    %v1334 = vadd.f32 %v1051, %v1333
    %v1335 = vpop.f32.mrb[0].mxu0
    %1336 = vmatprep.mubr.bf16.mxu0 0
    %1337 = vmatmul.mubr.bf16.gmra.mrb[0].mxu0 %v999
    %v1338 = vpop.f32.mrb[0].mxu0
    %v1339 = vadd.f32 %v1051, %v1338
    %v1340 = vpop.f32.mrb[0].mxu0
    %v1341 = vpop.f32.mrb[0].mxu0
    %v1342 = vadd.f32 %v1051, %v1341
    %v1343 = vpop.f32.mrb[0].mxu0
    %1344 = vmatprep.mubr.bf16.mxu0 0
    %1345 = vmatmul.mubr.bf16.gmra.mrb[0].mxu0 %v1000
    %v1346 = vpop.f32.mrb[0].mxu0
    %v1347 = vadd.f32 %v1051, %v1346
    %v1348 = vpop.f32.mrb[0].mxu0
    %v1349 = vpop.f32.mrb[0].mxu0
    %v1350 = vadd.f32 %v1051, %v1349
    %v1351 = vpop.f32.mrb[0].mxu0
    %1352 = vmatprep.mubr.bf16.mxu0 0
    %1353 = vmatmul.mubr.bf16.gmra.mrb[0].mxu0 %v1001
    %v1354 = vpop.f32.mrb[0].mxu0
    %v1355 = vadd.f32 %v1051, %v1354
    %v1356 = vpop.f32.mrb[0].mxu0
    %v1357 = vpop.f32.mrb[0].mxu0
    %v1358 = vadd.f32 %v1051, %v1357
    %v1359 = vpop.f32.mrb[0].mxu0
    %1360 = vmatprep.mubr.bf16.mxu0 0
    %1361 = vmatmul.mubr.bf16.gmra.mrb[0].mxu0 %v1002
    %v1362 = vpop.f32.mrb[0].mxu0
    %v1363 = vadd.f32 %v1051, %v1362
    %v1364 = vpop.f32.mrb[0].mxu0
    %v1365 = vpop.f32.mrb[0].mxu0
    %v1366 = vadd.f32 %v1051, %v1365
    %v1367 = vpop.f32.mrb[0].mxu0
    %1368 = vmatprep.mubr.bf16.mxu0 0
    %1369 = vmatmul.mubr.bf16.gmra.mrb[0].mxu0 %v1003
    %v1370 = vpop.f32.mrb[0].mxu0
    %v1371 = vadd.f32 %v1051, %v1370
    %v1372 = vpop.f32.mrb[0].mxu0
    %v1373 = vpop.f32.mrb[0].mxu0
    %v1374 = vadd.f32 %v1051, %v1373
    %v1375 = vpop.f32.mrb[0].mxu0
    %1376 = vmatprep.mubr.bf16.mxu0 0
    %1377 = vmatmul.mubr.bf16.gmra.mrb[0].mxu0 %v1004
    %v1378 = vpop.f32.mrb[0].mxu0
    %v1379 = vadd.f32 %v1051, %v1378
    %v1380 = vpop.f32.mrb[0].mxu0
    %v1381 = vpop.f32.mrb[0].mxu0
    %v1382 = vadd.f32 %v1051, %v1381
    %v1383 = vpop.f32.mrb[0].mxu0
    %1384 = vmatprep.mubr.bf16.mxu0 0
    %1385 = vmatmul.mubr.bf16.gmra.mrb[0].mxu0 %v1005
    %v1386 = vpop.f32.mrb[0].mxu0
    %v1387 = vadd.f32 %v1051, %v1386
    %v1388 = vpop.f32.mrb[0].mxu0
    %v1389 = vpop.f32.mrb[0].mxu0
    %v1390 = vadd.f32 %v1051, %v1389
    %v1391 = vpop.f32.mrb[0].mxu0
    %1392 = vdwg.mxu0
    %v1393 = vlaneseq
    %v1394 = vand.u32 %v1393, 127
    %v1395 = vadd.s32 %v1394, 128
    %v1396 = vadd.s32 %v1394, 256
    %vm1397 = vcmp.lt.s32.totalorder %v1394, 0
    %v1398 = vsub.s32 0, %v1394
    %v1399 = vsel %vm1397, %v1398, %v1394
    %v1400 = vshrl.u32 %v1399, 7
    %v1401 = vand.u32 %v1399, 127
    %v1402 = vsub.s32 0, %v1401
    %v1403 = vsel %vm1397, %v1402, %v1401
    %vm1404 = vcmp.lt.s32.totalorder %v1395, 0
    %v1405 = vsub.s32 0, %v1395
    %v1406 = vsel %vm1404, %v1405, %v1395
    %v1407 = vshrl.u32 %v1406, 7
    %v1408 = vand.u32 %v1406, 127
    %v1409 = vsub.s32 0, %v1408
    %v1410 = vsel %vm1404, %v1409, %v1408
    %vm1411 = vcmp.lt.s32.totalorder %v1396, 0
    %v1412 = vsub.s32 0, %v1396
    %v1413 = vsel %vm1411, %v1412, %v1396
    %v1414 = vshrl.u32 %v1413, 7
    %v1415 = vand.u32 %v1413, 127
    %v1416 = vsub.s32 0, %v1415
    %v1417 = vsel %vm1411, %v1416, %v1415
    %vm1418 = vcmp.ne.s32.totalorder %v1403, 0
    %vm1419 = vcmp.ne.s32.totalorder %v1410, 0
    %vm1420 = vcmp.ne.s32.totalorder %v1417, 0
    %vm1421 = vcmp.lt.s32.totalorder %v1403, 0
    %vm1422 = vcmp.lt.s32.totalorder %v1410, 0
    %vm1423 = vcmp.lt.s32.totalorder %v1417, 0
    %vm1424 = vmand %vm1421, %vm1418
    %vm1425 = vmand %vm1422, %vm1419
    %vm1426 = vmand %vm1423, %vm1420
    %v1427 = vadd.s32 %v1403, 128
    %v1428 = vadd.s32 %v1410, 128
    %v1429 = vadd.s32 %v1417, 128
    %v1430 = vsel %vm1424, %v1427, %v1403
    %v1431 = vsel %vm1425, %v1428, %v1410
    %v1432 = vsel %vm1426, %v1429, %v1417
    %vm1433 = vcmp.lt.s32.totalorder %v1430, 16
    %vm1434 = vcmp.lt.s32.totalorder %v1431, 16
    %vm1435 = vcmp.lt.s32.totalorder %v1432, 16
    %v1436 = vsel %vm1433, %v1218, %v1292
    %v1437 = vsel %vm1434, %v1220, %v1294
    %v1438 = vsel %vm1435, %v1331, %v1390
    %v1439 = vsel %vm1433, %v1222, %v1288
    %v1440 = vsel %vm1434, %v1224, %v1290
    %v1441 = vsel %vm1435, %v1334, %v1387
    %v1442 = vsel %vm1433, %v1228, %v1282
    %v1443 = vsel %vm1434, %v1230, %v1284
    %v1444 = vsel %vm1435, %v1339, %v1382
    %v1445 = vsel %vm1433, %v1232, %v1278
    %v1446 = vsel %vm1434, %v1234, %v1280
    %v1447 = vsel %vm1435, %v1342, %v1379
    %v1448 = vsel %vm1433, %v1238, %v1272
    %v1449 = vsel %vm1434, %v1240, %v1274
    %v1450 = vsel %vm1435, %v1347, %v1374
    %v1451 = vsel %vm1433, %v1242, %v1268
    %v1452 = vsel %vm1434, %v1244, %v1270
    %v1453 = vsel %vm1435, %v1350, %v1371
    %v1454 = vsel %vm1433, %v1248, %v1262
    %v1455 = vsel %vm1434, %v1250, %v1264
    %v1456 = vsel %vm1435, %v1355, %v1366
    %v1457 = vsel %vm1433, %v1252, %v1258
    %v1458 = vsel %vm1434, %v1254, %v1260
    %v1459 = vsel %vm1435, %v1358, %v1363
    %v1460 = vsel %vm1433, %v1258, %v1252
    %v1461 = vsel %vm1434, %v1260, %v1254
    %v1462 = vsel %vm1435, %v1363, %v1358
    %v1463 = vsel %vm1433, %v1262, %v1248
    %v1464 = vsel %vm1434, %v1264, %v1250
    %v1465 = vsel %vm1435, %v1366, %v1355
    %v1466 = vsel %vm1433, %v1268, %v1242
    %v1467 = vsel %vm1434, %v1270, %v1244
    %v1468 = vsel %vm1435, %v1371, %v1350
    %v1469 = vsel %vm1433, %v1272, %v1238
    %v1470 = vsel %vm1434, %v1274, %v1240
    %v1471 = vsel %vm1435, %v1374, %v1347
    %v1472 = vsel %vm1433, %v1278, %v1232
    %v1473 = vsel %vm1434, %v1280, %v1234
    %v1474 = vsel %vm1435, %v1379, %v1342
    %v1475 = vsel %vm1433, %v1282, %v1228
    %v1476 = vsel %vm1434, %v1284, %v1230
    %v1477 = vsel %vm1435, %v1382, %v1339
    %v1478 = vsel %vm1433, %v1288, %v1222
    %v1479 = vsel %vm1434, %v1290, %v1224
    %v1480 = vsel %vm1435, %v1387, %v1334
    %v1481 = vsel %vm1433, %v1292, %v1218
    %v1482 = vsel %vm1434, %v1294, %v1220
    %v1483 = vsel %vm1435, %v1390, %v1331
    %v1484 = vld [vmem:[%s7] sm:$0xff]
    %v1485 = vld [vmem:[%s7 + $0x8] sm:$0xf]
    %v1486 = vld [vmem:[%s7 + $0xc] sm:$0xff]
    %v1487 = vld [vmem:[%s7 + $0x14] sm:$0xf]
    %v1488 = vld [vmem:[%s7 + $0x18] sm:$0xff]
    %v1489 = vld [vmem:[%s7 + $0x20] sm:$0xf]
    %v1490 = vld [vmem:[%s7 + $0x24] sm:$0xff]
    %v1491 = vld [vmem:[%s7 + $0x2c] sm:$0xf]
    %v1492 = vld [vmem:[%s7 + $0x30] sm:$0xff]
    %v1493 = vld [vmem:[%s7 + $0x38] sm:$0xf]
    %v1494 = vld [vmem:[%s7 + $0x3c] sm:$0xff]
    %v1495 = vld [vmem:[%s7 + $0x44] sm:$0xf]
    %v1496 = vld [vmem:[%s7 + $0x48] sm:$0xff]
    %v1497 = vld [vmem:[%s7 + $0x50] sm:$0xf]
    %v1498 = vld [vmem:[%s7 + $0x54] sm:$0xff]
    %v1499 = vld [vmem:[%s7 + $0x5c] sm:$0xf]
    %v1500 = vld [vmem:[%s7 + $0x60] sm:$0xff]
    %v1501 = vld [vmem:[%s7 + $0x68] sm:$0xf]
    %v1502 = vld [vmem:[%s7 + $0x6c] sm:$0xff]
    %v1503 = vld [vmem:[%s7 + $0x74] sm:$0xf]
    %v1504 = vld [vmem:[%s7 + $0x78] sm:$0xff]
    %v1505 = vld [vmem:[%s7 + $0x80] sm:$0xf]
    %v1506 = vld [vmem:[%s7 + $0x84] sm:$0xff]
    %v1507 = vld [vmem:[%s7 + $0x8c] sm:$0xf]
    %v1508 = vld [vmem:[%s7 + $0x90] sm:$0xff]
    %v1509 = vld [vmem:[%s7 + $0x98] sm:$0xf]
    %v1510 = vld [vmem:[%s7 + $0x9c] sm:$0xff]
    %v1511 = vld [vmem:[%s7 + $0xa4] sm:$0xf]
    %v1512 = vld [vmem:[%s7 + $0xa8] sm:$0xff]
    %v1513 = vld [vmem:[%s7 + $0xb0] sm:$0xf]
    %v1514 = vld [vmem:[%s7 + $0xb4] sm:$0xff]
    %v1515 = vld [vmem:[%s7 + $0xbc] sm:$0xf]
    %v1516 = vld [vmem:[%s8] sm:$0x7]
    %v1518 = vlaneseq
    %v1519 = vshrl.u32 %v1518, 7
    %v1520 = vsub.s32 0, %v1519
    %v1521 = vrot.slane %v1516, %v1520
    %v1522 = vlaneseq
    %v1523 = vshrl.u32 %v1522, 7
    %v1524 = vsub.s32 1, %v1523
    %v1525 = vrot.slane %v1516, %v1524
    %v1526 = vlaneseq
    %v1527 = vshrl.u32 %v1526, 7
    %v1528 = vsub.s32 2, %v1527
    %v1529 = vrot.slane %v1516, %v1528
    %v1565 = vunpack.c.l.b16 %v1484
    %v1566 = vunpack.c.h.b16 %v1484
    %v1567 = vunpack.c.l.b16 %v1485
    %v1568 = vunpack.c.l.b16 %v1486
    %v1569 = vunpack.c.h.b16 %v1486
    %v1570 = vunpack.c.l.b16 %v1487
    %v1571 = vunpack.c.l.b16 %v1488
    %v1572 = vunpack.c.h.b16 %v1488
    %v1573 = vunpack.c.l.b16 %v1489
    %v1574 = vunpack.c.l.b16 %v1490
    %v1575 = vunpack.c.h.b16 %v1490
    %v1576 = vunpack.c.l.b16 %v1491
    %v1577 = vunpack.c.l.b16 %v1492
    %v1578 = vunpack.c.h.b16 %v1492
    %v1579 = vunpack.c.l.b16 %v1493
    %v1580 = vunpack.c.l.b16 %v1494
    %v1581 = vunpack.c.h.b16 %v1494
    %v1582 = vunpack.c.l.b16 %v1495
    %v1583 = vunpack.c.l.b16 %v1496
    %v1584 = vunpack.c.h.b16 %v1496
    %v1585 = vunpack.c.l.b16 %v1497
    %v1586 = vunpack.c.l.b16 %v1498
    %v1587 = vunpack.c.h.b16 %v1498
    %v1588 = vunpack.c.l.b16 %v1499
    %v1589 = vunpack.c.l.b16 %v1500
    %v1590 = vunpack.c.h.b16 %v1500
    %v1591 = vunpack.c.l.b16 %v1501
    %v1592 = vunpack.c.l.b16 %v1502
    %v1593 = vunpack.c.h.b16 %v1502
    %v1594 = vunpack.c.l.b16 %v1503
    %v1595 = vunpack.c.l.b16 %v1504
    %v1596 = vunpack.c.h.b16 %v1504
    %v1597 = vunpack.c.l.b16 %v1505
    %v1598 = vunpack.c.l.b16 %v1506
    %v1599 = vunpack.c.h.b16 %v1506
    %v1600 = vunpack.c.l.b16 %v1507
    %v1601 = vunpack.c.l.b16 %v1508
    %v1602 = vunpack.c.h.b16 %v1508
    %v1603 = vunpack.c.l.b16 %v1509
    %v1604 = vunpack.c.l.b16 %v1510
    %v1605 = vunpack.c.h.b16 %v1510
    %v1606 = vunpack.c.l.b16 %v1511
    %v1607 = vunpack.c.l.b16 %v1512
    %v1608 = vunpack.c.h.b16 %v1512
    %v1609 = vunpack.c.l.b16 %v1513
    %v1610 = vunpack.c.l.b16 %v1514
    %v1611 = vunpack.c.h.b16 %v1514
    %v1612 = vunpack.c.l.b16 %v1515
    %v1613 = vpack.c.b16 %v1568, %v1565
    %v1614 = vpack.c.b16 %v1569, %v1566
    %v1615 = vpack.c.b16 %v1570, %v1567
    %v1616 = vpack.c.b16 %v1574, %v1571
    %v1617 = vpack.c.b16 %v1575, %v1572
    %v1618 = vpack.c.b16 %v1576, %v1573
    %v1619 = vpack.c.b16 %v1580, %v1577
    %v1620 = vpack.c.b16 %v1581, %v1578
    %v1621 = vpack.c.b16 %v1582, %v1579
    %v1622 = vpack.c.b16 %v1586, %v1583
    %v1623 = vpack.c.b16 %v1587, %v1584
    %v1624 = vpack.c.b16 %v1588, %v1585
    %v1625 = vpack.c.b16 %v1592, %v1589
    %v1626 = vpack.c.b16 %v1593, %v1590
    %v1627 = vpack.c.b16 %v1594, %v1591
    %v1628 = vpack.c.b16 %v1598, %v1595
    %v1629 = vpack.c.b16 %v1599, %v1596
    %v1630 = vpack.c.b16 %v1600, %v1597
    %v1631 = vpack.c.b16 %v1604, %v1601
    %v1632 = vpack.c.b16 %v1605, %v1602
    %v1633 = vpack.c.b16 %v1606, %v1603
    %v1634 = vpack.c.b16 %v1610, %v1607
    %v1635 = vpack.c.b16 %v1611, %v1608
    %v1636 = vpack.c.b16 %v1612, %v1609
    %1661 = vmatprep.subr.bf16.mxu0 %v1614
    %1662 = vmatpush1.bf16.msra.mxu0 %v1613
    %1663 = vmatprep.subr.bf16.mxu0 %v1617
    %1664 = vmatpush1.bf16.msra.mxu0 %v1616
    %1665 = vmatprep.subr.bf16.mxu0 %v1620
    %1666 = vmatpush1.bf16.msra.mxu0 %v1619
    %1667 = vmatprep.subr.bf16.mxu0 %v1623
    %1668 = vmatpush1.bf16.msra.mxu0 %v1622
    %1669 = vmatprep.subr.bf16.mxu0 %v1626
    %1670 = vmatpush1.bf16.msra.mxu0 %v1625
    %1671 = vmatprep.subr.bf16.mxu0 %v1629
    %1672 = vmatpush1.bf16.msra.mxu0 %v1628
    %1673 = vmatprep.subr.bf16.mxu0 %v1632
    %1674 = vmatpush1.bf16.msra.mxu0 %v1631
    %1675 = vmatprep.subr.bf16.mxu0 %v1635
    %1676 = vmatpush1.bf16.msra.mxu0 %v1634
    %1677 = vmatprep.subr.bf16.mxu0 0
    %1678 = vmatpush1.bf16.msra.mxu0 0
    %1679 = vmatprep.subr.bf16.mxu0 0
    %1680 = vmatpush1.bf16.msra.mxu0 0
    %1681 = vmatprep.subr.bf16.mxu0 0
    %1682 = vmatpush1.bf16.msra.mxu0 0
    %1683 = vmatprep.subr.bf16.mxu0 0
    %1684 = vmatpush1.bf16.msra.mxu0 0
    %1685 = vmatprep.subr.bf16.mxu0 0
    %1686 = vmatpush1.bf16.msra.mxu0 0
    %1687 = vmatprep.subr.bf16.mxu0 0
    %1688 = vmatpush1.bf16.msra.mxu0 0
    %1689 = vmatprep.subr.bf16.mxu0 0
    %1690 = vmatpush1.bf16.msra.mxu0 0
    %1691 = vmatprep.subr.bf16.mxu0 0
    %1692 = vmatpush1.bf16.msra.mxu0 0
    %1693 = vmatprep.mubr.bf16.mxu0 0
    %1694 = vmatmul.mubr.bf16.gmra.mrb[0].mxu0 0
    %v1695 = vpop.f32.mrb[0].mxu0
    %v1696 = vadd.f32 %v1521, %v1695
    %v1697 = vpop.f32.mrb[0].mxu0
    %v1698 = vadd.f32 %v1525, %v1697
    %v1699 = vpop.f32.mrb[0].mxu0
    %v1700 = vpop.f32.mrb[0].mxu0
    %1701 = vdwg.mxu0
    %1702 = vmatprep.subr.bf16.mxu0 0
    %1703 = vmatpush1.bf16.msra.mxu0 %v1615
    %1704 = vmatprep.subr.bf16.mxu0 0
    %1705 = vmatpush1.bf16.msra.mxu0 %v1618
    %1706 = vmatprep.subr.bf16.mxu0 0
    %1707 = vmatpush1.bf16.msra.mxu0 %v1621
    %1708 = vmatprep.subr.bf16.mxu0 0
    %1709 = vmatpush1.bf16.msra.mxu0 %v1624
    %1710 = vmatprep.subr.bf16.mxu0 0
    %1711 = vmatpush1.bf16.msra.mxu0 %v1627
    %1712 = vmatprep.subr.bf16.mxu0 0
    %1713 = vmatpush1.bf16.msra.mxu0 %v1630
    %1714 = vmatprep.subr.bf16.mxu0 0
    %1715 = vmatpush1.bf16.msra.mxu0 %v1633
    %1716 = vmatprep.subr.bf16.mxu0 0
    %1717 = vmatpush1.bf16.msra.mxu0 %v1636
    %1718 = vmatprep.subr.bf16.mxu0 0
    %1719 = vmatpush1.bf16.msra.mxu0 0
    %1720 = vmatprep.subr.bf16.mxu0 0
    %1721 = vmatpush1.bf16.msra.mxu0 0
    %1722 = vmatprep.subr.bf16.mxu0 0
    %1723 = vmatpush1.bf16.msra.mxu0 0
    %1724 = vmatprep.subr.bf16.mxu0 0
    %1725 = vmatpush1.bf16.msra.mxu0 0
    %1726 = vmatprep.subr.bf16.mxu0 0
    %1727 = vmatpush1.bf16.msra.mxu0 0
    %1728 = vmatprep.subr.bf16.mxu0 0
    %1729 = vmatpush1.bf16.msra.mxu0 0
    %1730 = vmatprep.subr.bf16.mxu0 0
    %1731 = vmatpush1.bf16.msra.mxu0 0
    %1732 = vmatprep.subr.bf16.mxu0 0
    %1733 = vmatpush1.bf16.msra.mxu0 0
    %1734 = vmatprep.mubr.bf16.mxu0 0
    %1735 = vmatmul.mubr.bf16.gmra.mrb[0].mxu0 0
    %v1736 = vpop.f32.mrb[0].mxu0
    %v1737 = vadd.f32 %v1529, %v1736
    %v1738 = vpop.f32.mrb[0].mxu0
    %v1739 = vpop.f32.mrb[0].mxu0
    %v1740 = vpop.f32.mrb[0].mxu0
    %1741 = vdwg.mxu0
    %v1742 = vadd.f32 %v1436, %v1696
    %v1743 = vxor.u32 %v1742, 2147483648
    %v1744 = vmul.f32 %v1743, 1.442695
    %v1745 = vpow.pop %v1744
    %v1746 = vadd.f32 %v1745, 1.0
    %v1747 = vrcp.pop %v1746
    %v1748 = vmul.f32 1.0, %v1747
    %v1749 = vadd.f32 %v1437, %v1698
    %v1750 = vxor.u32 %v1749, 2147483648
    %v1751 = vmul.f32 %v1750, 1.442695
    %v1752 = vpow.pop %v1751
    %v1753 = vadd.f32 %v1752, 1.0
    %v1754 = vrcp.pop %v1753
    %v1755 = vmul.f32 1.0, %v1754
    %v1756 = vmul.f32 %v1748, %v1737
    %v1757 = vadd.f32 %v1438, %v1756
    %v1758 = vtanh.pop %v1757
    %v1759 = vsub.f32 1.0, %v1755
    %v1760 = vmul.f32 %v1759, %v1758
    %v1761 = vmul.f32 %v1755, 0.0
    %v1762 = vadd.f32 %v1760, %v1761
    %v1763 = vadd.f32 %v1762, 0.0
    %v1764 = vpack.c.bf16 %v1762, %v1762
    %1765 = vmatprep.subr.bf16.mxu0 %v1614
    %1766 = vmatpush1.bf16.msra.mxu0 %v1613
    %1767 = vmatprep.subr.bf16.mxu0 %v1617
    %1768 = vmatpush1.bf16.msra.mxu0 %v1616
    %1769 = vmatprep.subr.bf16.mxu0 %v1620
    %1770 = vmatpush1.bf16.msra.mxu0 %v1619
    %1771 = vmatprep.subr.bf16.mxu0 %v1623
    %1772 = vmatpush1.bf16.msra.mxu0 %v1622
    %1773 = vmatprep.subr.bf16.mxu0 %v1626
    %1774 = vmatpush1.bf16.msra.mxu0 %v1625
    %1775 = vmatprep.subr.bf16.mxu0 %v1629
    %1776 = vmatpush1.bf16.msra.mxu0 %v1628
    %1777 = vmatprep.subr.bf16.mxu0 %v1632
    %1778 = vmatpush1.bf16.msra.mxu0 %v1631
    %1779 = vmatprep.subr.bf16.mxu0 %v1635
    %1780 = vmatpush1.bf16.msra.mxu0 %v1634
    %1781 = vmatprep.subr.bf16.mxu0 0
    %1782 = vmatpush1.bf16.msra.mxu0 0
    %1783 = vmatprep.subr.bf16.mxu0 0
    %1784 = vmatpush1.bf16.msra.mxu0 0
    %1785 = vmatprep.subr.bf16.mxu0 0
    %1786 = vmatpush1.bf16.msra.mxu0 0
    %1787 = vmatprep.subr.bf16.mxu0 0
    %1788 = vmatpush1.bf16.msra.mxu0 0
    %1789 = vmatprep.subr.bf16.mxu0 0
    %1790 = vmatpush1.bf16.msra.mxu0 0
    %1791 = vmatprep.subr.bf16.mxu0 0
    %1792 = vmatpush1.bf16.msra.mxu0 0
    %1793 = vmatprep.subr.bf16.mxu0 0
    %1794 = vmatpush1.bf16.msra.mxu0 0
    %1795 = vmatprep.subr.bf16.mxu0 0
    %1796 = vmatpush1.bf16.msra.mxu0 0
    %1797 = vmatprep.mubr.bf16.mxu0 0
    %1798 = vmatmul.mubr.bf16.gmra.mrb[0].mxu0 %v1764
    %v1799 = vpop.f32.mrb[0].mxu0
    %v1800 = vadd.f32 %v1521, %v1799
    %v1801 = vpop.f32.mrb[0].mxu0
    %v1802 = vadd.f32 %v1525, %v1801
    %v1803 = vpop.f32.mrb[0].mxu0
    %v1804 = vpop.f32.mrb[0].mxu0
    %1805 = vdwg.mxu0
    %1806 = vmatprep.subr.bf16.mxu0 0
    %1807 = vmatpush1.bf16.msra.mxu0 %v1615
    %1808 = vmatprep.subr.bf16.mxu0 0
    %1809 = vmatpush1.bf16.msra.mxu0 %v1618
    %1810 = vmatprep.subr.bf16.mxu0 0
    %1811 = vmatpush1.bf16.msra.mxu0 %v1621
    %1812 = vmatprep.subr.bf16.mxu0 0
    %1813 = vmatpush1.bf16.msra.mxu0 %v1624
    %1814 = vmatprep.subr.bf16.mxu0 0
    %1815 = vmatpush1.bf16.msra.mxu0 %v1627
    %1816 = vmatprep.subr.bf16.mxu0 0
    %1817 = vmatpush1.bf16.msra.mxu0 %v1630
    %1818 = vmatprep.subr.bf16.mxu0 0
    %1819 = vmatpush1.bf16.msra.mxu0 %v1633
    %1820 = vmatprep.subr.bf16.mxu0 0
    %1821 = vmatpush1.bf16.msra.mxu0 %v1636
    %1822 = vmatprep.subr.bf16.mxu0 0
    %1823 = vmatpush1.bf16.msra.mxu0 0
    %1824 = vmatprep.subr.bf16.mxu0 0
    %1825 = vmatpush1.bf16.msra.mxu0 0
    %1826 = vmatprep.subr.bf16.mxu0 0
    %1827 = vmatpush1.bf16.msra.mxu0 0
    %1828 = vmatprep.subr.bf16.mxu0 0
    %1829 = vmatpush1.bf16.msra.mxu0 0
    %1830 = vmatprep.subr.bf16.mxu0 0
    %1831 = vmatpush1.bf16.msra.mxu0 0
    %1832 = vmatprep.subr.bf16.mxu0 0
    %1833 = vmatpush1.bf16.msra.mxu0 0
    %1834 = vmatprep.subr.bf16.mxu0 0
    %1835 = vmatpush1.bf16.msra.mxu0 0
    %1836 = vmatprep.subr.bf16.mxu0 0
    %1837 = vmatpush1.bf16.msra.mxu0 0
    %1838 = vmatprep.mubr.bf16.mxu0 0
    %1839 = vmatmul.mubr.bf16.gmra.mrb[0].mxu0 %v1764
    %v1840 = vpop.f32.mrb[0].mxu0
    %v1841 = vadd.f32 %v1529, %v1840
    %v1842 = vpop.f32.mrb[0].mxu0
    %v1843 = vpop.f32.mrb[0].mxu0
    %v1844 = vpop.f32.mrb[0].mxu0
    %1845 = vdwg.mxu0
    %v1846 = vadd.f32 %v1439, %v1800
    %v1847 = vxor.u32 %v1846, 2147483648
    %v1848 = vmul.f32 %v1847, 1.442695
    %v1849 = vpow.pop %v1848
    %v1850 = vadd.f32 %v1849, 1.0
    %v1851 = vrcp.pop %v1850
    %v1852 = vmul.f32 1.0, %v1851
    %v1853 = vadd.f32 %v1440, %v1802
    %v1854 = vxor.u32 %v1853, 2147483648
    %v1855 = vmul.f32 %v1854, 1.442695
    %v1856 = vpow.pop %v1855
    %v1857 = vadd.f32 %v1856, 1.0
    %v1858 = vrcp.pop %v1857
    %v1859 = vmul.f32 1.0, %v1858
    %v1860 = vmul.f32 %v1852, %v1841
    %v1861 = vadd.f32 %v1441, %v1860
    %v1862 = vtanh.pop %v1861
    %v1863 = vsub.f32 1.0, %v1859
    %v1864 = vmul.f32 %v1863, %v1862
    %v1865 = vmul.f32 %v1859, %v1762
    %v1866 = vadd.f32 %v1864, %v1865
    %v1867 = vadd.f32 %v1763, %v1866
    %v1868 = vpack.c.bf16 %v1866, %v1866
    %1869 = vmatprep.subr.bf16.mxu0 %v1614
    %1870 = vmatpush1.bf16.msra.mxu0 %v1613
    %1871 = vmatprep.subr.bf16.mxu0 %v1617
    %1872 = vmatpush1.bf16.msra.mxu0 %v1616
    %1873 = vmatprep.subr.bf16.mxu0 %v1620
    %1874 = vmatpush1.bf16.msra.mxu0 %v1619
    %1875 = vmatprep.subr.bf16.mxu0 %v1623
    %1876 = vmatpush1.bf16.msra.mxu0 %v1622
    %1877 = vmatprep.subr.bf16.mxu0 %v1626
    %1878 = vmatpush1.bf16.msra.mxu0 %v1625
    %1879 = vmatprep.subr.bf16.mxu0 %v1629
    %1880 = vmatpush1.bf16.msra.mxu0 %v1628
    %1881 = vmatprep.subr.bf16.mxu0 %v1632
    %1882 = vmatpush1.bf16.msra.mxu0 %v1631
    %1883 = vmatprep.subr.bf16.mxu0 %v1635
    %1884 = vmatpush1.bf16.msra.mxu0 %v1634
    %1885 = vmatprep.subr.bf16.mxu0 0
    %1886 = vmatpush1.bf16.msra.mxu0 0
    %1887 = vmatprep.subr.bf16.mxu0 0
    %1888 = vmatpush1.bf16.msra.mxu0 0
    %1889 = vmatprep.subr.bf16.mxu0 0
    %1890 = vmatpush1.bf16.msra.mxu0 0
    %1891 = vmatprep.subr.bf16.mxu0 0
    %1892 = vmatpush1.bf16.msra.mxu0 0
    %1893 = vmatprep.subr.bf16.mxu0 0
    %1894 = vmatpush1.bf16.msra.mxu0 0
    %1895 = vmatprep.subr.bf16.mxu0 0
    %1896 = vmatpush1.bf16.msra.mxu0 0
    %1897 = vmatprep.subr.bf16.mxu0 0
    %1898 = vmatpush1.bf16.msra.mxu0 0
    %1899 = vmatprep.subr.bf16.mxu0 0
    %1900 = vmatpush1.bf16.msra.mxu0 0
    %1901 = vmatprep.mubr.bf16.mxu0 0
    %1902 = vmatmul.mubr.bf16.gmra.mrb[0].mxu0 %v1868
    %v1903 = vpop.f32.mrb[0].mxu0
    %v1904 = vadd.f32 %v1521, %v1903
    %v1905 = vpop.f32.mrb[0].mxu0
    %v1906 = vadd.f32 %v1525, %v1905
    %v1907 = vpop.f32.mrb[0].mxu0
    %v1908 = vpop.f32.mrb[0].mxu0
    %1909 = vdwg.mxu0
    %1910 = vmatprep.subr.bf16.mxu0 0
    %1911 = vmatpush1.bf16.msra.mxu0 %v1615
    %1912 = vmatprep.subr.bf16.mxu0 0
    %1913 = vmatpush1.bf16.msra.mxu0 %v1618
    %1914 = vmatprep.subr.bf16.mxu0 0
    %1915 = vmatpush1.bf16.msra.mxu0 %v1621
    %1916 = vmatprep.subr.bf16.mxu0 0
    %1917 = vmatpush1.bf16.msra.mxu0 %v1624
    %1918 = vmatprep.subr.bf16.mxu0 0
    %1919 = vmatpush1.bf16.msra.mxu0 %v1627
    %1920 = vmatprep.subr.bf16.mxu0 0
    %1921 = vmatpush1.bf16.msra.mxu0 %v1630
    %1922 = vmatprep.subr.bf16.mxu0 0
    %1923 = vmatpush1.bf16.msra.mxu0 %v1633
    %1924 = vmatprep.subr.bf16.mxu0 0
    %1925 = vmatpush1.bf16.msra.mxu0 %v1636
    %1926 = vmatprep.subr.bf16.mxu0 0
    %1927 = vmatpush1.bf16.msra.mxu0 0
    %1928 = vmatprep.subr.bf16.mxu0 0
    %1929 = vmatpush1.bf16.msra.mxu0 0
    %1930 = vmatprep.subr.bf16.mxu0 0
    %1931 = vmatpush1.bf16.msra.mxu0 0
    %1932 = vmatprep.subr.bf16.mxu0 0
    %1933 = vmatpush1.bf16.msra.mxu0 0
    %1934 = vmatprep.subr.bf16.mxu0 0
    %1935 = vmatpush1.bf16.msra.mxu0 0
    %1936 = vmatprep.subr.bf16.mxu0 0
    %1937 = vmatpush1.bf16.msra.mxu0 0
    %1938 = vmatprep.subr.bf16.mxu0 0
    %1939 = vmatpush1.bf16.msra.mxu0 0
    %1940 = vmatprep.subr.bf16.mxu0 0
    %1941 = vmatpush1.bf16.msra.mxu0 0
    %1942 = vmatprep.mubr.bf16.mxu0 0
    %1943 = vmatmul.mubr.bf16.gmra.mrb[0].mxu0 %v1868
    %v1944 = vpop.f32.mrb[0].mxu0
    %v1945 = vadd.f32 %v1529, %v1944
    %v1946 = vpop.f32.mrb[0].mxu0
    %v1947 = vpop.f32.mrb[0].mxu0
    %v1948 = vpop.f32.mrb[0].mxu0
    %1949 = vdwg.mxu0
    %v1950 = vadd.f32 %v1442, %v1904
    %v1951 = vxor.u32 %v1950, 2147483648
    %v1952 = vmul.f32 %v1951, 1.442695
    %v1953 = vpow.pop %v1952
    %v1954 = vadd.f32 %v1953, 1.0
    %v1955 = vrcp.pop %v1954
    %v1956 = vmul.f32 1.0, %v1955
    %v1957 = vadd.f32 %v1443, %v1906
    %v1958 = vxor.u32 %v1957, 2147483648
    %v1959 = vmul.f32 %v1958, 1.442695
    %v1960 = vpow.pop %v1959
    %v1961 = vadd.f32 %v1960, 1.0
    %v1962 = vrcp.pop %v1961
    %v1963 = vmul.f32 1.0, %v1962
    %v1964 = vmul.f32 %v1956, %v1945
    %v1965 = vadd.f32 %v1444, %v1964
    %v1966 = vtanh.pop %v1965
    %v1967 = vsub.f32 1.0, %v1963
    %v1968 = vmul.f32 %v1967, %v1966
    %v1969 = vmul.f32 %v1963, %v1866
    %v1970 = vadd.f32 %v1968, %v1969
    %v1971 = vadd.f32 %v1867, %v1970
    %v1972 = vpack.c.bf16 %v1970, %v1970
    %1973 = vmatprep.subr.bf16.mxu0 %v1614
    %1974 = vmatpush1.bf16.msra.mxu0 %v1613
    %1975 = vmatprep.subr.bf16.mxu0 %v1617
    %1976 = vmatpush1.bf16.msra.mxu0 %v1616
    %1977 = vmatprep.subr.bf16.mxu0 %v1620
    %1978 = vmatpush1.bf16.msra.mxu0 %v1619
    %1979 = vmatprep.subr.bf16.mxu0 %v1623
    %1980 = vmatpush1.bf16.msra.mxu0 %v1622
    %1981 = vmatprep.subr.bf16.mxu0 %v1626
    %1982 = vmatpush1.bf16.msra.mxu0 %v1625
    %1983 = vmatprep.subr.bf16.mxu0 %v1629
    %1984 = vmatpush1.bf16.msra.mxu0 %v1628
    %1985 = vmatprep.subr.bf16.mxu0 %v1632
    %1986 = vmatpush1.bf16.msra.mxu0 %v1631
    %1987 = vmatprep.subr.bf16.mxu0 %v1635
    %1988 = vmatpush1.bf16.msra.mxu0 %v1634
    %1989 = vmatprep.subr.bf16.mxu0 0
    %1990 = vmatpush1.bf16.msra.mxu0 0
    %1991 = vmatprep.subr.bf16.mxu0 0
    %1992 = vmatpush1.bf16.msra.mxu0 0
    %1993 = vmatprep.subr.bf16.mxu0 0
    %1994 = vmatpush1.bf16.msra.mxu0 0
    %1995 = vmatprep.subr.bf16.mxu0 0
    %1996 = vmatpush1.bf16.msra.mxu0 0
    %1997 = vmatprep.subr.bf16.mxu0 0
    %1998 = vmatpush1.bf16.msra.mxu0 0
    %1999 = vmatprep.subr.bf16.mxu0 0
    %2000 = vmatpush1.bf16.msra.mxu0 0
    %2001 = vmatprep.subr.bf16.mxu0 0
    %2002 = vmatpush1.bf16.msra.mxu0 0
    %2003 = vmatprep.subr.bf16.mxu0 0
    %2004 = vmatpush1.bf16.msra.mxu0 0
    %2005 = vmatprep.mubr.bf16.mxu0 0
    %2006 = vmatmul.mubr.bf16.gmra.mrb[0].mxu0 %v1972
    %v2007 = vpop.f32.mrb[0].mxu0
    %v2008 = vadd.f32 %v1521, %v2007
    %v2009 = vpop.f32.mrb[0].mxu0
    %v2010 = vadd.f32 %v1525, %v2009
    %v2011 = vpop.f32.mrb[0].mxu0
    %v2012 = vpop.f32.mrb[0].mxu0
    %2013 = vdwg.mxu0
    %2014 = vmatprep.subr.bf16.mxu0 0
    %2015 = vmatpush1.bf16.msra.mxu0 %v1615
    %2016 = vmatprep.subr.bf16.mxu0 0
    %2017 = vmatpush1.bf16.msra.mxu0 %v1618
    %2018 = vmatprep.subr.bf16.mxu0 0
    %2019 = vmatpush1.bf16.msra.mxu0 %v1621
    %2020 = vmatprep.subr.bf16.mxu0 0
    %2021 = vmatpush1.bf16.msra.mxu0 %v1624
    %2022 = vmatprep.subr.bf16.mxu0 0
    %2023 = vmatpush1.bf16.msra.mxu0 %v1627
    %2024 = vmatprep.subr.bf16.mxu0 0
    %2025 = vmatpush1.bf16.msra.mxu0 %v1630
    %2026 = vmatprep.subr.bf16.mxu0 0
    %2027 = vmatpush1.bf16.msra.mxu0 %v1633
    %2028 = vmatprep.subr.bf16.mxu0 0
    %2029 = vmatpush1.bf16.msra.mxu0 %v1636
    %2030 = vmatprep.subr.bf16.mxu0 0
    %2031 = vmatpush1.bf16.msra.mxu0 0
    %2032 = vmatprep.subr.bf16.mxu0 0
    %2033 = vmatpush1.bf16.msra.mxu0 0
    %2034 = vmatprep.subr.bf16.mxu0 0
    %2035 = vmatpush1.bf16.msra.mxu0 0
    %2036 = vmatprep.subr.bf16.mxu0 0
    %2037 = vmatpush1.bf16.msra.mxu0 0
    %2038 = vmatprep.subr.bf16.mxu0 0
    %2039 = vmatpush1.bf16.msra.mxu0 0
    %2040 = vmatprep.subr.bf16.mxu0 0
    %2041 = vmatpush1.bf16.msra.mxu0 0
    %2042 = vmatprep.subr.bf16.mxu0 0
    %2043 = vmatpush1.bf16.msra.mxu0 0
    %2044 = vmatprep.subr.bf16.mxu0 0
    %2045 = vmatpush1.bf16.msra.mxu0 0
    %2046 = vmatprep.mubr.bf16.mxu0 0
    %2047 = vmatmul.mubr.bf16.gmra.mrb[0].mxu0 %v1972
    %v2048 = vpop.f32.mrb[0].mxu0
    %v2049 = vadd.f32 %v1529, %v2048
    %v2050 = vpop.f32.mrb[0].mxu0
    %v2051 = vpop.f32.mrb[0].mxu0
    %v2052 = vpop.f32.mrb[0].mxu0
    %2053 = vdwg.mxu0
    %v2054 = vadd.f32 %v1445, %v2008
    %v2055 = vxor.u32 %v2054, 2147483648
    %v2056 = vmul.f32 %v2055, 1.442695
    %v2057 = vpow.pop %v2056
    %v2058 = vadd.f32 %v2057, 1.0
    %v2059 = vrcp.pop %v2058
    %v2060 = vmul.f32 1.0, %v2059
    %v2061 = vadd.f32 %v1446, %v2010
    %v2062 = vxor.u32 %v2061, 2147483648
    %v2063 = vmul.f32 %v2062, 1.442695
    %v2064 = vpow.pop %v2063
    %v2065 = vadd.f32 %v2064, 1.0
    %v2066 = vrcp.pop %v2065
    %v2067 = vmul.f32 1.0, %v2066
    %v2068 = vmul.f32 %v2060, %v2049
    %v2069 = vadd.f32 %v1447, %v2068
    %v2070 = vtanh.pop %v2069
    %v2071 = vsub.f32 1.0, %v2067
    %v2072 = vmul.f32 %v2071, %v2070
    %v2073 = vmul.f32 %v2067, %v1970
    %v2074 = vadd.f32 %v2072, %v2073
    %v2075 = vadd.f32 %v1971, %v2074
    %v2076 = vpack.c.bf16 %v2074, %v2074
    %2077 = vmatprep.subr.bf16.mxu0 %v1614
    %2078 = vmatpush1.bf16.msra.mxu0 %v1613
    %2079 = vmatprep.subr.bf16.mxu0 %v1617
    %2080 = vmatpush1.bf16.msra.mxu0 %v1616
    %2081 = vmatprep.subr.bf16.mxu0 %v1620
    %2082 = vmatpush1.bf16.msra.mxu0 %v1619
    %2083 = vmatprep.subr.bf16.mxu0 %v1623
    %2084 = vmatpush1.bf16.msra.mxu0 %v1622
    %2085 = vmatprep.subr.bf16.mxu0 %v1626
    %2086 = vmatpush1.bf16.msra.mxu0 %v1625
    %2087 = vmatprep.subr.bf16.mxu0 %v1629
    %2088 = vmatpush1.bf16.msra.mxu0 %v1628
    %2089 = vmatprep.subr.bf16.mxu0 %v1632
    %2090 = vmatpush1.bf16.msra.mxu0 %v1631
    %2091 = vmatprep.subr.bf16.mxu0 %v1635
    %2092 = vmatpush1.bf16.msra.mxu0 %v1634
    %2093 = vmatprep.subr.bf16.mxu0 0
    %2094 = vmatpush1.bf16.msra.mxu0 0
    %2095 = vmatprep.subr.bf16.mxu0 0
    %2096 = vmatpush1.bf16.msra.mxu0 0
    %2097 = vmatprep.subr.bf16.mxu0 0
    %2098 = vmatpush1.bf16.msra.mxu0 0
    %2099 = vmatprep.subr.bf16.mxu0 0
    %2100 = vmatpush1.bf16.msra.mxu0 0
    %2101 = vmatprep.subr.bf16.mxu0 0
    %2102 = vmatpush1.bf16.msra.mxu0 0
    %2103 = vmatprep.subr.bf16.mxu0 0
    %2104 = vmatpush1.bf16.msra.mxu0 0
    %2105 = vmatprep.subr.bf16.mxu0 0
    %2106 = vmatpush1.bf16.msra.mxu0 0
    %2107 = vmatprep.subr.bf16.mxu0 0
    %2108 = vmatpush1.bf16.msra.mxu0 0
    %2109 = vmatprep.mubr.bf16.mxu0 0
    %2110 = vmatmul.mubr.bf16.gmra.mrb[0].mxu0 %v2076
    %v2111 = vpop.f32.mrb[0].mxu0
    %v2112 = vadd.f32 %v1521, %v2111
    %v2113 = vpop.f32.mrb[0].mxu0
    %v2114 = vadd.f32 %v1525, %v2113
    %v2115 = vpop.f32.mrb[0].mxu0
    %v2116 = vpop.f32.mrb[0].mxu0
    %2117 = vdwg.mxu0
    %2118 = vmatprep.subr.bf16.mxu0 0
    %2119 = vmatpush1.bf16.msra.mxu0 %v1615
    %2120 = vmatprep.subr.bf16.mxu0 0
    %2121 = vmatpush1.bf16.msra.mxu0 %v1618
    %2122 = vmatprep.subr.bf16.mxu0 0
    %2123 = vmatpush1.bf16.msra.mxu0 %v1621
    %2124 = vmatprep.subr.bf16.mxu0 0
    %2125 = vmatpush1.bf16.msra.mxu0 %v1624
    %2126 = vmatprep.subr.bf16.mxu0 0
    %2127 = vmatpush1.bf16.msra.mxu0 %v1627
    %2128 = vmatprep.subr.bf16.mxu0 0
    %2129 = vmatpush1.bf16.msra.mxu0 %v1630
    %2130 = vmatprep.subr.bf16.mxu0 0
    %2131 = vmatpush1.bf16.msra.mxu0 %v1633
    %2132 = vmatprep.subr.bf16.mxu0 0
    %2133 = vmatpush1.bf16.msra.mxu0 %v1636
    %2134 = vmatprep.subr.bf16.mxu0 0
    %2135 = vmatpush1.bf16.msra.mxu0 0
    %2136 = vmatprep.subr.bf16.mxu0 0
    %2137 = vmatpush1.bf16.msra.mxu0 0
    %2138 = vmatprep.subr.bf16.mxu0 0
    %2139 = vmatpush1.bf16.msra.mxu0 0
    %2140 = vmatprep.subr.bf16.mxu0 0
    %2141 = vmatpush1.bf16.msra.mxu0 0
    %2142 = vmatprep.subr.bf16.mxu0 0
    %2143 = vmatpush1.bf16.msra.mxu0 0
    %2144 = vmatprep.subr.bf16.mxu0 0
    %2145 = vmatpush1.bf16.msra.mxu0 0
    %2146 = vmatprep.subr.bf16.mxu0 0
    %2147 = vmatpush1.bf16.msra.mxu0 0
    %2148 = vmatprep.subr.bf16.mxu0 0
    %2149 = vmatpush1.bf16.msra.mxu0 0
    %2150 = vmatprep.mubr.bf16.mxu0 0
    %2151 = vmatmul.mubr.bf16.gmra.mrb[0].mxu0 %v2076
    %v2152 = vpop.f32.mrb[0].mxu0
    %v2153 = vadd.f32 %v1529, %v2152
    %v2154 = vpop.f32.mrb[0].mxu0
    %v2155 = vpop.f32.mrb[0].mxu0
    %v2156 = vpop.f32.mrb[0].mxu0
    %2157 = vdwg.mxu0
    %v2158 = vadd.f32 %v1448, %v2112
    %v2159 = vxor.u32 %v2158, 2147483648
    %v2160 = vmul.f32 %v2159, 1.442695
    %v2161 = vpow.pop %v2160
    %v2162 = vadd.f32 %v2161, 1.0
    %v2163 = vrcp.pop %v2162
    %v2164 = vmul.f32 1.0, %v2163
    %v2165 = vadd.f32 %v1449, %v2114
    %v2166 = vxor.u32 %v2165, 2147483648
    %v2167 = vmul.f32 %v2166, 1.442695
    %v2168 = vpow.pop %v2167
    %v2169 = vadd.f32 %v2168, 1.0
    %v2170 = vrcp.pop %v2169
    %v2171 = vmul.f32 1.0, %v2170
    %v2172 = vmul.f32 %v2164, %v2153
    %v2173 = vadd.f32 %v1450, %v2172
    %v2174 = vtanh.pop %v2173
    %v2175 = vsub.f32 1.0, %v2171
    %v2176 = vmul.f32 %v2175, %v2174
    %v2177 = vmul.f32 %v2171, %v2074
    %v2178 = vadd.f32 %v2176, %v2177
    %v2179 = vadd.f32 %v2075, %v2178
    %v2180 = vpack.c.bf16 %v2178, %v2178
    %2181 = vmatprep.subr.bf16.mxu0 %v1614
    %2182 = vmatpush1.bf16.msra.mxu0 %v1613
    %2183 = vmatprep.subr.bf16.mxu0 %v1617
    %2184 = vmatpush1.bf16.msra.mxu0 %v1616
    %2185 = vmatprep.subr.bf16.mxu0 %v1620
    %2186 = vmatpush1.bf16.msra.mxu0 %v1619
    %2187 = vmatprep.subr.bf16.mxu0 %v1623
    %2188 = vmatpush1.bf16.msra.mxu0 %v1622
    %2189 = vmatprep.subr.bf16.mxu0 %v1626
    %2190 = vmatpush1.bf16.msra.mxu0 %v1625
    %2191 = vmatprep.subr.bf16.mxu0 %v1629
    %2192 = vmatpush1.bf16.msra.mxu0 %v1628
    %2193 = vmatprep.subr.bf16.mxu0 %v1632
    %2194 = vmatpush1.bf16.msra.mxu0 %v1631
    %2195 = vmatprep.subr.bf16.mxu0 %v1635
    %2196 = vmatpush1.bf16.msra.mxu0 %v1634
    %2197 = vmatprep.subr.bf16.mxu0 0
    %2198 = vmatpush1.bf16.msra.mxu0 0
    %2199 = vmatprep.subr.bf16.mxu0 0
    %2200 = vmatpush1.bf16.msra.mxu0 0
    %2201 = vmatprep.subr.bf16.mxu0 0
    %2202 = vmatpush1.bf16.msra.mxu0 0
    %2203 = vmatprep.subr.bf16.mxu0 0
    %2204 = vmatpush1.bf16.msra.mxu0 0
    %2205 = vmatprep.subr.bf16.mxu0 0
    %2206 = vmatpush1.bf16.msra.mxu0 0
    %2207 = vmatprep.subr.bf16.mxu0 0
    %2208 = vmatpush1.bf16.msra.mxu0 0
    %2209 = vmatprep.subr.bf16.mxu0 0
    %2210 = vmatpush1.bf16.msra.mxu0 0
    %2211 = vmatprep.subr.bf16.mxu0 0
    %2212 = vmatpush1.bf16.msra.mxu0 0
    %2213 = vmatprep.mubr.bf16.mxu0 0
    %2214 = vmatmul.mubr.bf16.gmra.mrb[0].mxu0 %v2180
    %v2215 = vpop.f32.mrb[0].mxu0
    %v2216 = vadd.f32 %v1521, %v2215
    %v2217 = vpop.f32.mrb[0].mxu0
    %v2218 = vadd.f32 %v1525, %v2217
    %v2219 = vpop.f32.mrb[0].mxu0
    %v2220 = vpop.f32.mrb[0].mxu0
    %2221 = vdwg.mxu0
    %2222 = vmatprep.subr.bf16.mxu0 0
    %2223 = vmatpush1.bf16.msra.mxu0 %v1615
    %2224 = vmatprep.subr.bf16.mxu0 0
    %2225 = vmatpush1.bf16.msra.mxu0 %v1618
    %2226 = vmatprep.subr.bf16.mxu0 0
    %2227 = vmatpush1.bf16.msra.mxu0 %v1621
    %2228 = vmatprep.subr.bf16.mxu0 0
    %2229 = vmatpush1.bf16.msra.mxu0 %v1624
    %2230 = vmatprep.subr.bf16.mxu0 0
    %2231 = vmatpush1.bf16.msra.mxu0 %v1627
    %2232 = vmatprep.subr.bf16.mxu0 0
    %2233 = vmatpush1.bf16.msra.mxu0 %v1630
    %2234 = vmatprep.subr.bf16.mxu0 0
    %2235 = vmatpush1.bf16.msra.mxu0 %v1633
    %2236 = vmatprep.subr.bf16.mxu0 0
    %2237 = vmatpush1.bf16.msra.mxu0 %v1636
    %2238 = vmatprep.subr.bf16.mxu0 0
    %2239 = vmatpush1.bf16.msra.mxu0 0
    %2240 = vmatprep.subr.bf16.mxu0 0
    %2241 = vmatpush1.bf16.msra.mxu0 0
    %2242 = vmatprep.subr.bf16.mxu0 0
    %2243 = vmatpush1.bf16.msra.mxu0 0
    %2244 = vmatprep.subr.bf16.mxu0 0
    %2245 = vmatpush1.bf16.msra.mxu0 0
    %2246 = vmatprep.subr.bf16.mxu0 0
    %2247 = vmatpush1.bf16.msra.mxu0 0
    %2248 = vmatprep.subr.bf16.mxu0 0
    %2249 = vmatpush1.bf16.msra.mxu0 0
    %2250 = vmatprep.subr.bf16.mxu0 0
    %2251 = vmatpush1.bf16.msra.mxu0 0
    %2252 = vmatprep.subr.bf16.mxu0 0
    %2253 = vmatpush1.bf16.msra.mxu0 0
    %2254 = vmatprep.mubr.bf16.mxu0 0
    %2255 = vmatmul.mubr.bf16.gmra.mrb[0].mxu0 %v2180
    %v2256 = vpop.f32.mrb[0].mxu0
    %v2257 = vadd.f32 %v1529, %v2256
    %v2258 = vpop.f32.mrb[0].mxu0
    %v2259 = vpop.f32.mrb[0].mxu0
    %v2260 = vpop.f32.mrb[0].mxu0
    %2261 = vdwg.mxu0
    %v2262 = vadd.f32 %v1451, %v2216
    %v2263 = vxor.u32 %v2262, 2147483648
    %v2264 = vmul.f32 %v2263, 1.442695
    %v2265 = vpow.pop %v2264
    %v2266 = vadd.f32 %v2265, 1.0
    %v2267 = vrcp.pop %v2266
    %v2268 = vmul.f32 1.0, %v2267
    %v2269 = vadd.f32 %v1452, %v2218
    %v2270 = vxor.u32 %v2269, 2147483648
    %v2271 = vmul.f32 %v2270, 1.442695
    %v2272 = vpow.pop %v2271
    %v2273 = vadd.f32 %v2272, 1.0
    %v2274 = vrcp.pop %v2273
    %v2275 = vmul.f32 1.0, %v2274
    %v2276 = vmul.f32 %v2268, %v2257
    %v2277 = vadd.f32 %v1453, %v2276
    %v2278 = vtanh.pop %v2277
    %v2279 = vsub.f32 1.0, %v2275
    %v2280 = vmul.f32 %v2279, %v2278
    %v2281 = vmul.f32 %v2275, %v2178
    %v2282 = vadd.f32 %v2280, %v2281
    %v2283 = vadd.f32 %v2179, %v2282
    %v2284 = vpack.c.bf16 %v2282, %v2282
    %2285 = vmatprep.subr.bf16.mxu0 %v1614
    %2286 = vmatpush1.bf16.msra.mxu0 %v1613
    %2287 = vmatprep.subr.bf16.mxu0 %v1617
    %2288 = vmatpush1.bf16.msra.mxu0 %v1616
    %2289 = vmatprep.subr.bf16.mxu0 %v1620
    %2290 = vmatpush1.bf16.msra.mxu0 %v1619
    %2291 = vmatprep.subr.bf16.mxu0 %v1623
    %2292 = vmatpush1.bf16.msra.mxu0 %v1622
    %2293 = vmatprep.subr.bf16.mxu0 %v1626
    %2294 = vmatpush1.bf16.msra.mxu0 %v1625
    %2295 = vmatprep.subr.bf16.mxu0 %v1629
    %2296 = vmatpush1.bf16.msra.mxu0 %v1628
    %2297 = vmatprep.subr.bf16.mxu0 %v1632
    %2298 = vmatpush1.bf16.msra.mxu0 %v1631
    %2299 = vmatprep.subr.bf16.mxu0 %v1635
    %2300 = vmatpush1.bf16.msra.mxu0 %v1634
    %2301 = vmatprep.subr.bf16.mxu0 0
    %2302 = vmatpush1.bf16.msra.mxu0 0
    %2303 = vmatprep.subr.bf16.mxu0 0
    %2304 = vmatpush1.bf16.msra.mxu0 0
    %2305 = vmatprep.subr.bf16.mxu0 0
    %2306 = vmatpush1.bf16.msra.mxu0 0
    %2307 = vmatprep.subr.bf16.mxu0 0
    %2308 = vmatpush1.bf16.msra.mxu0 0
    %2309 = vmatprep.subr.bf16.mxu0 0
    %2310 = vmatpush1.bf16.msra.mxu0 0
    %2311 = vmatprep.subr.bf16.mxu0 0
    %2312 = vmatpush1.bf16.msra.mxu0 0
    %2313 = vmatprep.subr.bf16.mxu0 0
    %2314 = vmatpush1.bf16.msra.mxu0 0
    %2315 = vmatprep.subr.bf16.mxu0 0
    %2316 = vmatpush1.bf16.msra.mxu0 0
    %2317 = vmatprep.mubr.bf16.mxu0 0
    %2318 = vmatmul.mubr.bf16.gmra.mrb[0].mxu0 %v2284
    %v2319 = vpop.f32.mrb[0].mxu0
    %v2320 = vadd.f32 %v1521, %v2319
    %v2321 = vpop.f32.mrb[0].mxu0
    %v2322 = vadd.f32 %v1525, %v2321
    %v2323 = vpop.f32.mrb[0].mxu0
    %v2324 = vpop.f32.mrb[0].mxu0
    %2325 = vdwg.mxu0
    %2326 = vmatprep.subr.bf16.mxu0 0
    %2327 = vmatpush1.bf16.msra.mxu0 %v1615
    %2328 = vmatprep.subr.bf16.mxu0 0
    %2329 = vmatpush1.bf16.msra.mxu0 %v1618
    %2330 = vmatprep.subr.bf16.mxu0 0
    %2331 = vmatpush1.bf16.msra.mxu0 %v1621
    %2332 = vmatprep.subr.bf16.mxu0 0
    %2333 = vmatpush1.bf16.msra.mxu0 %v1624
    %2334 = vmatprep.subr.bf16.mxu0 0
    %2335 = vmatpush1.bf16.msra.mxu0 %v1627
    %2336 = vmatprep.subr.bf16.mxu0 0
    %2337 = vmatpush1.bf16.msra.mxu0 %v1630
    %2338 = vmatprep.subr.bf16.mxu0 0
    %2339 = vmatpush1.bf16.msra.mxu0 %v1633
    %2340 = vmatprep.subr.bf16.mxu0 0
    %2341 = vmatpush1.bf16.msra.mxu0 %v1636
    %2342 = vmatprep.subr.bf16.mxu0 0
    %2343 = vmatpush1.bf16.msra.mxu0 0
    %2344 = vmatprep.subr.bf16.mxu0 0
    %2345 = vmatpush1.bf16.msra.mxu0 0
    %2346 = vmatprep.subr.bf16.mxu0 0
    %2347 = vmatpush1.bf16.msra.mxu0 0
    %2348 = vmatprep.subr.bf16.mxu0 0
    %2349 = vmatpush1.bf16.msra.mxu0 0
    %2350 = vmatprep.subr.bf16.mxu0 0
    %2351 = vmatpush1.bf16.msra.mxu0 0
    %2352 = vmatprep.subr.bf16.mxu0 0
    %2353 = vmatpush1.bf16.msra.mxu0 0
    %2354 = vmatprep.subr.bf16.mxu0 0
    %2355 = vmatpush1.bf16.msra.mxu0 0
    %2356 = vmatprep.subr.bf16.mxu0 0
    %2357 = vmatpush1.bf16.msra.mxu0 0
    %2358 = vmatprep.mubr.bf16.mxu0 0
    %2359 = vmatmul.mubr.bf16.gmra.mrb[0].mxu0 %v2284
    %v2360 = vpop.f32.mrb[0].mxu0
    %v2361 = vadd.f32 %v1529, %v2360
    %v2362 = vpop.f32.mrb[0].mxu0
    %v2363 = vpop.f32.mrb[0].mxu0
    %v2364 = vpop.f32.mrb[0].mxu0
    %2365 = vdwg.mxu0
    %v2366 = vadd.f32 %v1454, %v2320
    %v2367 = vxor.u32 %v2366, 2147483648
    %v2368 = vmul.f32 %v2367, 1.442695
    %v2369 = vpow.pop %v2368
    %v2370 = vadd.f32 %v2369, 1.0
    %v2371 = vrcp.pop %v2370
    %v2372 = vmul.f32 1.0, %v2371
    %v2373 = vadd.f32 %v1455, %v2322
    %v2374 = vxor.u32 %v2373, 2147483648
    %v2375 = vmul.f32 %v2374, 1.442695
    %v2376 = vpow.pop %v2375
    %v2377 = vadd.f32 %v2376, 1.0
    %v2378 = vrcp.pop %v2377
    %v2379 = vmul.f32 1.0, %v2378
    %v2380 = vmul.f32 %v2372, %v2361
    %v2381 = vadd.f32 %v1456, %v2380
    %v2382 = vtanh.pop %v2381
    %v2383 = vsub.f32 1.0, %v2379
    %v2384 = vmul.f32 %v2383, %v2382
    %v2385 = vmul.f32 %v2379, %v2282
    %v2386 = vadd.f32 %v2384, %v2385
    %v2387 = vadd.f32 %v2283, %v2386
    %v2388 = vpack.c.bf16 %v2386, %v2386
    %2389 = vmatprep.subr.bf16.mxu0 %v1614
    %2390 = vmatpush1.bf16.msra.mxu0 %v1613
    %2391 = vmatprep.subr.bf16.mxu0 %v1617
    %2392 = vmatpush1.bf16.msra.mxu0 %v1616
    %2393 = vmatprep.subr.bf16.mxu0 %v1620
    %2394 = vmatpush1.bf16.msra.mxu0 %v1619
    %2395 = vmatprep.subr.bf16.mxu0 %v1623
    %2396 = vmatpush1.bf16.msra.mxu0 %v1622
    %2397 = vmatprep.subr.bf16.mxu0 %v1626
    %2398 = vmatpush1.bf16.msra.mxu0 %v1625
    %2399 = vmatprep.subr.bf16.mxu0 %v1629
    %2400 = vmatpush1.bf16.msra.mxu0 %v1628
    %2401 = vmatprep.subr.bf16.mxu0 %v1632
    %2402 = vmatpush1.bf16.msra.mxu0 %v1631
    %2403 = vmatprep.subr.bf16.mxu0 %v1635
    %2404 = vmatpush1.bf16.msra.mxu0 %v1634
    %2405 = vmatprep.subr.bf16.mxu0 0
    %2406 = vmatpush1.bf16.msra.mxu0 0
    %2407 = vmatprep.subr.bf16.mxu0 0
    %2408 = vmatpush1.bf16.msra.mxu0 0
    %2409 = vmatprep.subr.bf16.mxu0 0
    %2410 = vmatpush1.bf16.msra.mxu0 0
    %2411 = vmatprep.subr.bf16.mxu0 0
    %2412 = vmatpush1.bf16.msra.mxu0 0
    %2413 = vmatprep.subr.bf16.mxu0 0
    %2414 = vmatpush1.bf16.msra.mxu0 0
    %2415 = vmatprep.subr.bf16.mxu0 0
    %2416 = vmatpush1.bf16.msra.mxu0 0
    %2417 = vmatprep.subr.bf16.mxu0 0
    %2418 = vmatpush1.bf16.msra.mxu0 0
    %2419 = vmatprep.subr.bf16.mxu0 0
    %2420 = vmatpush1.bf16.msra.mxu0 0
    %2421 = vmatprep.mubr.bf16.mxu0 0
    %2422 = vmatmul.mubr.bf16.gmra.mrb[0].mxu0 %v2388
    %v2423 = vpop.f32.mrb[0].mxu0
    %v2424 = vadd.f32 %v1521, %v2423
    %v2425 = vpop.f32.mrb[0].mxu0
    %v2426 = vadd.f32 %v1525, %v2425
    %v2427 = vpop.f32.mrb[0].mxu0
    %v2428 = vpop.f32.mrb[0].mxu0
    %2429 = vdwg.mxu0
    %2430 = vmatprep.subr.bf16.mxu0 0
    %2431 = vmatpush1.bf16.msra.mxu0 %v1615
    %2432 = vmatprep.subr.bf16.mxu0 0
    %2433 = vmatpush1.bf16.msra.mxu0 %v1618
    %2434 = vmatprep.subr.bf16.mxu0 0
    %2435 = vmatpush1.bf16.msra.mxu0 %v1621
    %2436 = vmatprep.subr.bf16.mxu0 0
    %2437 = vmatpush1.bf16.msra.mxu0 %v1624
    %2438 = vmatprep.subr.bf16.mxu0 0
    %2439 = vmatpush1.bf16.msra.mxu0 %v1627
    %2440 = vmatprep.subr.bf16.mxu0 0
    %2441 = vmatpush1.bf16.msra.mxu0 %v1630
    %2442 = vmatprep.subr.bf16.mxu0 0
    %2443 = vmatpush1.bf16.msra.mxu0 %v1633
    %2444 = vmatprep.subr.bf16.mxu0 0
    %2445 = vmatpush1.bf16.msra.mxu0 %v1636
    %2446 = vmatprep.subr.bf16.mxu0 0
    %2447 = vmatpush1.bf16.msra.mxu0 0
    %2448 = vmatprep.subr.bf16.mxu0 0
    %2449 = vmatpush1.bf16.msra.mxu0 0
    %2450 = vmatprep.subr.bf16.mxu0 0
    %2451 = vmatpush1.bf16.msra.mxu0 0
    %2452 = vmatprep.subr.bf16.mxu0 0
    %2453 = vmatpush1.bf16.msra.mxu0 0
    %2454 = vmatprep.subr.bf16.mxu0 0
    %2455 = vmatpush1.bf16.msra.mxu0 0
    %2456 = vmatprep.subr.bf16.mxu0 0
    %2457 = vmatpush1.bf16.msra.mxu0 0
    %2458 = vmatprep.subr.bf16.mxu0 0
    %2459 = vmatpush1.bf16.msra.mxu0 0
    %2460 = vmatprep.subr.bf16.mxu0 0
    %2461 = vmatpush1.bf16.msra.mxu0 0
    %2462 = vmatprep.mubr.bf16.mxu0 0
    %2463 = vmatmul.mubr.bf16.gmra.mrb[0].mxu0 %v2388
    %v2464 = vpop.f32.mrb[0].mxu0
    %v2465 = vadd.f32 %v1529, %v2464
    %v2466 = vpop.f32.mrb[0].mxu0
    %v2467 = vpop.f32.mrb[0].mxu0
    %v2468 = vpop.f32.mrb[0].mxu0
    %2469 = vdwg.mxu0
    %v2470 = vadd.f32 %v1457, %v2424
    %v2471 = vxor.u32 %v2470, 2147483648
    %v2472 = vmul.f32 %v2471, 1.442695
    %v2473 = vpow.pop %v2472
    %v2474 = vadd.f32 %v2473, 1.0
    %v2475 = vrcp.pop %v2474
    %v2476 = vmul.f32 1.0, %v2475
    %v2477 = vadd.f32 %v1458, %v2426
    %v2478 = vxor.u32 %v2477, 2147483648
    %v2479 = vmul.f32 %v2478, 1.442695
    %v2480 = vpow.pop %v2479
    %v2481 = vadd.f32 %v2480, 1.0
    %v2482 = vrcp.pop %v2481
    %v2483 = vmul.f32 1.0, %v2482
    %v2484 = vmul.f32 %v2476, %v2465
    %v2485 = vadd.f32 %v1459, %v2484
    %v2486 = vtanh.pop %v2485
    %v2487 = vsub.f32 1.0, %v2483
    %v2488 = vmul.f32 %v2487, %v2486
    %v2489 = vmul.f32 %v2483, %v2386
    %v2490 = vadd.f32 %v2488, %v2489
    %v2491 = vadd.f32 %v2387, %v2490
    %v2492 = vpack.c.bf16 %v2490, %v2490
    %2493 = vmatprep.subr.bf16.mxu0 %v1614
    %2494 = vmatpush1.bf16.msra.mxu0 %v1613
    %2495 = vmatprep.subr.bf16.mxu0 %v1617
    %2496 = vmatpush1.bf16.msra.mxu0 %v1616
    %2497 = vmatprep.subr.bf16.mxu0 %v1620
    %2498 = vmatpush1.bf16.msra.mxu0 %v1619
    %2499 = vmatprep.subr.bf16.mxu0 %v1623
    %2500 = vmatpush1.bf16.msra.mxu0 %v1622
    %2501 = vmatprep.subr.bf16.mxu0 %v1626
    %2502 = vmatpush1.bf16.msra.mxu0 %v1625
    %2503 = vmatprep.subr.bf16.mxu0 %v1629
    %2504 = vmatpush1.bf16.msra.mxu0 %v1628
    %2505 = vmatprep.subr.bf16.mxu0 %v1632
    %2506 = vmatpush1.bf16.msra.mxu0 %v1631
    %2507 = vmatprep.subr.bf16.mxu0 %v1635
    %2508 = vmatpush1.bf16.msra.mxu0 %v1634
    %2509 = vmatprep.subr.bf16.mxu0 0
    %2510 = vmatpush1.bf16.msra.mxu0 0
    %2511 = vmatprep.subr.bf16.mxu0 0
    %2512 = vmatpush1.bf16.msra.mxu0 0
    %2513 = vmatprep.subr.bf16.mxu0 0
    %2514 = vmatpush1.bf16.msra.mxu0 0
    %2515 = vmatprep.subr.bf16.mxu0 0
    %2516 = vmatpush1.bf16.msra.mxu0 0
    %2517 = vmatprep.subr.bf16.mxu0 0
    %2518 = vmatpush1.bf16.msra.mxu0 0
    %2519 = vmatprep.subr.bf16.mxu0 0
    %2520 = vmatpush1.bf16.msra.mxu0 0
    %2521 = vmatprep.subr.bf16.mxu0 0
    %2522 = vmatpush1.bf16.msra.mxu0 0
    %2523 = vmatprep.subr.bf16.mxu0 0
    %2524 = vmatpush1.bf16.msra.mxu0 0
    %2525 = vmatprep.mubr.bf16.mxu0 0
    %2526 = vmatmul.mubr.bf16.gmra.mrb[0].mxu0 %v2492
    %v2527 = vpop.f32.mrb[0].mxu0
    %v2528 = vadd.f32 %v1521, %v2527
    %v2529 = vpop.f32.mrb[0].mxu0
    %v2530 = vadd.f32 %v1525, %v2529
    %v2531 = vpop.f32.mrb[0].mxu0
    %v2532 = vpop.f32.mrb[0].mxu0
    %2533 = vdwg.mxu0
    %2534 = vmatprep.subr.bf16.mxu0 0
    %2535 = vmatpush1.bf16.msra.mxu0 %v1615
    %2536 = vmatprep.subr.bf16.mxu0 0
    %2537 = vmatpush1.bf16.msra.mxu0 %v1618
    %2538 = vmatprep.subr.bf16.mxu0 0
    %2539 = vmatpush1.bf16.msra.mxu0 %v1621
    %2540 = vmatprep.subr.bf16.mxu0 0
    %2541 = vmatpush1.bf16.msra.mxu0 %v1624
    %2542 = vmatprep.subr.bf16.mxu0 0
    %2543 = vmatpush1.bf16.msra.mxu0 %v1627
    %2544 = vmatprep.subr.bf16.mxu0 0
    %2545 = vmatpush1.bf16.msra.mxu0 %v1630
    %2546 = vmatprep.subr.bf16.mxu0 0
    %2547 = vmatpush1.bf16.msra.mxu0 %v1633
    %2548 = vmatprep.subr.bf16.mxu0 0
    %2549 = vmatpush1.bf16.msra.mxu0 %v1636
    %2550 = vmatprep.subr.bf16.mxu0 0
    %2551 = vmatpush1.bf16.msra.mxu0 0
    %2552 = vmatprep.subr.bf16.mxu0 0
    %2553 = vmatpush1.bf16.msra.mxu0 0
    %2554 = vmatprep.subr.bf16.mxu0 0
    %2555 = vmatpush1.bf16.msra.mxu0 0
    %2556 = vmatprep.subr.bf16.mxu0 0
    %2557 = vmatpush1.bf16.msra.mxu0 0
    %2558 = vmatprep.subr.bf16.mxu0 0
    %2559 = vmatpush1.bf16.msra.mxu0 0
    %2560 = vmatprep.subr.bf16.mxu0 0
    %2561 = vmatpush1.bf16.msra.mxu0 0
    %2562 = vmatprep.subr.bf16.mxu0 0
    %2563 = vmatpush1.bf16.msra.mxu0 0
    %2564 = vmatprep.subr.bf16.mxu0 0
    %2565 = vmatpush1.bf16.msra.mxu0 0
    %2566 = vmatprep.mubr.bf16.mxu0 0
    %2567 = vmatmul.mubr.bf16.gmra.mrb[0].mxu0 %v2492
    %v2568 = vpop.f32.mrb[0].mxu0
    %v2569 = vadd.f32 %v1529, %v2568
    %v2570 = vpop.f32.mrb[0].mxu0
    %v2571 = vpop.f32.mrb[0].mxu0
    %v2572 = vpop.f32.mrb[0].mxu0
    %2573 = vdwg.mxu0
    %v2574 = vadd.f32 %v1460, %v2528
    %v2575 = vxor.u32 %v2574, 2147483648
    %v2576 = vmul.f32 %v2575, 1.442695
    %v2577 = vpow.pop %v2576
    %v2578 = vadd.f32 %v2577, 1.0
    %v2579 = vrcp.pop %v2578
    %v2580 = vmul.f32 1.0, %v2579
    %v2581 = vadd.f32 %v1461, %v2530
    %v2582 = vxor.u32 %v2581, 2147483648
    %v2583 = vmul.f32 %v2582, 1.442695
    %v2584 = vpow.pop %v2583
    %v2585 = vadd.f32 %v2584, 1.0
    %v2586 = vrcp.pop %v2585
    %v2587 = vmul.f32 1.0, %v2586
    %v2588 = vmul.f32 %v2580, %v2569
    %v2589 = vadd.f32 %v1462, %v2588
    %v2590 = vtanh.pop %v2589
    %v2591 = vsub.f32 1.0, %v2587
    %v2592 = vmul.f32 %v2591, %v2590
    %v2593 = vmul.f32 %v2587, %v2490
    %v2594 = vadd.f32 %v2592, %v2593
    %v2595 = vadd.f32 %v2491, %v2594
    %v2596 = vpack.c.bf16 %v2594, %v2594
    %2597 = vmatprep.subr.bf16.mxu0 %v1614
    %2598 = vmatpush1.bf16.msra.mxu0 %v1613
    %2599 = vmatprep.subr.bf16.mxu0 %v1617
    %2600 = vmatpush1.bf16.msra.mxu0 %v1616
    %2601 = vmatprep.subr.bf16.mxu0 %v1620
    %2602 = vmatpush1.bf16.msra.mxu0 %v1619
    %2603 = vmatprep.subr.bf16.mxu0 %v1623
    %2604 = vmatpush1.bf16.msra.mxu0 %v1622
    %2605 = vmatprep.subr.bf16.mxu0 %v1626
    %2606 = vmatpush1.bf16.msra.mxu0 %v1625
    %2607 = vmatprep.subr.bf16.mxu0 %v1629
    %2608 = vmatpush1.bf16.msra.mxu0 %v1628
    %2609 = vmatprep.subr.bf16.mxu0 %v1632
    %2610 = vmatpush1.bf16.msra.mxu0 %v1631
    %2611 = vmatprep.subr.bf16.mxu0 %v1635
    %2612 = vmatpush1.bf16.msra.mxu0 %v1634
    %2613 = vmatprep.subr.bf16.mxu0 0
    %2614 = vmatpush1.bf16.msra.mxu0 0
    %2615 = vmatprep.subr.bf16.mxu0 0
    %2616 = vmatpush1.bf16.msra.mxu0 0
    %2617 = vmatprep.subr.bf16.mxu0 0
    %2618 = vmatpush1.bf16.msra.mxu0 0
    %2619 = vmatprep.subr.bf16.mxu0 0
    %2620 = vmatpush1.bf16.msra.mxu0 0
    %2621 = vmatprep.subr.bf16.mxu0 0
    %2622 = vmatpush1.bf16.msra.mxu0 0
    %2623 = vmatprep.subr.bf16.mxu0 0
    %2624 = vmatpush1.bf16.msra.mxu0 0
    %2625 = vmatprep.subr.bf16.mxu0 0
    %2626 = vmatpush1.bf16.msra.mxu0 0
    %2627 = vmatprep.subr.bf16.mxu0 0
    %2628 = vmatpush1.bf16.msra.mxu0 0
    %2629 = vmatprep.mubr.bf16.mxu0 0
    %2630 = vmatmul.mubr.bf16.gmra.mrb[0].mxu0 %v2596
    %v2631 = vpop.f32.mrb[0].mxu0
    %v2632 = vadd.f32 %v1521, %v2631
    %v2633 = vpop.f32.mrb[0].mxu0
    %v2634 = vadd.f32 %v1525, %v2633
    %v2635 = vpop.f32.mrb[0].mxu0
    %v2636 = vpop.f32.mrb[0].mxu0
    %2637 = vdwg.mxu0
    %2638 = vmatprep.subr.bf16.mxu0 0
    %2639 = vmatpush1.bf16.msra.mxu0 %v1615
    %2640 = vmatprep.subr.bf16.mxu0 0
    %2641 = vmatpush1.bf16.msra.mxu0 %v1618
    %2642 = vmatprep.subr.bf16.mxu0 0
    %2643 = vmatpush1.bf16.msra.mxu0 %v1621
    %2644 = vmatprep.subr.bf16.mxu0 0
    %2645 = vmatpush1.bf16.msra.mxu0 %v1624
    %2646 = vmatprep.subr.bf16.mxu0 0
    %2647 = vmatpush1.bf16.msra.mxu0 %v1627
    %2648 = vmatprep.subr.bf16.mxu0 0
    %2649 = vmatpush1.bf16.msra.mxu0 %v1630
    %2650 = vmatprep.subr.bf16.mxu0 0
    %2651 = vmatpush1.bf16.msra.mxu0 %v1633
    %2652 = vmatprep.subr.bf16.mxu0 0
    %2653 = vmatpush1.bf16.msra.mxu0 %v1636
    %2654 = vmatprep.subr.bf16.mxu0 0
    %2655 = vmatpush1.bf16.msra.mxu0 0
    %2656 = vmatprep.subr.bf16.mxu0 0
    %2657 = vmatpush1.bf16.msra.mxu0 0
    %2658 = vmatprep.subr.bf16.mxu0 0
    %2659 = vmatpush1.bf16.msra.mxu0 0
    %2660 = vmatprep.subr.bf16.mxu0 0
    %2661 = vmatpush1.bf16.msra.mxu0 0
    %2662 = vmatprep.subr.bf16.mxu0 0
    %2663 = vmatpush1.bf16.msra.mxu0 0
    %2664 = vmatprep.subr.bf16.mxu0 0
    %2665 = vmatpush1.bf16.msra.mxu0 0
    %2666 = vmatprep.subr.bf16.mxu0 0
    %2667 = vmatpush1.bf16.msra.mxu0 0
    %2668 = vmatprep.subr.bf16.mxu0 0
    %2669 = vmatpush1.bf16.msra.mxu0 0
    %2670 = vmatprep.mubr.bf16.mxu0 0
    %2671 = vmatmul.mubr.bf16.gmra.mrb[0].mxu0 %v2596
    %v2672 = vpop.f32.mrb[0].mxu0
    %v2673 = vadd.f32 %v1529, %v2672
    %v2674 = vpop.f32.mrb[0].mxu0
    %v2675 = vpop.f32.mrb[0].mxu0
    %v2676 = vpop.f32.mrb[0].mxu0
    %2677 = vdwg.mxu0
    %v2678 = vadd.f32 %v1463, %v2632
    %v2679 = vxor.u32 %v2678, 2147483648
    %v2680 = vmul.f32 %v2679, 1.442695
    %v2681 = vpow.pop %v2680
    %v2682 = vadd.f32 %v2681, 1.0
    %v2683 = vrcp.pop %v2682
    %v2684 = vmul.f32 1.0, %v2683
    %v2685 = vadd.f32 %v1464, %v2634
    %v2686 = vxor.u32 %v2685, 2147483648
    %v2687 = vmul.f32 %v2686, 1.442695
    %v2688 = vpow.pop %v2687
    %v2689 = vadd.f32 %v2688, 1.0
    %v2690 = vrcp.pop %v2689
    %v2691 = vmul.f32 1.0, %v2690
    %v2692 = vmul.f32 %v2684, %v2673
    %v2693 = vadd.f32 %v1465, %v2692
    %v2694 = vtanh.pop %v2693
    %v2695 = vsub.f32 1.0, %v2691
    %v2696 = vmul.f32 %v2695, %v2694
    %v2697 = vmul.f32 %v2691, %v2594
    %v2698 = vadd.f32 %v2696, %v2697
    %v2699 = vadd.f32 %v2595, %v2698
    %v2700 = vpack.c.bf16 %v2698, %v2698
    %2701 = vmatprep.subr.bf16.mxu0 %v1614
    %2702 = vmatpush1.bf16.msra.mxu0 %v1613
    %2703 = vmatprep.subr.bf16.mxu0 %v1617
    %2704 = vmatpush1.bf16.msra.mxu0 %v1616
    %2705 = vmatprep.subr.bf16.mxu0 %v1620
    %2706 = vmatpush1.bf16.msra.mxu0 %v1619
    %2707 = vmatprep.subr.bf16.mxu0 %v1623
    %2708 = vmatpush1.bf16.msra.mxu0 %v1622
    %2709 = vmatprep.subr.bf16.mxu0 %v1626
    %2710 = vmatpush1.bf16.msra.mxu0 %v1625
    %2711 = vmatprep.subr.bf16.mxu0 %v1629
    %2712 = vmatpush1.bf16.msra.mxu0 %v1628
    %2713 = vmatprep.subr.bf16.mxu0 %v1632
    %2714 = vmatpush1.bf16.msra.mxu0 %v1631
    %2715 = vmatprep.subr.bf16.mxu0 %v1635
    %2716 = vmatpush1.bf16.msra.mxu0 %v1634
    %2717 = vmatprep.subr.bf16.mxu0 0
    %2718 = vmatpush1.bf16.msra.mxu0 0
    %2719 = vmatprep.subr.bf16.mxu0 0
    %2720 = vmatpush1.bf16.msra.mxu0 0
    %2721 = vmatprep.subr.bf16.mxu0 0
    %2722 = vmatpush1.bf16.msra.mxu0 0
    %2723 = vmatprep.subr.bf16.mxu0 0
    %2724 = vmatpush1.bf16.msra.mxu0 0
    %2725 = vmatprep.subr.bf16.mxu0 0
    %2726 = vmatpush1.bf16.msra.mxu0 0
    %2727 = vmatprep.subr.bf16.mxu0 0
    %2728 = vmatpush1.bf16.msra.mxu0 0
    %2729 = vmatprep.subr.bf16.mxu0 0
    %2730 = vmatpush1.bf16.msra.mxu0 0
    %2731 = vmatprep.subr.bf16.mxu0 0
    %2732 = vmatpush1.bf16.msra.mxu0 0
    %2733 = vmatprep.mubr.bf16.mxu0 0
    %2734 = vmatmul.mubr.bf16.gmra.mrb[0].mxu0 %v2700
    %v2735 = vpop.f32.mrb[0].mxu0
    %v2736 = vadd.f32 %v1521, %v2735
    %v2737 = vpop.f32.mrb[0].mxu0
    %v2738 = vadd.f32 %v1525, %v2737
    %v2739 = vpop.f32.mrb[0].mxu0
    %v2740 = vpop.f32.mrb[0].mxu0
    %2741 = vdwg.mxu0
    %2742 = vmatprep.subr.bf16.mxu0 0
    %2743 = vmatpush1.bf16.msra.mxu0 %v1615
    %2744 = vmatprep.subr.bf16.mxu0 0
    %2745 = vmatpush1.bf16.msra.mxu0 %v1618
    %2746 = vmatprep.subr.bf16.mxu0 0
    %2747 = vmatpush1.bf16.msra.mxu0 %v1621
    %2748 = vmatprep.subr.bf16.mxu0 0
    %2749 = vmatpush1.bf16.msra.mxu0 %v1624
    %2750 = vmatprep.subr.bf16.mxu0 0
    %2751 = vmatpush1.bf16.msra.mxu0 %v1627
    %2752 = vmatprep.subr.bf16.mxu0 0
    %2753 = vmatpush1.bf16.msra.mxu0 %v1630
    %2754 = vmatprep.subr.bf16.mxu0 0
    %2755 = vmatpush1.bf16.msra.mxu0 %v1633
    %2756 = vmatprep.subr.bf16.mxu0 0
    %2757 = vmatpush1.bf16.msra.mxu0 %v1636
    %2758 = vmatprep.subr.bf16.mxu0 0
    %2759 = vmatpush1.bf16.msra.mxu0 0
    %2760 = vmatprep.subr.bf16.mxu0 0
    %2761 = vmatpush1.bf16.msra.mxu0 0
    %2762 = vmatprep.subr.bf16.mxu0 0
    %2763 = vmatpush1.bf16.msra.mxu0 0
    %2764 = vmatprep.subr.bf16.mxu0 0
    %2765 = vmatpush1.bf16.msra.mxu0 0
    %2766 = vmatprep.subr.bf16.mxu0 0
    %2767 = vmatpush1.bf16.msra.mxu0 0
    %2768 = vmatprep.subr.bf16.mxu0 0
    %2769 = vmatpush1.bf16.msra.mxu0 0
    %2770 = vmatprep.subr.bf16.mxu0 0
    %2771 = vmatpush1.bf16.msra.mxu0 0
    %2772 = vmatprep.subr.bf16.mxu0 0
    %2773 = vmatpush1.bf16.msra.mxu0 0
    %2774 = vmatprep.mubr.bf16.mxu0 0
    %2775 = vmatmul.mubr.bf16.gmra.mrb[0].mxu0 %v2700
    %v2776 = vpop.f32.mrb[0].mxu0
    %v2777 = vadd.f32 %v1529, %v2776
    %v2778 = vpop.f32.mrb[0].mxu0
    %v2779 = vpop.f32.mrb[0].mxu0
    %v2780 = vpop.f32.mrb[0].mxu0
    %2781 = vdwg.mxu0
    %v2782 = vadd.f32 %v1466, %v2736
    %v2783 = vxor.u32 %v2782, 2147483648
    %v2784 = vmul.f32 %v2783, 1.442695
    %v2785 = vpow.pop %v2784
    %v2786 = vadd.f32 %v2785, 1.0
    %v2787 = vrcp.pop %v2786
    %v2788 = vmul.f32 1.0, %v2787
    %v2789 = vadd.f32 %v1467, %v2738
    %v2790 = vxor.u32 %v2789, 2147483648
    %v2791 = vmul.f32 %v2790, 1.442695
    %v2792 = vpow.pop %v2791
    %v2793 = vadd.f32 %v2792, 1.0
    %v2794 = vrcp.pop %v2793
    %v2795 = vmul.f32 1.0, %v2794
    %v2796 = vmul.f32 %v2788, %v2777
    %v2797 = vadd.f32 %v1468, %v2796
    %v2798 = vtanh.pop %v2797
    %v2799 = vsub.f32 1.0, %v2795
    %v2800 = vmul.f32 %v2799, %v2798
    %v2801 = vmul.f32 %v2795, %v2698
    %v2802 = vadd.f32 %v2800, %v2801
    %v2803 = vadd.f32 %v2699, %v2802
    %v2804 = vpack.c.bf16 %v2802, %v2802
    %2805 = vmatprep.subr.bf16.mxu0 %v1614
    %2806 = vmatpush1.bf16.msra.mxu0 %v1613
    %2807 = vmatprep.subr.bf16.mxu0 %v1617
    %2808 = vmatpush1.bf16.msra.mxu0 %v1616
    %2809 = vmatprep.subr.bf16.mxu0 %v1620
    %2810 = vmatpush1.bf16.msra.mxu0 %v1619
    %2811 = vmatprep.subr.bf16.mxu0 %v1623
    %2812 = vmatpush1.bf16.msra.mxu0 %v1622
    %2813 = vmatprep.subr.bf16.mxu0 %v1626
    %2814 = vmatpush1.bf16.msra.mxu0 %v1625
    %2815 = vmatprep.subr.bf16.mxu0 %v1629
    %2816 = vmatpush1.bf16.msra.mxu0 %v1628
    %2817 = vmatprep.subr.bf16.mxu0 %v1632
    %2818 = vmatpush1.bf16.msra.mxu0 %v1631
    %2819 = vmatprep.subr.bf16.mxu0 %v1635
    %2820 = vmatpush1.bf16.msra.mxu0 %v1634
    %2821 = vmatprep.subr.bf16.mxu0 0
    %2822 = vmatpush1.bf16.msra.mxu0 0
    %2823 = vmatprep.subr.bf16.mxu0 0
    %2824 = vmatpush1.bf16.msra.mxu0 0
    %2825 = vmatprep.subr.bf16.mxu0 0
    %2826 = vmatpush1.bf16.msra.mxu0 0
    %2827 = vmatprep.subr.bf16.mxu0 0
    %2828 = vmatpush1.bf16.msra.mxu0 0
    %2829 = vmatprep.subr.bf16.mxu0 0
    %2830 = vmatpush1.bf16.msra.mxu0 0
    %2831 = vmatprep.subr.bf16.mxu0 0
    %2832 = vmatpush1.bf16.msra.mxu0 0
    %2833 = vmatprep.subr.bf16.mxu0 0
    %2834 = vmatpush1.bf16.msra.mxu0 0
    %2835 = vmatprep.subr.bf16.mxu0 0
    %2836 = vmatpush1.bf16.msra.mxu0 0
    %2837 = vmatprep.mubr.bf16.mxu0 0
    %2838 = vmatmul.mubr.bf16.gmra.mrb[0].mxu0 %v2804
    %v2839 = vpop.f32.mrb[0].mxu0
    %v2840 = vadd.f32 %v1521, %v2839
    %v2841 = vpop.f32.mrb[0].mxu0
    %v2842 = vadd.f32 %v1525, %v2841
    %v2843 = vpop.f32.mrb[0].mxu0
    %v2844 = vpop.f32.mrb[0].mxu0
    %2845 = vdwg.mxu0
    %2846 = vmatprep.subr.bf16.mxu0 0
    %2847 = vmatpush1.bf16.msra.mxu0 %v1615
    %2848 = vmatprep.subr.bf16.mxu0 0
    %2849 = vmatpush1.bf16.msra.mxu0 %v1618
    %2850 = vmatprep.subr.bf16.mxu0 0
    %2851 = vmatpush1.bf16.msra.mxu0 %v1621
    %2852 = vmatprep.subr.bf16.mxu0 0
    %2853 = vmatpush1.bf16.msra.mxu0 %v1624
    %2854 = vmatprep.subr.bf16.mxu0 0
    %2855 = vmatpush1.bf16.msra.mxu0 %v1627
    %2856 = vmatprep.subr.bf16.mxu0 0
    %2857 = vmatpush1.bf16.msra.mxu0 %v1630
    %2858 = vmatprep.subr.bf16.mxu0 0
    %2859 = vmatpush1.bf16.msra.mxu0 %v1633
    %2860 = vmatprep.subr.bf16.mxu0 0
    %2861 = vmatpush1.bf16.msra.mxu0 %v1636
    %2862 = vmatprep.subr.bf16.mxu0 0
    %2863 = vmatpush1.bf16.msra.mxu0 0
    %2864 = vmatprep.subr.bf16.mxu0 0
    %2865 = vmatpush1.bf16.msra.mxu0 0
    %2866 = vmatprep.subr.bf16.mxu0 0
    %2867 = vmatpush1.bf16.msra.mxu0 0
    %2868 = vmatprep.subr.bf16.mxu0 0
    %2869 = vmatpush1.bf16.msra.mxu0 0
    %2870 = vmatprep.subr.bf16.mxu0 0
    %2871 = vmatpush1.bf16.msra.mxu0 0
    %2872 = vmatprep.subr.bf16.mxu0 0
    %2873 = vmatpush1.bf16.msra.mxu0 0
    %2874 = vmatprep.subr.bf16.mxu0 0
    %2875 = vmatpush1.bf16.msra.mxu0 0
    %2876 = vmatprep.subr.bf16.mxu0 0
    %2877 = vmatpush1.bf16.msra.mxu0 0
    %2878 = vmatprep.mubr.bf16.mxu0 0
    %2879 = vmatmul.mubr.bf16.gmra.mrb[0].mxu0 %v2804
    %v2880 = vpop.f32.mrb[0].mxu0
    %v2881 = vadd.f32 %v1529, %v2880
    %v2882 = vpop.f32.mrb[0].mxu0
    %v2883 = vpop.f32.mrb[0].mxu0
    %v2884 = vpop.f32.mrb[0].mxu0
    %2885 = vdwg.mxu0
    %v2886 = vadd.f32 %v1469, %v2840
    %v2887 = vxor.u32 %v2886, 2147483648
    %v2888 = vmul.f32 %v2887, 1.442695
    %v2889 = vpow.pop %v2888
    %v2890 = vadd.f32 %v2889, 1.0
    %v2891 = vrcp.pop %v2890
    %v2892 = vmul.f32 1.0, %v2891
    %v2893 = vadd.f32 %v1470, %v2842
    %v2894 = vxor.u32 %v2893, 2147483648
    %v2895 = vmul.f32 %v2894, 1.442695
    %v2896 = vpow.pop %v2895
    %v2897 = vadd.f32 %v2896, 1.0
    %v2898 = vrcp.pop %v2897
    %v2899 = vmul.f32 1.0, %v2898
    %v2900 = vmul.f32 %v2892, %v2881
    %v2901 = vadd.f32 %v1471, %v2900
    %v2902 = vtanh.pop %v2901
    %v2903 = vsub.f32 1.0, %v2899
    %v2904 = vmul.f32 %v2903, %v2902
    %v2905 = vmul.f32 %v2899, %v2802
    %v2906 = vadd.f32 %v2904, %v2905
    %v2907 = vadd.f32 %v2803, %v2906
    %v2908 = vpack.c.bf16 %v2906, %v2906
    %2909 = vmatprep.subr.bf16.mxu0 %v1614
    %2910 = vmatpush1.bf16.msra.mxu0 %v1613
    %2911 = vmatprep.subr.bf16.mxu0 %v1617
    %2912 = vmatpush1.bf16.msra.mxu0 %v1616
    %2913 = vmatprep.subr.bf16.mxu0 %v1620
    %2914 = vmatpush1.bf16.msra.mxu0 %v1619
    %2915 = vmatprep.subr.bf16.mxu0 %v1623
    %2916 = vmatpush1.bf16.msra.mxu0 %v1622
    %2917 = vmatprep.subr.bf16.mxu0 %v1626
    %2918 = vmatpush1.bf16.msra.mxu0 %v1625
    %2919 = vmatprep.subr.bf16.mxu0 %v1629
    %2920 = vmatpush1.bf16.msra.mxu0 %v1628
    %2921 = vmatprep.subr.bf16.mxu0 %v1632
    %2922 = vmatpush1.bf16.msra.mxu0 %v1631
    %2923 = vmatprep.subr.bf16.mxu0 %v1635
    %2924 = vmatpush1.bf16.msra.mxu0 %v1634
    %2925 = vmatprep.subr.bf16.mxu0 0
    %2926 = vmatpush1.bf16.msra.mxu0 0
    %2927 = vmatprep.subr.bf16.mxu0 0
    %2928 = vmatpush1.bf16.msra.mxu0 0
    %2929 = vmatprep.subr.bf16.mxu0 0
    %2930 = vmatpush1.bf16.msra.mxu0 0
    %2931 = vmatprep.subr.bf16.mxu0 0
    %2932 = vmatpush1.bf16.msra.mxu0 0
    %2933 = vmatprep.subr.bf16.mxu0 0
    %2934 = vmatpush1.bf16.msra.mxu0 0
    %2935 = vmatprep.subr.bf16.mxu0 0
    %2936 = vmatpush1.bf16.msra.mxu0 0
    %2937 = vmatprep.subr.bf16.mxu0 0
    %2938 = vmatpush1.bf16.msra.mxu0 0
    %2939 = vmatprep.subr.bf16.mxu0 0
    %2940 = vmatpush1.bf16.msra.mxu0 0
    %2941 = vmatprep.mubr.bf16.mxu0 0
    %2942 = vmatmul.mubr.bf16.gmra.mrb[0].mxu0 %v2908
    %v2943 = vpop.f32.mrb[0].mxu0
    %v2944 = vadd.f32 %v1521, %v2943
    %v2945 = vpop.f32.mrb[0].mxu0
    %v2946 = vadd.f32 %v1525, %v2945
    %v2947 = vpop.f32.mrb[0].mxu0
    %v2948 = vpop.f32.mrb[0].mxu0
    %2949 = vdwg.mxu0
    %2950 = vmatprep.subr.bf16.mxu0 0
    %2951 = vmatpush1.bf16.msra.mxu0 %v1615
    %2952 = vmatprep.subr.bf16.mxu0 0
    %2953 = vmatpush1.bf16.msra.mxu0 %v1618
    %2954 = vmatprep.subr.bf16.mxu0 0
    %2955 = vmatpush1.bf16.msra.mxu0 %v1621
    %2956 = vmatprep.subr.bf16.mxu0 0
    %2957 = vmatpush1.bf16.msra.mxu0 %v1624
    %2958 = vmatprep.subr.bf16.mxu0 0
    %2959 = vmatpush1.bf16.msra.mxu0 %v1627
    %2960 = vmatprep.subr.bf16.mxu0 0
    %2961 = vmatpush1.bf16.msra.mxu0 %v1630
    %2962 = vmatprep.subr.bf16.mxu0 0
    %2963 = vmatpush1.bf16.msra.mxu0 %v1633
    %2964 = vmatprep.subr.bf16.mxu0 0
    %2965 = vmatpush1.bf16.msra.mxu0 %v1636
    %2966 = vmatprep.subr.bf16.mxu0 0
    %2967 = vmatpush1.bf16.msra.mxu0 0
    %2968 = vmatprep.subr.bf16.mxu0 0
    %2969 = vmatpush1.bf16.msra.mxu0 0
    %2970 = vmatprep.subr.bf16.mxu0 0
    %2971 = vmatpush1.bf16.msra.mxu0 0
    %2972 = vmatprep.subr.bf16.mxu0 0
    %2973 = vmatpush1.bf16.msra.mxu0 0
    %2974 = vmatprep.subr.bf16.mxu0 0
    %2975 = vmatpush1.bf16.msra.mxu0 0
    %2976 = vmatprep.subr.bf16.mxu0 0
    %2977 = vmatpush1.bf16.msra.mxu0 0
    %2978 = vmatprep.subr.bf16.mxu0 0
    %2979 = vmatpush1.bf16.msra.mxu0 0
    %2980 = vmatprep.subr.bf16.mxu0 0
    %2981 = vmatpush1.bf16.msra.mxu0 0
    %2982 = vmatprep.mubr.bf16.mxu0 0
    %2983 = vmatmul.mubr.bf16.gmra.mrb[0].mxu0 %v2908
    %v2984 = vpop.f32.mrb[0].mxu0
    %v2985 = vadd.f32 %v1529, %v2984
    %v2986 = vpop.f32.mrb[0].mxu0
    %v2987 = vpop.f32.mrb[0].mxu0
    %v2988 = vpop.f32.mrb[0].mxu0
    %2989 = vdwg.mxu0
    %v2990 = vadd.f32 %v1472, %v2944
    %v2991 = vxor.u32 %v2990, 2147483648
    %v2992 = vmul.f32 %v2991, 1.442695
    %v2993 = vpow.pop %v2992
    %v2994 = vadd.f32 %v2993, 1.0
    %v2995 = vrcp.pop %v2994
    %v2996 = vmul.f32 1.0, %v2995
    %v2997 = vadd.f32 %v1473, %v2946
    %v2998 = vxor.u32 %v2997, 2147483648
    %v2999 = vmul.f32 %v2998, 1.442695
    %v3000 = vpow.pop %v2999
    %v3001 = vadd.f32 %v3000, 1.0
    %v3002 = vrcp.pop %v3001
    %v3003 = vmul.f32 1.0, %v3002
    %v3004 = vmul.f32 %v2996, %v2985
    %v3005 = vadd.f32 %v1474, %v3004
    %v3006 = vtanh.pop %v3005
    %v3007 = vsub.f32 1.0, %v3003
    %v3008 = vmul.f32 %v3007, %v3006
    %v3009 = vmul.f32 %v3003, %v2906
    %v3010 = vadd.f32 %v3008, %v3009
    %v3011 = vadd.f32 %v2907, %v3010
    %v3012 = vpack.c.bf16 %v3010, %v3010
    %3013 = vmatprep.subr.bf16.mxu0 %v1614
    %3014 = vmatpush1.bf16.msra.mxu0 %v1613
    %3015 = vmatprep.subr.bf16.mxu0 %v1617
    %3016 = vmatpush1.bf16.msra.mxu0 %v1616
    %3017 = vmatprep.subr.bf16.mxu0 %v1620
    %3018 = vmatpush1.bf16.msra.mxu0 %v1619
    %3019 = vmatprep.subr.bf16.mxu0 %v1623
    %3020 = vmatpush1.bf16.msra.mxu0 %v1622
    %3021 = vmatprep.subr.bf16.mxu0 %v1626
    %3022 = vmatpush1.bf16.msra.mxu0 %v1625
    %3023 = vmatprep.subr.bf16.mxu0 %v1629
    %3024 = vmatpush1.bf16.msra.mxu0 %v1628
    %3025 = vmatprep.subr.bf16.mxu0 %v1632
    %3026 = vmatpush1.bf16.msra.mxu0 %v1631
    %3027 = vmatprep.subr.bf16.mxu0 %v1635
    %3028 = vmatpush1.bf16.msra.mxu0 %v1634
    %3029 = vmatprep.subr.bf16.mxu0 0
    %3030 = vmatpush1.bf16.msra.mxu0 0
    %3031 = vmatprep.subr.bf16.mxu0 0
    %3032 = vmatpush1.bf16.msra.mxu0 0
    %3033 = vmatprep.subr.bf16.mxu0 0
    %3034 = vmatpush1.bf16.msra.mxu0 0
    %3035 = vmatprep.subr.bf16.mxu0 0
    %3036 = vmatpush1.bf16.msra.mxu0 0
    %3037 = vmatprep.subr.bf16.mxu0 0
    %3038 = vmatpush1.bf16.msra.mxu0 0
    %3039 = vmatprep.subr.bf16.mxu0 0
    %3040 = vmatpush1.bf16.msra.mxu0 0
    %3041 = vmatprep.subr.bf16.mxu0 0
    %3042 = vmatpush1.bf16.msra.mxu0 0
    %3043 = vmatprep.subr.bf16.mxu0 0
    %3044 = vmatpush1.bf16.msra.mxu0 0
    %3045 = vmatprep.mubr.bf16.mxu0 0
    %3046 = vmatmul.mubr.bf16.gmra.mrb[0].mxu0 %v3012
    %v3047 = vpop.f32.mrb[0].mxu0
    %v3048 = vadd.f32 %v1521, %v3047
    %v3049 = vpop.f32.mrb[0].mxu0
    %v3050 = vadd.f32 %v1525, %v3049
    %v3051 = vpop.f32.mrb[0].mxu0
    %v3052 = vpop.f32.mrb[0].mxu0
    %3053 = vdwg.mxu0
    %3054 = vmatprep.subr.bf16.mxu0 0
    %3055 = vmatpush1.bf16.msra.mxu0 %v1615
    %3056 = vmatprep.subr.bf16.mxu0 0
    %3057 = vmatpush1.bf16.msra.mxu0 %v1618
    %3058 = vmatprep.subr.bf16.mxu0 0
    %3059 = vmatpush1.bf16.msra.mxu0 %v1621
    %3060 = vmatprep.subr.bf16.mxu0 0
    %3061 = vmatpush1.bf16.msra.mxu0 %v1624
    %3062 = vmatprep.subr.bf16.mxu0 0
    %3063 = vmatpush1.bf16.msra.mxu0 %v1627
    %3064 = vmatprep.subr.bf16.mxu0 0
    %3065 = vmatpush1.bf16.msra.mxu0 %v1630
    %3066 = vmatprep.subr.bf16.mxu0 0
    %3067 = vmatpush1.bf16.msra.mxu0 %v1633
    %3068 = vmatprep.subr.bf16.mxu0 0
    %3069 = vmatpush1.bf16.msra.mxu0 %v1636
    %3070 = vmatprep.subr.bf16.mxu0 0
    %3071 = vmatpush1.bf16.msra.mxu0 0
    %3072 = vmatprep.subr.bf16.mxu0 0
    %3073 = vmatpush1.bf16.msra.mxu0 0
    %3074 = vmatprep.subr.bf16.mxu0 0
    %3075 = vmatpush1.bf16.msra.mxu0 0
    %3076 = vmatprep.subr.bf16.mxu0 0
    %3077 = vmatpush1.bf16.msra.mxu0 0
    %3078 = vmatprep.subr.bf16.mxu0 0
    %3079 = vmatpush1.bf16.msra.mxu0 0
    %3080 = vmatprep.subr.bf16.mxu0 0
    %3081 = vmatpush1.bf16.msra.mxu0 0
    %3082 = vmatprep.subr.bf16.mxu0 0
    %3083 = vmatpush1.bf16.msra.mxu0 0
    %3084 = vmatprep.subr.bf16.mxu0 0
    %3085 = vmatpush1.bf16.msra.mxu0 0
    %3086 = vmatprep.mubr.bf16.mxu0 0
    %3087 = vmatmul.mubr.bf16.gmra.mrb[0].mxu0 %v3012
    %v3088 = vpop.f32.mrb[0].mxu0
    %v3089 = vadd.f32 %v1529, %v3088
    %v3090 = vpop.f32.mrb[0].mxu0
    %v3091 = vpop.f32.mrb[0].mxu0
    %v3092 = vpop.f32.mrb[0].mxu0
    %3093 = vdwg.mxu0
    %v3094 = vadd.f32 %v1475, %v3048
    %v3095 = vxor.u32 %v3094, 2147483648
    %v3096 = vmul.f32 %v3095, 1.442695
    %v3097 = vpow.pop %v3096
    %v3098 = vadd.f32 %v3097, 1.0
    %v3099 = vrcp.pop %v3098
    %v3100 = vmul.f32 1.0, %v3099
    %v3101 = vadd.f32 %v1476, %v3050
    %v3102 = vxor.u32 %v3101, 2147483648
    %v3103 = vmul.f32 %v3102, 1.442695
    %v3104 = vpow.pop %v3103
    %v3105 = vadd.f32 %v3104, 1.0
    %v3106 = vrcp.pop %v3105
    %v3107 = vmul.f32 1.0, %v3106
    %v3108 = vmul.f32 %v3100, %v3089
    %v3109 = vadd.f32 %v1477, %v3108
    %v3110 = vtanh.pop %v3109
    %v3111 = vsub.f32 1.0, %v3107
    %v3112 = vmul.f32 %v3111, %v3110
    %v3113 = vmul.f32 %v3107, %v3010
    %v3114 = vadd.f32 %v3112, %v3113
    %v3115 = vadd.f32 %v3011, %v3114
    %v3116 = vpack.c.bf16 %v3114, %v3114
    %3117 = vmatprep.subr.bf16.mxu0 %v1614
    %3118 = vmatpush1.bf16.msra.mxu0 %v1613
    %3119 = vmatprep.subr.bf16.mxu0 %v1617
    %3120 = vmatpush1.bf16.msra.mxu0 %v1616
    %3121 = vmatprep.subr.bf16.mxu0 %v1620
    %3122 = vmatpush1.bf16.msra.mxu0 %v1619
    %3123 = vmatprep.subr.bf16.mxu0 %v1623
    %3124 = vmatpush1.bf16.msra.mxu0 %v1622
    %3125 = vmatprep.subr.bf16.mxu0 %v1626
    %3126 = vmatpush1.bf16.msra.mxu0 %v1625
    %3127 = vmatprep.subr.bf16.mxu0 %v1629
    %3128 = vmatpush1.bf16.msra.mxu0 %v1628
    %3129 = vmatprep.subr.bf16.mxu0 %v1632
    %3130 = vmatpush1.bf16.msra.mxu0 %v1631
    %3131 = vmatprep.subr.bf16.mxu0 %v1635
    %3132 = vmatpush1.bf16.msra.mxu0 %v1634
    %3133 = vmatprep.subr.bf16.mxu0 0
    %3134 = vmatpush1.bf16.msra.mxu0 0
    %3135 = vmatprep.subr.bf16.mxu0 0
    %3136 = vmatpush1.bf16.msra.mxu0 0
    %3137 = vmatprep.subr.bf16.mxu0 0
    %3138 = vmatpush1.bf16.msra.mxu0 0
    %3139 = vmatprep.subr.bf16.mxu0 0
    %3140 = vmatpush1.bf16.msra.mxu0 0
    %3141 = vmatprep.subr.bf16.mxu0 0
    %3142 = vmatpush1.bf16.msra.mxu0 0
    %3143 = vmatprep.subr.bf16.mxu0 0
    %3144 = vmatpush1.bf16.msra.mxu0 0
    %3145 = vmatprep.subr.bf16.mxu0 0
    %3146 = vmatpush1.bf16.msra.mxu0 0
    %3147 = vmatprep.subr.bf16.mxu0 0
    %3148 = vmatpush1.bf16.msra.mxu0 0
    %3149 = vmatprep.mubr.bf16.mxu0 0
    %3150 = vmatmul.mubr.bf16.gmra.mrb[0].mxu0 %v3116
    %v3151 = vpop.f32.mrb[0].mxu0
    %v3152 = vadd.f32 %v1521, %v3151
    %v3153 = vpop.f32.mrb[0].mxu0
    %v3154 = vadd.f32 %v1525, %v3153
    %v3155 = vpop.f32.mrb[0].mxu0
    %v3156 = vpop.f32.mrb[0].mxu0
    %3157 = vdwg.mxu0
    %3158 = vmatprep.subr.bf16.mxu0 0
    %3159 = vmatpush1.bf16.msra.mxu0 %v1615
    %3160 = vmatprep.subr.bf16.mxu0 0
    %3161 = vmatpush1.bf16.msra.mxu0 %v1618
    %3162 = vmatprep.subr.bf16.mxu0 0
    %3163 = vmatpush1.bf16.msra.mxu0 %v1621
    %3164 = vmatprep.subr.bf16.mxu0 0
    %3165 = vmatpush1.bf16.msra.mxu0 %v1624
    %3166 = vmatprep.subr.bf16.mxu0 0
    %3167 = vmatpush1.bf16.msra.mxu0 %v1627
    %3168 = vmatprep.subr.bf16.mxu0 0
    %3169 = vmatpush1.bf16.msra.mxu0 %v1630
    %3170 = vmatprep.subr.bf16.mxu0 0
    %3171 = vmatpush1.bf16.msra.mxu0 %v1633
    %3172 = vmatprep.subr.bf16.mxu0 0
    %3173 = vmatpush1.bf16.msra.mxu0 %v1636
    %3174 = vmatprep.subr.bf16.mxu0 0
    %3175 = vmatpush1.bf16.msra.mxu0 0
    %3176 = vmatprep.subr.bf16.mxu0 0
    %3177 = vmatpush1.bf16.msra.mxu0 0
    %3178 = vmatprep.subr.bf16.mxu0 0
    %3179 = vmatpush1.bf16.msra.mxu0 0
    %3180 = vmatprep.subr.bf16.mxu0 0
    %3181 = vmatpush1.bf16.msra.mxu0 0
    %3182 = vmatprep.subr.bf16.mxu0 0
    %3183 = vmatpush1.bf16.msra.mxu0 0
    %3184 = vmatprep.subr.bf16.mxu0 0
    %3185 = vmatpush1.bf16.msra.mxu0 0
    %3186 = vmatprep.subr.bf16.mxu0 0
    %3187 = vmatpush1.bf16.msra.mxu0 0
    %3188 = vmatprep.subr.bf16.mxu0 0
    %3189 = vmatpush1.bf16.msra.mxu0 0
    %3190 = vmatprep.mubr.bf16.mxu0 0
    %3191 = vmatmul.mubr.bf16.gmra.mrb[0].mxu0 %v3116
    %v3192 = vpop.f32.mrb[0].mxu0
    %v3193 = vadd.f32 %v1529, %v3192
    %v3194 = vpop.f32.mrb[0].mxu0
    %v3195 = vpop.f32.mrb[0].mxu0
    %v3196 = vpop.f32.mrb[0].mxu0
    %3197 = vdwg.mxu0
    %v3198 = vadd.f32 %v1478, %v3152
    %v3199 = vxor.u32 %v3198, 2147483648
    %v3200 = vmul.f32 %v3199, 1.442695
    %v3201 = vpow.pop %v3200
    %v3202 = vadd.f32 %v3201, 1.0
    %v3203 = vrcp.pop %v3202
    %v3204 = vmul.f32 1.0, %v3203
    %v3205 = vadd.f32 %v1479, %v3154
    %v3206 = vxor.u32 %v3205, 2147483648
    %v3207 = vmul.f32 %v3206, 1.442695
    %v3208 = vpow.pop %v3207
    %v3209 = vadd.f32 %v3208, 1.0
    %v3210 = vrcp.pop %v3209
    %v3211 = vmul.f32 1.0, %v3210
    %v3212 = vmul.f32 %v3204, %v3193
    %v3213 = vadd.f32 %v1480, %v3212
    %v3214 = vtanh.pop %v3213
    %v3215 = vsub.f32 1.0, %v3211
    %v3216 = vmul.f32 %v3215, %v3214
    %v3217 = vmul.f32 %v3211, %v3114
    %v3218 = vadd.f32 %v3216, %v3217
    %v3219 = vadd.f32 %v3115, %v3218
    %v3220 = vpack.c.bf16 %v3218, %v3218
    %3221 = vmatprep.subr.bf16.mxu0 %v1614
    %3222 = vmatpush1.bf16.msra.mxu0 %v1613
    %3223 = vmatprep.subr.bf16.mxu0 %v1617
    %3224 = vmatpush1.bf16.msra.mxu0 %v1616
    %3225 = vmatprep.subr.bf16.mxu0 %v1620
    %3226 = vmatpush1.bf16.msra.mxu0 %v1619
    %3227 = vmatprep.subr.bf16.mxu0 %v1623
    %3228 = vmatpush1.bf16.msra.mxu0 %v1622
    %3229 = vmatprep.subr.bf16.mxu0 %v1626
    %3230 = vmatpush1.bf16.msra.mxu0 %v1625
    %3231 = vmatprep.subr.bf16.mxu0 %v1629
    %3232 = vmatpush1.bf16.msra.mxu0 %v1628
    %3233 = vmatprep.subr.bf16.mxu0 %v1632
    %3234 = vmatpush1.bf16.msra.mxu0 %v1631
    %3235 = vmatprep.subr.bf16.mxu0 %v1635
    %3236 = vmatpush1.bf16.msra.mxu0 %v1634
    %3237 = vmatprep.subr.bf16.mxu0 0
    %3238 = vmatpush1.bf16.msra.mxu0 0
    %3239 = vmatprep.subr.bf16.mxu0 0
    %3240 = vmatpush1.bf16.msra.mxu0 0
    %3241 = vmatprep.subr.bf16.mxu0 0
    %3242 = vmatpush1.bf16.msra.mxu0 0
    %3243 = vmatprep.subr.bf16.mxu0 0
    %3244 = vmatpush1.bf16.msra.mxu0 0
    %3245 = vmatprep.subr.bf16.mxu0 0
    %3246 = vmatpush1.bf16.msra.mxu0 0
    %3247 = vmatprep.subr.bf16.mxu0 0
    %3248 = vmatpush1.bf16.msra.mxu0 0
    %3249 = vmatprep.subr.bf16.mxu0 0
    %3250 = vmatpush1.bf16.msra.mxu0 0
    %3251 = vmatprep.subr.bf16.mxu0 0
    %3252 = vmatpush1.bf16.msra.mxu0 0
    %3253 = vmatprep.mubr.bf16.mxu0 0
    %3254 = vmatmul.mubr.bf16.gmra.mrb[0].mxu0 %v3220
    %v3255 = vpop.f32.mrb[0].mxu0
    %v3256 = vadd.f32 %v1521, %v3255
    %v3257 = vpop.f32.mrb[0].mxu0
    %v3258 = vadd.f32 %v1525, %v3257
    %v3259 = vpop.f32.mrb[0].mxu0
    %v3260 = vpop.f32.mrb[0].mxu0
    %3261 = vdwg.mxu0
    %3262 = vmatprep.subr.bf16.mxu0 0
    %3263 = vmatpush1.bf16.msra.mxu0 %v1615
    %3264 = vmatprep.subr.bf16.mxu0 0
    %3265 = vmatpush1.bf16.msra.mxu0 %v1618
    %3266 = vmatprep.subr.bf16.mxu0 0
    %3267 = vmatpush1.bf16.msra.mxu0 %v1621
    %3268 = vmatprep.subr.bf16.mxu0 0
    %3269 = vmatpush1.bf16.msra.mxu0 %v1624
    %3270 = vmatprep.subr.bf16.mxu0 0
    %3271 = vmatpush1.bf16.msra.mxu0 %v1627
    %3272 = vmatprep.subr.bf16.mxu0 0
    %3273 = vmatpush1.bf16.msra.mxu0 %v1630
    %3274 = vmatprep.subr.bf16.mxu0 0
    %3275 = vmatpush1.bf16.msra.mxu0 %v1633
    %3276 = vmatprep.subr.bf16.mxu0 0
    %3277 = vmatpush1.bf16.msra.mxu0 %v1636
    %3278 = vmatprep.subr.bf16.mxu0 0
    %3279 = vmatpush1.bf16.msra.mxu0 0
    %3280 = vmatprep.subr.bf16.mxu0 0
    %3281 = vmatpush1.bf16.msra.mxu0 0
    %3282 = vmatprep.subr.bf16.mxu0 0
    %3283 = vmatpush1.bf16.msra.mxu0 0
    %3284 = vmatprep.subr.bf16.mxu0 0
    %3285 = vmatpush1.bf16.msra.mxu0 0
    %3286 = vmatprep.subr.bf16.mxu0 0
    %3287 = vmatpush1.bf16.msra.mxu0 0
    %3288 = vmatprep.subr.bf16.mxu0 0
    %3289 = vmatpush1.bf16.msra.mxu0 0
    %3290 = vmatprep.subr.bf16.mxu0 0
    %3291 = vmatpush1.bf16.msra.mxu0 0
    %3292 = vmatprep.subr.bf16.mxu0 0
    %3293 = vmatpush1.bf16.msra.mxu0 0
    %3294 = vmatprep.mubr.bf16.mxu0 0
    %3295 = vmatmul.mubr.bf16.gmra.mrb[0].mxu0 %v3220
    %v3296 = vpop.f32.mrb[0].mxu0
    %v3297 = vadd.f32 %v1529, %v3296
    %v3298 = vpop.f32.mrb[0].mxu0
    %v3299 = vpop.f32.mrb[0].mxu0
    %v3300 = vpop.f32.mrb[0].mxu0
    %3301 = vdwg.mxu0
    %v3302 = vadd.f32 %v1481, %v3256
    %v3303 = vxor.u32 %v3302, 2147483648
    %v3304 = vmul.f32 %v3303, 1.442695
    %v3305 = vpow.pop %v3304
    %v3306 = vadd.f32 %v3305, 1.0
    %v3307 = vrcp.pop %v3306
    %v3308 = vmul.f32 1.0, %v3307
    %v3309 = vadd.f32 %v1482, %v3258
    %v3310 = vxor.u32 %v3309, 2147483648
    %v3311 = vmul.f32 %v3310, 1.442695
    %v3312 = vpow.pop %v3311
    %v3313 = vadd.f32 %v3312, 1.0
    %v3314 = vrcp.pop %v3313
    %v3315 = vmul.f32 1.0, %v3314
    %v3316 = vmul.f32 %v3308, %v3297
    %v3317 = vadd.f32 %v1483, %v3316
    %v3318 = vtanh.pop %v3317
    %v3319 = vsub.f32 1.0, %v3315
    %v3320 = vmul.f32 %v3319, %v3318
    %v3321 = vmul.f32 %v3315, %v3218
    %v3322 = vadd.f32 %v3320, %v3321
    %v3323 = vadd.f32 %v3219, %v3322
    %v3324 = vmul.f32 %v3323, 0.0625
    %v3325 = vmul.f32 %v3324, %v3324
    %3326 = vadd.xlane.f32.xlu0 %v3325
    %v3327 = vpop.xlane.xlu0 %3326
    %v3328 = vmax.f32 %v3327, 1e-24
    %v3329 = vrsqrt.pop %v3328
    %v3330 = vmul.f32 %v3324, %v3329
    %3331 = vst [vmem:[%s10] sm:$0xff] %v3330
    %v3332 = vld [vmem:[%s9] sm:$0xff]
    %v3333 = vld [vmem:[%s9 + $0x8] sm:$0xff]
    %v3334 = vsel %vm185, %v3332, 0.0
    %v3335 = vrot.slane %v3334, 4
    %v3336 = vadd.f32 %v3334, %v3335
    %v3337 = vrot.slane %v3336, 2
    %v3338 = vadd.f32 %v3336, %v3337
    %v3339 = vrot.slane %v3338, 1
    %v3340 = vadd.f32 %v3338, %v3339
    %v3341 = vsel %vm185, %v3333, 0.0
    %v3342 = vrot.slane %v3341, 4
    %v3343 = vadd.f32 %v3341, %v3342
    %v3344 = vrot.slane %v3343, 2
    %v3345 = vadd.f32 %v3343, %v3344
    %v3346 = vrot.slane %v3345, 1
    %v3347 = vadd.f32 %v3345, %v3346
    %v3348 = vrcp.pop 8.0
    %v3349 = vmul.f32 %v3340, %v3348
    %v3350 = vmul.f32 %v3347, %v3348
    %v3351 = vmul.f32 %v3349, %v3349
    %v3352 = vmul.f32 %v3350, %v3350
    %vm3355 = vcmask 1041409
    %v3356 = vsel %vm3355, %v3352, %v3351
    %vm3358 = vcmask 254976
    %v3359 = vsel %vm3358, %v3356, 0.0
    %3360 = vadd.xlane.f32.xlu0 %v3359
    %v3361 = vpop.xlane.xlu0 %3360
    %v3362 = vmax.f32 %v3361, 1e-24
    %v3363 = vrsqrt.pop %v3362
    %v3365 = vrot.slane %v3363, 1
    %v3368 = vmul.f32 %v3349, %v3363
    %v3369 = vmul.f32 %v3350, %v3365
    %v3372 = vrot.slane %v3369, 7
    %v3373 = vsel %vm3355, %v3372, %v3368
    %3375 = vst.msk [vmem:[#allocation2] sm:$0x3] %vm3358, %v3373
    // Predicated region
    $region42: #{crnn_word_model_forward.1} parent=1 // pred_check
      _
    $region43: #{crnn_word_model_forward.1} parent=1 // pred_check_branch
      %3377 = sbr.rel (0) target = $region45
    $region44: #{crnn_word_model_forward.1} parent=1 // pred_region
      _
    $region45: #{crnn_word_model_forward.1} parent=1 // pred_fallthru
      _
    // Predicated region
    $region46: #{crnn_word_model_forward.1} parent=1 // pred_check
      _
    $region47: #{crnn_word_model_forward.1} parent=1 // pred_check_branch
      %3379 = sbr.rel (0) target = $region49
    $region48: #{crnn_word_model_forward.1} parent=1 // pred_region
      %s3381 = ssub.s32 32, 32
      %3382 = vsyncadd [#allocation3], %s3381
      %s3384 = sshll.u32 [#allocation2], 4
      %s3385 = int_to_ptr.vmem [resolvable:$true] %s3384
      %3387 = dma.vmem_to_hbm [thread:$0]  %s3385, 32, %s11, [#allocation3]
    $region49: #{crnn_word_model_forward.1} parent=1 // pred_fallthru
      _
    // Predicated region
    $region50: #{crnn_word_model_forward.1} parent=1 // pred_check
      _
    $region51: #{crnn_word_model_forward.1} parent=1 // pred_check_branch
      %3389 = sbr.rel (0) target = $region53
    $region52: #{crnn_word_model_forward.1} parent=1 // pred_region
      _
    $region53: #{crnn_word_model_forward.1} parent=1 // pred_fallthru
      _
    // Predicated region
    $region54: #{crnn_word_model_forward.1} parent=1 // pred_check
      _
    $region55: #{crnn_word_model_forward.1} parent=1 // pred_check_branch
      %3391 = sbr.rel (0) target = $region57
    $region56: #{crnn_word_model_forward.1} parent=1 // pred_region
      %3392 = dma.done [#allocation3], 32
    $region57: #{crnn_word_model_forward.1} parent=1 // pred_fallthru
      _
    %3393 = vsyncpa [#allocation3], 1

</llo_original>
